<compile_context>
chip_gen: v5e
topology: v5e:2x2
jax: 0.10.0
libtpu: 0.0.40
codegen_flags: <defaults>
</compile_context>

<pallas_src>
from functools import partial

import jax
import jax.numpy as jnp
import numpy as np
from jax.experimental import pallas as pl
from jax.experimental.pallas import tpu as pltpu


# ----------------------------- in-kernel math ------------------------------

def _layernorm(x, gamma, beta, eps=1e-5):
    mu = jnp.mean(x, axis=-1, keepdims=True)
    xc = x - mu
    var = jnp.mean(xc * xc, axis=-1, keepdims=True)   # biased, like torch LN
    return xc * jax.lax.rsqrt(var + eps) * gamma + beta


def _gelu_tanh(x):
    # tanh-form GELU: the tanh runs on the EUP slot instead of ~10 VALU ops per
    # element.  TODO(synk): PyTorch nn.GELU() default is exact-erf; tanh form
    # differs by <~1e-3 absolute, well inside the test tolerance.
    c = 0.7978845608028654  # sqrt(2/pi)
    return 0.5 * x * (1.0 + jnp.tanh(c * (x + 0.044715 * x * x * x)))


# --------------------------------- kernel ----------------------------------

def transformer_layer_kernel(x_ref,
                             wq_ref, bq_ref, wk_ref, bk_ref, wv_ref, bv_ref,
                             wo_ref, bo_ref,                  # attn out-proj
                             g1_ref, be1_ref,                 # norm1
                             w1_ref, bb1_ref,                 # ffn linear1
                             w2_ref, bb2_ref,                 # ffn linear2
                             g2_ref, be2_ref,                 # norm2
                             o_ref, *, num_heads):
    Bb, N, D = x_ref.shape
    H = num_heads
    hd = D // H
    M = Bb * N

    x_f32 = x_ref[...].astype(jnp.float32).reshape(M, D)
    x_bf = x_f32.astype(jnp.bfloat16)

    # ---- multi-head self attention (head-major weights, no lane slicing) ----
    acc = jnp.zeros((M, D), jnp.float32)
    for h in range(H):                       # static unroll over heads
        # per-head projections: 1/sqrt(hd) already folded into wq/bq host-side
        q = jnp.dot(x_bf, wq_ref[h], preferred_element_type=jnp.float32) + bq_ref[h]
        k = jnp.dot(x_bf, wk_ref[h], preferred_element_type=jnp.float32) + bk_ref[h]
        v = jnp.dot(x_bf, wv_ref[h], preferred_element_type=jnp.float32) + bv_ref[h]
        q3 = q.reshape(Bb, N, hd).astype(jnp.bfloat16)
        k3 = k.reshape(Bb, N, hd).astype(jnp.bfloat16)
        v3 = v.reshape(Bb, N, hd).astype(jnp.bfloat16)

        # scores: batched dot contracting head_dim directly (no explicit .T)
        s = jnp.einsum("bqd,bkd->bqk", q3, k3,
                       preferred_element_type=jnp.float32)        # (Bb, N, N)
        s = s - jnp.max(s, axis=-1, keepdims=True)
        e = jnp.exp(s)
        p = e * pl.reciprocal(jnp.sum(e, axis=-1, keepdims=True), approx=True)

        ao = jnp.einsum("bqk,bkd->bqd", p.astype(jnp.bfloat16), v3,
                        preferred_element_type=jnp.float32)       # (Bb, N, hd)

        # head-merge folded into the out-projection (no concatenate)
        acc = acc + jnp.dot(ao.reshape(M, hd).astype(jnp.bfloat16), wo_ref[h],
                            preferred_element_type=jnp.float32)
    attn = acc + bo_ref[...]

    # ---- residual + norm1 ----
    x1 = _layernorm(x_f32 + attn, g1_ref[...], be1_ref[...])

    # ---- feed-forward network ----
    h1 = jnp.dot(x1.astype(jnp.bfloat16), w1_ref[...],
                 preferred_element_type=jnp.float32) + bb1_ref[...]
    h1 = _gelu_tanh(h1)
    ffn = jnp.dot(h1.astype(jnp.bfloat16), w2_ref[...],
                  preferred_element_type=jnp.float32) + bb2_ref[...]

    out = _layernorm(x1 + ffn, g2_ref[...], be2_ref[...])
    o_ref[...] = out.reshape(Bb, N, D).astype(o_ref.dtype)


# -------------------------------- wrapper -----------------------------------

def _pick_block_b(B, N, target_rows=256):
    """Largest divisor of B so that block_b*N ~ target_rows (amortize grid steps)."""
    bb = max(1, min(B, target_rows // max(N, 1)))
    while B % bb:
        bb -= 1
    return bb


def prepare_params(raw, *, num_heads, compute_dtype=jnp.bfloat16):
    """Host-side prep: head-major weight split, scale fold, bf16 cast."""
    D = raw["in_proj_weight"].shape[1]
    H = num_heads
    hd = D // H
    scale = 1.0 / np.sqrt(hd)

    wq, wk, wv = (raw["in_proj_weight"][i * D:(i + 1) * D] for i in range(3))
    bq, bk, bv = (raw["in_proj_bias"][i * D:(i + 1) * D] for i in range(3))

    def head_w(w):   # torch (D, D) -> (H, D, hd) with w3[h] = w[h*hd:(h+1)*hd, :].T
        return jnp.transpose(w.reshape(H, hd, D), (0, 2, 1))

    def head_b(b):   # (D,) -> (H, 1, hd)
        return b.reshape(H, 1, hd)

    Dh = raw["lin1_weight"].shape[0]
    return {
        "wq": (head_w(wq) * scale).astype(compute_dtype),
        "bq": (head_b(bq) * scale).astype(jnp.float32),
        "wk": head_w(wk).astype(compute_dtype),
        "bk": head_b(bk).astype(jnp.float32),
        "wv": head_w(wv).astype(compute_dtype),
        "bv": head_b(bv).astype(jnp.float32),
        # out_proj: (H, hd, D) with wo[h] = W_o[:, h*hd:(h+1)*hd].T
        "wo": jnp.transpose(raw["out_proj_weight"].reshape(D, H, hd), (1, 2, 0)
                            ).astype(compute_dtype),
        "bo": raw["out_proj_bias"].reshape(1, D).astype(jnp.float32),
        "g1": raw["norm1_weight"].reshape(1, D).astype(jnp.float32),
        "be1": raw["norm1_bias"].reshape(1, D).astype(jnp.float32),
        "w1": raw["lin1_weight"].T.astype(compute_dtype),          # (D, Dh)
        "bb1": raw["lin1_bias"].reshape(1, Dh).astype(jnp.float32),
        "w2": raw["lin2_weight"].T.astype(compute_dtype),          # (Dh, D)
        "bb2": raw["lin2_bias"].reshape(1, D).astype(jnp.float32),
        "g2": raw["norm2_weight"].reshape(1, D).astype(jnp.float32),
        "be2": raw["norm2_bias"].reshape(1, D).astype(jnp.float32),
    }


def transformer_layer(x, params, *, num_heads):
    """x: [B, N, D] float32.  params: output of prepare_params."""
    B, N, D = x.shape
    H = num_heads
    hd = D // H
    Dh = params["w1"].shape[1]

    block_b = _pick_block_b(B, N)
    grid = (B // block_b,)

    def full(shape):
        # full-array block, same weights resident for every grid step
        return pl.BlockSpec(shape, lambda i: (0,) * len(shape))

    in_specs = [
        pl.BlockSpec((block_b, N, D), lambda i: (i, 0, 0)),   # x
        full((H, D, hd)), full((H, 1, hd)),                   # q proj
        full((H, D, hd)), full((H, 1, hd)),                   # k proj
        full((H, D, hd)), full((H, 1, hd)),                   # v proj
        full((H, hd, D)), full((1, D)),                       # out proj
        full((1, D)), full((1, D)),                           # norm1
        full((D, Dh)), full((1, Dh)),                         # ffn linear1
        full((Dh, D)), full((1, D)),                          # ffn linear2
        full((1, D)), full((1, D)),                           # norm2
    ]

    return pl.pallas_call(
        partial(transformer_layer_kernel, num_heads=num_heads),
        out_shape=jax.ShapeDtypeStruct((B, N, D), x.dtype),
        grid=grid,
        in_specs=in_specs,
        out_specs=pl.BlockSpec((block_b, N, D), lambda i: (i, 0, 0)),
        compiler_params=pltpu.CompilerParams(
            dimension_semantics=("parallel",),          # independent batch blocks
            vmem_limit_bytes=48 * 1024 * 1024),
    )(x,
      params["wq"], params["bq"], params["wk"], params["bk"],
      params["wv"], params["bv"], params["wo"], params["bo"],
      params["g1"], params["be1"], params["w1"], params["bb1"],
      params["w2"], params["bb2"], params["g2"], params["be2"])


# ---------------------------- pure-JAX reference ----------------------------

def reference(x, raw, *, num_heads):
    B, N, D = x.shape
    H = num_heads
    hd = D // H
    qkv = x @ raw["in_proj_weight"].T + raw["in_proj_bias"]
    q, k, v = qkv[..., :D], qkv[..., D:2 * D], qkv[..., 2 * D:]

    def split(t):  # [B, N, D] -> [B, H, N, hd]
        return t.reshape(B, N, H, hd).transpose(0, 2, 1, 3)

    q, k, v = split(q) / np.sqrt(hd), split(k), split(v)
    s = jnp.einsum("bhqd,bhkd->bhqk", q, k)
    p = jax.nn.softmax(s, axis=-1)
    o = jnp.einsum("bhqk,bhkd->bhqd", p, v).transpose(0, 2, 1, 3).reshape(B, N, D)
    attn = o @ raw["out_proj_weight"].T + raw["out_proj_bias"]

    def ln(t, g, b):
        mu = jnp.mean(t, -1, keepdims=True)
        var = jnp.mean((t - mu) ** 2, -1, keepdims=True)
        return (t - mu) * jax.lax.rsqrt(var + 1e-5) * g + b

    x1 = ln(x + attn, raw["norm1_weight"], raw["norm1_bias"])
    h1 = jax.nn.gelu(x1 @ raw["lin1_weight"].T + raw["lin1_bias"], approximate=False)
    ffn = h1 @ raw["lin2_weight"].T + raw["lin2_bias"]
    return ln(x1 + ffn, raw["norm2_weight"], raw["norm2_bias"])


# ----------------------------------- main -----------------------------------

if __name__ == "__main__":
    B, N, D = 2, 32, 128
    num_heads = 8
    hidden_size = 1
    Dh = D * hidden_size

    key = jax.random.PRNGKey(0)
    ks = jax.random.split(key, 16)

    # Parameters in the native PyTorch layouts.
    raw = {
        "in_proj_weight": 0.05 * jax.random.normal(ks[0], (3 * D, D), jnp.float32),
        "in_proj_bias":   0.02 * jax.random.normal(ks[1], (3 * D,), jnp.float32),
        "out_proj_weight": 0.05 * jax.random.normal(ks[2], (D, D), jnp.float32),
        "out_proj_bias":   0.02 * jax.random.normal(ks[3], (D,), jnp.float32),
        "norm1_weight": 1.0 + 0.1 * jax.random.normal(ks[4], (D,), jnp.float32),
        "norm1_bias":   0.05 * jax.random.normal(ks[5], (D,), jnp.float32),
        "norm2_weight": 1.0 + 0.1 * jax.random.normal(ks[6], (D,), jnp.float32),
        "norm2_bias":   0.05 * jax.random.normal(ks[7], (D,), jnp.float32),
        "lin1_weight": 0.05 * jax.random.normal(ks[8], (Dh, D), jnp.float32),
        "lin1_bias":   0.02 * jax.random.normal(ks[9], (Dh,), jnp.float32),
        "lin2_weight": 0.05 * jax.random.normal(ks[10], (D, Dh), jnp.float32),
        "lin2_bias":   0.02 * jax.random.normal(ks[11], (D,), jnp.float32),
    }
    x = jax.random.normal(ks[12], (B, N, D), jnp.float32)

    params = prepare_params(raw, num_heads=num_heads)

    out = transformer_layer(x, params, num_heads=num_heads)
    out = jax.block_until_ready(out)

    ref = reference(x, raw, num_heads=num_heads)
    # Tolerance covers bf16 MXU inputs + tanh-GELU vs the f32 exact-erf reference.
    np.testing.assert_allclose(np.asarray(out), np.asarray(ref),
                               rtol=2e-2, atol=2e-2)

    print("KERNEL_OK")
</pallas_src>

<mosaic_0001>
module attributes {stable_mosaic.version = 11 : i64} {
  func.func @transformer_layer_kernel(%arg0: i32, %arg1: memref<2x32x128xf32, #tpu.memory_space<vmem>>, %arg2: memref<8x128x16xbf16, #tpu.memory_space<vmem>>, %arg3: memref<8x1x16xf32, #tpu.memory_space<vmem>>, %arg4: memref<8x128x16xbf16, #tpu.memory_space<vmem>>, %arg5: memref<8x1x16xf32, #tpu.memory_space<vmem>>, %arg6: memref<8x128x16xbf16, #tpu.memory_space<vmem>>, %arg7: memref<8x1x16xf32, #tpu.memory_space<vmem>>, %arg8: memref<8x16x128xbf16, #tpu.memory_space<vmem>>, %arg9: memref<1x128xf32, #tpu.memory_space<vmem>>, %arg10: memref<1x128xf32, #tpu.memory_space<vmem>>, %arg11: memref<1x128xf32, #tpu.memory_space<vmem>>, %arg12: memref<128x128xbf16, #tpu.memory_space<vmem>>, %arg13: memref<1x128xf32, #tpu.memory_space<vmem>>, %arg14: memref<128x128xbf16, #tpu.memory_space<vmem>>, %arg15: memref<1x128xf32, #tpu.memory_space<vmem>>, %arg16: memref<1x128xf32, #tpu.memory_space<vmem>>, %arg17: memref<1x128xf32, #tpu.memory_space<vmem>>, %arg18: memref<2x32x128xf32, #tpu.memory_space<vmem>>) attributes {dimension_semantics = [#tpu.dimension_semantics<parallel>], iteration_bounds = array<i64: 1>, scalar_prefetch = 0 : i64, scratch_operands = 0 : i64, tpu.core_type = #tpu.core_type<tc>, window_params = [{transform_indices = @transform_0, window_bounds = array<i64: 2, 32, 128>}, {pipeline_mode = #tpu.pipeline_mode<synchronous>, transform_indices = @transform_1, window_bounds = array<i64: 8, 128, 16>}, {pipeline_mode = #tpu.pipeline_mode<synchronous>, transform_indices = @transform_2, window_bounds = array<i64: 8, 1, 16>}, {pipeline_mode = #tpu.pipeline_mode<synchronous>, transform_indices = @transform_3, window_bounds = array<i64: 8, 128, 16>}, {pipeline_mode = #tpu.pipeline_mode<synchronous>, transform_indices = @transform_4, window_bounds = array<i64: 8, 1, 16>}, {pipeline_mode = #tpu.pipeline_mode<synchronous>, transform_indices = @transform_5, window_bounds = array<i64: 8, 128, 16>}, {pipeline_mode = #tpu.pipeline_mode<synchronous>, transform_indices = @transform_6, window_bounds = array<i64: 8, 1, 16>}, {pipeline_mode = #tpu.pipeline_mode<synchronous>, transform_indices = @transform_7, window_bounds = array<i64: 8, 16, 128>}, {pipeline_mode = #tpu.pipeline_mode<synchronous>, transform_indices = @transform_8, window_bounds = array<i64: 1, 128>}, {pipeline_mode = #tpu.pipeline_mode<synchronous>, transform_indices = @transform_9, window_bounds = array<i64: 1, 128>}, {pipeline_mode = #tpu.pipeline_mode<synchronous>, transform_indices = @transform_10, window_bounds = array<i64: 1, 128>}, {pipeline_mode = #tpu.pipeline_mode<synchronous>, transform_indices = @transform_11, window_bounds = array<i64: 128, 128>}, {pipeline_mode = #tpu.pipeline_mode<synchronous>, transform_indices = @transform_12, window_bounds = array<i64: 1, 128>}, {pipeline_mode = #tpu.pipeline_mode<synchronous>, transform_indices = @transform_13, window_bounds = array<i64: 128, 128>}, {pipeline_mode = #tpu.pipeline_mode<synchronous>, transform_indices = @transform_14, window_bounds = array<i64: 1, 128>}, {pipeline_mode = #tpu.pipeline_mode<synchronous>, transform_indices = @transform_15, window_bounds = array<i64: 1, 128>}, {pipeline_mode = #tpu.pipeline_mode<synchronous>, transform_indices = @transform_16, window_bounds = array<i64: 1, 128>}, {transform_indices = @transform_17, window_bounds = array<i64: 2, 32, 128>}]} {
    %c0 = arith.constant 0 : index
    %c0_0 = arith.constant 0 : index
    %c0_1 = arith.constant 0 : index
    %0 = vector.load %arg1[%c0, %c0_0, %c0_1] : memref<2x32x128xf32, #tpu.memory_space<vmem>>, vector<2x32x128xf32>
    %1 = vector.shape_cast %0 : vector<2x32x128xf32> to vector<64x128xf32>
    %2 = arith.truncf %1 : vector<64x128xf32> to vector<64x128xbf16>
    %cst = arith.constant 0.000000e+00 : f32
    %3 = vector.broadcast %cst : f32 to vector<64x128xf32>
    %c0_2 = arith.constant 0 : index
    %c0_3 = arith.constant 0 : index
    %c0_4 = arith.constant 0 : index
    %4 = vector.load %arg2[%c0_2, %c0_3, %c0_4] : memref<8x128x16xbf16, #tpu.memory_space<vmem>>, vector<1x128x16xbf16>
    %5 = vector.shape_cast %4 : vector<1x128x16xbf16> to vector<128x16xbf16>
    %cst_5 = arith.constant dense<0.000000e+00> : vector<64x16xf32>
    %6 = tpu.matmul %2, %5, %cst_5 {dimension_numbers = #tpu.dot_dimension_numbers<[1], [0], [0], [1], [0, 0, 1, 1], [], []>} : vector<64x128xbf16>, vector<128x16xbf16>, vector<64x16xf32> -> vector<64x16xf32>
    %c0_6 = arith.constant 0 : index
    %c0_7 = arith.constant 0 : index
    %c0_8 = arith.constant 0 : index
    %7 = vector.load %arg3[%c0_6, %c0_7, %c0_8] : memref<8x1x16xf32, #tpu.memory_space<vmem>>, vector<1x1x16xf32>
    %8 = vector.shape_cast %7 : vector<1x1x16xf32> to vector<1x16xf32>
    %9 = vector.broadcast %8 : vector<1x16xf32> to vector<64x16xf32>
    %10 = arith.addf %6, %9 : vector<64x16xf32>
    %c0_9 = arith.constant 0 : index
    %c0_10 = arith.constant 0 : index
    %c0_11 = arith.constant 0 : index
    %11 = vector.load %arg4[%c0_9, %c0_10, %c0_11] : memref<8x128x16xbf16, #tpu.memory_space<vmem>>, vector<1x128x16xbf16>
    %12 = vector.shape_cast %11 : vector<1x128x16xbf16> to vector<128x16xbf16>
    %cst_12 = arith.constant dense<0.000000e+00> : vector<64x16xf32>
    %13 = tpu.matmul %2, %12, %cst_12 {dimension_numbers = #tpu.dot_dimension_numbers<[1], [0], [0], [1], [0, 0, 1, 1], [], []>} : vector<64x128xbf16>, vector<128x16xbf16>, vector<64x16xf32> -> vector<64x16xf32>
    %c0_13 = arith.constant 0 : index
    %c0_14 = arith.constant 0 : index
    %c0_15 = arith.constant 0 : index
    %14 = vector.load %arg5[%c0_13, %c0_14, %c0_15] : memref<8x1x16xf32, #tpu.memory_space<vmem>>, vector<1x1x16xf32>
    %15 = vector.shape_cast %14 : vector<1x1x16xf32> to vector<1x16xf32>
    %16 = vector.broadcast %15 : vector<1x16xf32> to vector<64x16xf32>
    %17 = arith.addf %13, %16 : vector<64x16xf32>
    %c0_16 = arith.constant 0 : index
    %c0_17 = arith.constant 0 : index
    %c0_18 = arith.constant 0 : index
    %18 = vector.load %arg6[%c0_16, %c0_17, %c0_18] : memref<8x128x16xbf16, #tpu.memory_space<vmem>>, vector<1x128x16xbf16>
    %19 = vector.shape_cast %18 : vector<1x128x16xbf16> to vector<128x16xbf16>
    %cst_19 = arith.constant dense<0.000000e+00> : vector<64x16xf32>
    %20 = tpu.matmul %2, %19, %cst_19 {dimension_numbers = #tpu.dot_dimension_numbers<[1], [0], [0], [1], [0, 0, 1, 1], [], []>} : vector<64x128xbf16>, vector<128x16xbf16>, vector<64x16xf32> -> vector<64x16xf32>
    %c0_20 = arith.constant 0 : index
    %c0_21 = arith.constant 0 : index
    %c0_22 = arith.constant 0 : index
    %21 = vector.load %arg7[%c0_20, %c0_21, %c0_22] : memref<8x1x16xf32, #tpu.memory_space<vmem>>, vector<1x1x16xf32>
    %22 = vector.shape_cast %21 : vector<1x1x16xf32> to vector<1x16xf32>
    %23 = vector.broadcast %22 : vector<1x16xf32> to vector<64x16xf32>
    %24 = arith.addf %20, %23 : vector<64x16xf32>
    %25 = vector.shape_cast %10 : vector<64x16xf32> to vector<2x32x16xf32>
    %26 = arith.truncf %25 : vector<2x32x16xf32> to vector<2x32x16xbf16>
    %27 = vector.shape_cast %17 : vector<64x16xf32> to vector<2x32x16xf32>
    %28 = arith.truncf %27 : vector<2x32x16xf32> to vector<2x32x16xbf16>
    %29 = vector.shape_cast %24 : vector<64x16xf32> to vector<2x32x16xf32>
    %30 = arith.truncf %29 : vector<2x32x16xf32> to vector<2x32x16xbf16>
    "tpu.trace_start"() <{level = 10 : i32, message = "bqd,bkd->bqk"}> : () -> ()
    %cst_23 = arith.constant dense<0.000000e+00> : vector<2x32x32xf32>
    %31 = tpu.matmul %26, %28, %cst_23 {dimension_numbers = #tpu.dot_dimension_numbers<[2], [2], [1], [1], [0, 0, 0, 1, 1, 1], [0], [0]>} : vector<2x32x16xbf16>, vector<2x32x16xbf16>, vector<2x32x32xf32> -> vector<2x32x32xf32>
    "tpu.trace_stop"() : () -> ()
    %cst_24 = arith.constant dense<0xFF800000> : vector<2x32xf32>
    %32 = vector.multi_reduction <maximumf>, %31, %cst_24 [2] : vector<2x32x32xf32> to vector<2x32xf32>
    %33 = vector.shape_cast %32 : vector<2x32xf32> to vector<2x32x1xf32>
    %34 = vector.broadcast %33 : vector<2x32x1xf32> to vector<2x32x32xf32>
    %35 = arith.subf %31, %34 : vector<2x32x32xf32>
    %36 = math.exp %35 : vector<2x32x32xf32>
    %cst_25 = arith.constant dense<0.000000e+00> : vector<2x32xf32>
    %37 = vector.multi_reduction <add>, %36, %cst_25 [2] : vector<2x32x32xf32> to vector<2x32xf32>
    %38 = vector.shape_cast %37 : vector<2x32xf32> to vector<2x32x1xf32>
    %39 = tpu.reciprocal %38 {approx = true} : vector<2x32x1xf32> -> vector<2x32x1xf32>
    %40 = vector.broadcast %39 : vector<2x32x1xf32> to vector<2x32x32xf32>
    %41 = arith.mulf %36, %40 : vector<2x32x32xf32>
    %42 = arith.truncf %41 : vector<2x32x32xf32> to vector<2x32x32xbf16>
    "tpu.trace_start"() <{level = 10 : i32, message = "bqk,bkd->bqd"}> : () -> ()
    %cst_26 = arith.constant dense<0.000000e+00> : vector<2x32x16xf32>
    %43 = tpu.matmul %42, %30, %cst_26 {dimension_numbers = #tpu.dot_dimension_numbers<[2], [1], [1], [2], [0, 0, 0, 1, 1, 2], [0], [0]>} : vector<2x32x32xbf16>, vector<2x32x16xbf16>, vector<2x32x16xf32> -> vector<2x32x16xf32>
    "tpu.trace_stop"() : () -> ()
    %44 = vector.shape_cast %43 : vector<2x32x16xf32> to vector<64x16xf32>
    %45 = arith.truncf %44 : vector<64x16xf32> to vector<64x16xbf16>
    %c0_27 = arith.constant 0 : index
    %c0_28 = arith.constant 0 : index
    %c0_29 = arith.constant 0 : index
    %46 = vector.load %arg8[%c0_27, %c0_28, %c0_29] : memref<8x16x128xbf16, #tpu.memory_space<vmem>>, vector<1x16x128xbf16>
    %47 = vector.shape_cast %46 : vector<1x16x128xbf16> to vector<16x128xbf16>
    %cst_30 = arith.constant dense<0.000000e+00> : vector<64x128xf32>
    %48 = tpu.matmul %45, %47, %cst_30 {dimension_numbers = #tpu.dot_dimension_numbers<[1], [0], [0], [1], [0, 0, 1, 1], [], []>} : vector<64x16xbf16>, vector<16x128xbf16>, vector<64x128xf32> -> vector<64x128xf32>
    %49 = arith.addf %3, %48 : vector<64x128xf32>
    %c1 = arith.constant 1 : index
    %c0_31 = arith.constant 0 : index
    %c0_32 = arith.constant 0 : index
    %50 = vector.load %arg2[%c1, %c0_31, %c0_32] : memref<8x128x16xbf16, #tpu.memory_space<vmem>>, vector<1x128x16xbf16>
    %51 = vector.shape_cast %50 : vector<1x128x16xbf16> to vector<128x16xbf16>
    %cst_33 = arith.constant dense<0.000000e+00> : vector<64x16xf32>
    %52 = tpu.matmul %2, %51, %cst_33 {dimension_numbers = #tpu.dot_dimension_numbers<[1], [0], [0], [1], [0, 0, 1, 1], [], []>} : vector<64x128xbf16>, vector<128x16xbf16>, vector<64x16xf32> -> vector<64x16xf32>
    %c1_34 = arith.constant 1 : index
    %c0_35 = arith.constant 0 : index
    %c0_36 = arith.constant 0 : index
    %53 = vector.load %arg3[%c1_34, %c0_35, %c0_36] : memref<8x1x16xf32, #tpu.memory_space<vmem>>, vector<1x1x16xf32>
    %54 = vector.shape_cast %53 : vector<1x1x16xf32> to vector<1x16xf32>
    %55 = vector.broadcast %54 : vector<1x16xf32> to vector<64x16xf32>
    %56 = arith.addf %52, %55 : vector<64x16xf32>
    %c1_37 = arith.constant 1 : index
    %c0_38 = arith.constant 0 : index
    %c0_39 = arith.constant 0 : index
    %57 = vector.load %arg4[%c1_37, %c0_38, %c0_39] : memref<8x128x16xbf16, #tpu.memory_space<vmem>>, vector<1x128x16xbf16>
    %58 = vector.shape_cast %57 : vector<1x128x16xbf16> to vector<128x16xbf16>
    %cst_40 = arith.constant dense<0.000000e+00> : vector<64x16xf32>
    %59 = tpu.matmul %2, %58, %cst_40 {dimension_numbers = #tpu.dot_dimension_numbers<[1], [0], [0], [1], [0, 0, 1, 1], [], []>} : vector<64x128xbf16>, vector<128x16xbf16>, vector<64x16xf32> -> vector<64x16xf32>
    %c1_41 = arith.constant 1 : index
    %c0_42 = arith.constant 0 : index
    %c0_43 = arith.constant 0 : index
    %60 = vector.load %arg5[%c1_41, %c0_42, %c0_43] : memref<8x1x16xf32, #tpu.memory_space<vmem>>, vector<1x1x16xf32>
    %61 = vector.shape_cast %60 : vector<1x1x16xf32> to vector<1x16xf32>
    %62 = vector.broadcast %61 : vector<1x16xf32> to vector<64x16xf32>
    %63 = arith.addf %59, %62 : vector<64x16xf32>
    %c1_44 = arith.constant 1 : index
    %c0_45 = arith.constant 0 : index
    %c0_46 = arith.constant 0 : index
    %64 = vector.load %arg6[%c1_44, %c0_45, %c0_46] : memref<8x128x16xbf16, #tpu.memory_space<vmem>>, vector<1x128x16xbf16>
    %65 = vector.shape_cast %64 : vector<1x128x16xbf16> to vector<128x16xbf16>
    %cst_47 = arith.constant dense<0.000000e+00> : vector<64x16xf32>
    %66 = tpu.matmul %2, %65, %cst_47 {dimension_numbers = #tpu.dot_dimension_numbers<[1], [0], [0], [1], [0, 0, 1, 1], [], []>} : vector<64x128xbf16>, vector<128x16xbf16>, vector<64x16xf32> -> vector<64x16xf32>
    %c1_48 = arith.constant 1 : index
    %c0_49 = arith.constant 0 : index
    %c0_50 = arith.constant 0 : index
    %67 = vector.load %arg7[%c1_48, %c0_49, %c0_50] : memref<8x1x16xf32, #tpu.memory_space<vmem>>, vector<1x1x16xf32>
    %68 = vector.shape_cast %67 : vector<1x1x16xf32> to vector<1x16xf32>
    %69 = vector.broadcast %68 : vector<1x16xf32> to vector<64x16xf32>
    %70 = arith.addf %66, %69 : vector<64x16xf32>
    %71 = vector.shape_cast %56 : vector<64x16xf32> to vector<2x32x16xf32>
    %72 = arith.truncf %71 : vector<2x32x16xf32> to vector<2x32x16xbf16>
    %73 = vector.shape_cast %63 : vector<64x16xf32> to vector<2x32x16xf32>
    %74 = arith.truncf %73 : vector<2x32x16xf32> to vector<2x32x16xbf16>
    %75 = vector.shape_cast %70 : vector<64x16xf32> to vector<2x32x16xf32>
    %76 = arith.truncf %75 : vector<2x32x16xf32> to vector<2x32x16xbf16>
    "tpu.trace_start"() <{level = 10 : i32, message = "bqd,bkd->bqk"}> : () -> ()
    %cst_51 = arith.constant dense<0.000000e+00> : vector<2x32x32xf32>
    %77 = tpu.matmul %72, %74, %cst_51 {dimension_numbers = #tpu.dot_dimension_numbers<[2], [2], [1], [1], [0, 0, 0, 1, 1, 1], [0], [0]>} : vector<2x32x16xbf16>, vector<2x32x16xbf16>, vector<2x32x32xf32> -> vector<2x32x32xf32>
    "tpu.trace_stop"() : () -> ()
    %cst_52 = arith.constant dense<0xFF800000> : vector<2x32xf32>
    %78 = vector.multi_reduction <maximumf>, %77, %cst_52 [2] : vector<2x32x32xf32> to vector<2x32xf32>
    %79 = vector.shape_cast %78 : vector<2x32xf32> to vector<2x32x1xf32>
    %80 = vector.broadcast %79 : vector<2x32x1xf32> to vector<2x32x32xf32>
    %81 = arith.subf %77, %80 : vector<2x32x32xf32>
    %82 = math.exp %81 : vector<2x32x32xf32>
    %cst_53 = arith.constant dense<0.000000e+00> : vector<2x32xf32>
    %83 = vector.multi_reduction <add>, %82, %cst_53 [2] : vector<2x32x32xf32> to vector<2x32xf32>
    %84 = vector.shape_cast %83 : vector<2x32xf32> to vector<2x32x1xf32>
    %85 = tpu.reciprocal %84 {approx = true} : vector<2x32x1xf32> -> vector<2x32x1xf32>
    %86 = vector.broadcast %85 : vector<2x32x1xf32> to vector<2x32x32xf32>
    %87 = arith.mulf %82, %86 : vector<2x32x32xf32>
    %88 = arith.truncf %87 : vector<2x32x32xf32> to vector<2x32x32xbf16>
    "tpu.trace_start"() <{level = 10 : i32, message = "bqk,bkd->bqd"}> : () -> ()
    %cst_54 = arith.constant dense<0.000000e+00> : vector<2x32x16xf32>
    %89 = tpu.matmul %88, %76, %cst_54 {dimension_numbers = #tpu.dot_dimension_numbers<[2], [1], [1], [2], [0, 0, 0, 1, 1, 2], [0], [0]>} : vector<2x32x32xbf16>, vector<2x32x16xbf16>, vector<2x32x16xf32> -> vector<2x32x16xf32>
    "tpu.trace_stop"() : () -> ()
    %90 = vector.shape_cast %89 : vector<2x32x16xf32> to vector<64x16xf32>
    %91 = arith.truncf %90 : vector<64x16xf32> to vector<64x16xbf16>
    %c1_55 = arith.constant 1 : index
    %c0_56 = arith.constant 0 : index
    %c0_57 = arith.constant 0 : index
    %92 = vector.load %arg8[%c1_55, %c0_56, %c0_57] : memref<8x16x128xbf16, #tpu.memory_space<vmem>>, vector<1x16x128xbf16>
    %93 = vector.shape_cast %92 : vector<1x16x128xbf16> to vector<16x128xbf16>
    %cst_58 = arith.constant dense<0.000000e+00> : vector<64x128xf32>
    %94 = tpu.matmul %91, %93, %cst_58 {dimension_numbers = #tpu.dot_dimension_numbers<[1], [0], [0], [1], [0, 0, 1, 1], [], []>} : vector<64x16xbf16>, vector<16x128xbf16>, vector<64x128xf32> -> vector<64x128xf32>
    %95 = arith.addf %49, %94 : vector<64x128xf32>
    %c2 = arith.constant 2 : index
    %c0_59 = arith.constant 0 : index
    %c0_60 = arith.constant 0 : index
    %96 = vector.load %arg2[%c2, %c0_59, %c0_60] : memref<8x128x16xbf16, #tpu.memory_space<vmem>>, vector<1x128x16xbf16>
    %97 = vector.shape_cast %96 : vector<1x128x16xbf16> to vector<128x16xbf16>
    %cst_61 = arith.constant dense<0.000000e+00> : vector<64x16xf32>
    %98 = tpu.matmul %2, %97, %cst_61 {dimension_numbers = #tpu.dot_dimension_numbers<[1], [0], [0], [1], [0, 0, 1, 1], [], []>} : vector<64x128xbf16>, vector<128x16xbf16>, vector<64x16xf32> -> vector<64x16xf32>
    %c2_62 = arith.constant 2 : index
    %c0_63 = arith.constant 0 : index
    %c0_64 = arith.constant 0 : index
    %99 = vector.load %arg3[%c2_62, %c0_63, %c0_64] : memref<8x1x16xf32, #tpu.memory_space<vmem>>, vector<1x1x16xf32>
    %100 = vector.shape_cast %99 : vector<1x1x16xf32> to vector<1x16xf32>
    %101 = vector.broadcast %100 : vector<1x16xf32> to vector<64x16xf32>
    %102 = arith.addf %98, %101 : vector<64x16xf32>
    %c2_65 = arith.constant 2 : index
    %c0_66 = arith.constant 0 : index
    %c0_67 = arith.constant 0 : index
    %103 = vector.load %arg4[%c2_65, %c0_66, %c0_67] : memref<8x128x16xbf16, #tpu.memory_space<vmem>>, vector<1x128x16xbf16>
    %104 = vector.shape_cast %103 : vector<1x128x16xbf16> to vector<128x16xbf16>
    %cst_68 = arith.constant dense<0.000000e+00> : vector<64x16xf32>
    %105 = tpu.matmul %2, %104, %cst_68 {dimension_numbers = #tpu.dot_dimension_numbers<[1], [0], [0], [1], [0, 0, 1, 1], [], []>} : vector<64x128xbf16>, vector<128x16xbf16>, vector<64x16xf32> -> vector<64x16xf32>
    %c2_69 = arith.constant 2 : index
    %c0_70 = arith.constant 0 : index
    %c0_71 = arith.constant 0 : index
    %106 = vector.load %arg5[%c2_69, %c0_70, %c0_71] : memref<8x1x16xf32, #tpu.memory_space<vmem>>, vector<1x1x16xf32>
    %107 = vector.shape_cast %106 : vector<1x1x16xf32> to vector<1x16xf32>
    %108 = vector.broadcast %107 : vector<1x16xf32> to vector<64x16xf32>
    %109 = arith.addf %105, %108 : vector<64x16xf32>
    %c2_72 = arith.constant 2 : index
    %c0_73 = arith.constant 0 : index
    %c0_74 = arith.constant 0 : index
    %110 = vector.load %arg6[%c2_72, %c0_73, %c0_74] : memref<8x128x16xbf16, #tpu.memory_space<vmem>>, vector<1x128x16xbf16>
    %111 = vector.shape_cast %110 : vector<1x128x16xbf16> to vector<128x16xbf16>
    %cst_75 = arith.constant dense<0.000000e+00> : vector<64x16xf32>
    %112 = tpu.matmul %2, %111, %cst_75 {dimension_numbers = #tpu.dot_dimension_numbers<[1], [0], [0], [1], [0, 0, 1, 1], [], []>} : vector<64x128xbf16>, vector<128x16xbf16>, vector<64x16xf32> -> vector<64x16xf32>
    %c2_76 = arith.constant 2 : index
    %c0_77 = arith.constant 0 : index
    %c0_78 = arith.constant 0 : index
    %113 = vector.load %arg7[%c2_76, %c0_77, %c0_78] : memref<8x1x16xf32, #tpu.memory_space<vmem>>, vector<1x1x16xf32>
    %114 = vector.shape_cast %113 : vector<1x1x16xf32> to vector<1x16xf32>
    %115 = vector.broadcast %114 : vector<1x16xf32> to vector<64x16xf32>
    %116 = arith.addf %112, %115 : vector<64x16xf32>
    %117 = vector.shape_cast %102 : vector<64x16xf32> to vector<2x32x16xf32>
    %118 = arith.truncf %117 : vector<2x32x16xf32> to vector<2x32x16xbf16>
    %119 = vector.shape_cast %109 : vector<64x16xf32> to vector<2x32x16xf32>
    %120 = arith.truncf %119 : vector<2x32x16xf32> to vector<2x32x16xbf16>
    %121 = vector.shape_cast %116 : vector<64x16xf32> to vector<2x32x16xf32>
    %122 = arith.truncf %121 : vector<2x32x16xf32> to vector<2x32x16xbf16>
    "tpu.trace_start"() <{level = 10 : i32, message = "bqd,bkd->bqk"}> : () -> ()
    %cst_79 = arith.constant dense<0.000000e+00> : vector<2x32x32xf32>
    %123 = tpu.matmul %118, %120, %cst_79 {dimension_numbers = #tpu.dot_dimension_numbers<[2], [2], [1], [1], [0, 0, 0, 1, 1, 1], [0], [0]>} : vector<2x32x16xbf16>, vector<2x32x16xbf16>, vector<2x32x32xf32> -> vector<2x32x32xf32>
    "tpu.trace_stop"() : () -> ()
    %cst_80 = arith.constant dense<0xFF800000> : vector<2x32xf32>
    %124 = vector.multi_reduction <maximumf>, %123, %cst_80 [2] : vector<2x32x32xf32> to vector<2x32xf32>
    %125 = vector.shape_cast %124 : vector<2x32xf32> to vector<2x32x1xf32>
    %126 = vector.broadcast %125 : vector<2x32x1xf32> to vector<2x32x32xf32>
    %127 = arith.subf %123, %126 : vector<2x32x32xf32>
    %128 = math.exp %127 : vector<2x32x32xf32>
    %cst_81 = arith.constant dense<0.000000e+00> : vector<2x32xf32>
    %129 = vector.multi_reduction <add>, %128, %cst_81 [2] : vector<2x32x32xf32> to vector<2x32xf32>
    %130 = vector.shape_cast %129 : vector<2x32xf32> to vector<2x32x1xf32>
    %131 = tpu.reciprocal %130 {approx = true} : vector<2x32x1xf32> -> vector<2x32x1xf32>
    %132 = vector.broadcast %131 : vector<2x32x1xf32> to vector<2x32x32xf32>
    %133 = arith.mulf %128, %132 : vector<2x32x32xf32>
    %134 = arith.truncf %133 : vector<2x32x32xf32> to vector<2x32x32xbf16>
    "tpu.trace_start"() <{level = 10 : i32, message = "bqk,bkd->bqd"}> : () -> ()
    %cst_82 = arith.constant dense<0.000000e+00> : vector<2x32x16xf32>
    %135 = tpu.matmul %134, %122, %cst_82 {dimension_numbers = #tpu.dot_dimension_numbers<[2], [1], [1], [2], [0, 0, 0, 1, 1, 2], [0], [0]>} : vector<2x32x32xbf16>, vector<2x32x16xbf16>, vector<2x32x16xf32> -> vector<2x32x16xf32>
    "tpu.trace_stop"() : () -> ()
    %136 = vector.shape_cast %135 : vector<2x32x16xf32> to vector<64x16xf32>
    %137 = arith.truncf %136 : vector<64x16xf32> to vector<64x16xbf16>
    %c2_83 = arith.constant 2 : index
    %c0_84 = arith.constant 0 : index
    %c0_85 = arith.constant 0 : index
    %138 = vector.load %arg8[%c2_83, %c0_84, %c0_85] : memref<8x16x128xbf16, #tpu.memory_space<vmem>>, vector<1x16x128xbf16>
    %139 = vector.shape_cast %138 : vector<1x16x128xbf16> to vector<16x128xbf16>
    %cst_86 = arith.constant dense<0.000000e+00> : vector<64x128xf32>
    %140 = tpu.matmul %137, %139, %cst_86 {dimension_numbers = #tpu.dot_dimension_numbers<[1], [0], [0], [1], [0, 0, 1, 1], [], []>} : vector<64x16xbf16>, vector<16x128xbf16>, vector<64x128xf32> -> vector<64x128xf32>
    %141 = arith.addf %95, %140 : vector<64x128xf32>
    %c3 = arith.constant 3 : index
    %c0_87 = arith.constant 0 : index
    %c0_88 = arith.constant 0 : index
    %142 = vector.load %arg2[%c3, %c0_87, %c0_88] : memref<8x128x16xbf16, #tpu.memory_space<vmem>>, vector<1x128x16xbf16>
    %143 = vector.shape_cast %142 : vector<1x128x16xbf16> to vector<128x16xbf16>
    %cst_89 = arith.constant dense<0.000000e+00> : vector<64x16xf32>
    %144 = tpu.matmul %2, %143, %cst_89 {dimension_numbers = #tpu.dot_dimension_numbers<[1], [0], [0], [1], [0, 0, 1, 1], [], []>} : vector<64x128xbf16>, vector<128x16xbf16>, vector<64x16xf32> -> vector<64x16xf32>
    %c3_90 = arith.constant 3 : index
    %c0_91 = arith.constant 0 : index
    %c0_92 = arith.constant 0 : index
    %145 = vector.load %arg3[%c3_90, %c0_91, %c0_92] : memref<8x1x16xf32, #tpu.memory_space<vmem>>, vector<1x1x16xf32>
    %146 = vector.shape_cast %145 : vector<1x1x16xf32> to vector<1x16xf32>
    %147 = vector.broadcast %146 : vector<1x16xf32> to vector<64x16xf32>
    %148 = arith.addf %144, %147 : vector<64x16xf32>
    %c3_93 = arith.constant 3 : index
    %c0_94 = arith.constant 0 : index
    %c0_95 = arith.constant 0 : index
    %149 = vector.load %arg4[%c3_93, %c0_94, %c0_95] : memref<8x128x16xbf16, #tpu.memory_space<vmem>>, vector<1x128x16xbf16>
    %150 = vector.shape_cast %149 : vector<1x128x16xbf16> to vector<128x16xbf16>
    %cst_96 = arith.constant dense<0.000000e+00> : vector<64x16xf32>
    %151 = tpu.matmul %2, %150, %cst_96 {dimension_numbers = #tpu.dot_dimension_numbers<[1], [0], [0], [1], [0, 0, 1, 1], [], []>} : vector<64x128xbf16>, vector<128x16xbf16>, vector<64x16xf32> -> vector<64x16xf32>
    %c3_97 = arith.constant 3 : index
    %c0_98 = arith.constant 0 : index
    %c0_99 = arith.constant 0 : index
    %152 = vector.load %arg5[%c3_97, %c0_98, %c0_99] : memref<8x1x16xf32, #tpu.memory_space<vmem>>, vector<1x1x16xf32>
    %153 = vector.shape_cast %152 : vector<1x1x16xf32> to vector<1x16xf32>
    %154 = vector.broadcast %153 : vector<1x16xf32> to vector<64x16xf32>
    %155 = arith.addf %151, %154 : vector<64x16xf32>
    %c3_100 = arith.constant 3 : index
    %c0_101 = arith.constant 0 : index
    %c0_102 = arith.constant 0 : index
    %156 = vector.load %arg6[%c3_100, %c0_101, %c0_102] : memref<8x128x16xbf16, #tpu.memory_space<vmem>>, vector<1x128x16xbf16>
    %157 = vector.shape_cast %156 : vector<1x128x16xbf16> to vector<128x16xbf16>
    %cst_103 = arith.constant dense<0.000000e+00> : vector<64x16xf32>
    %158 = tpu.matmul %2, %157, %cst_103 {dimension_numbers = #tpu.dot_dimension_numbers<[1], [0], [0], [1], [0, 0, 1, 1], [], []>} : vector<64x128xbf16>, vector<128x16xbf16>, vector<64x16xf32> -> vector<64x16xf32>
    %c3_104 = arith.constant 3 : index
    %c0_105 = arith.constant 0 : index
    %c0_106 = arith.constant 0 : index
    %159 = vector.load %arg7[%c3_104, %c0_105, %c0_106] : memref<8x1x16xf32, #tpu.memory_space<vmem>>, vector<1x1x16xf32>
    %160 = vector.shape_cast %159 : vector<1x1x16xf32> to vector<1x16xf32>
    %161 = vector.broadcast %160 : vector<1x16xf32> to vector<64x16xf32>
    %162 = arith.addf %158, %161 : vector<64x16xf32>
    %163 = vector.shape_cast %148 : vector<64x16xf32> to vector<2x32x16xf32>
    %164 = arith.truncf %163 : vector<2x32x16xf32> to vector<2x32x16xbf16>
    %165 = vector.shape_cast %155 : vector<64x16xf32> to vector<2x32x16xf32>
    %166 = arith.truncf %165 : vector<2x32x16xf32> to vector<2x32x16xbf16>
    %167 = vector.shape_cast %162 : vector<64x16xf32> to vector<2x32x16xf32>
    %168 = arith.truncf %167 : vector<2x32x16xf32> to vector<2x32x16xbf16>
    "tpu.trace_start"() <{level = 10 : i32, message = "bqd,bkd->bqk"}> : () -> ()
    %cst_107 = arith.constant dense<0.000000e+00> : vector<2x32x32xf32>
    %169 = tpu.matmul %164, %166, %cst_107 {dimension_numbers = #tpu.dot_dimension_numbers<[2], [2], [1], [1], [0, 0, 0, 1, 1, 1], [0], [0]>} : vector<2x32x16xbf16>, vector<2x32x16xbf16>, vector<2x32x32xf32> -> vector<2x32x32xf32>
    "tpu.trace_stop"() : () -> ()
    %cst_108 = arith.constant dense<0xFF800000> : vector<2x32xf32>
    %170 = vector.multi_reduction <maximumf>, %169, %cst_108 [2] : vector<2x32x32xf32> to vector<2x32xf32>
    %171 = vector.shape_cast %170 : vector<2x32xf32> to vector<2x32x1xf32>
    %172 = vector.broadcast %171 : vector<2x32x1xf32> to vector<2x32x32xf32>
    %173 = arith.subf %169, %172 : vector<2x32x32xf32>
    %174 = math.exp %173 : vector<2x32x32xf32>
    %cst_109 = arith.constant dense<0.000000e+00> : vector<2x32xf32>
    %175 = vector.multi_reduction <add>, %174, %cst_109 [2] : vector<2x32x32xf32> to vector<2x32xf32>
    %176 = vector.shape_cast %175 : vector<2x32xf32> to vector<2x32x1xf32>
    %177 = tpu.reciprocal %176 {approx = true} : vector<2x32x1xf32> -> vector<2x32x1xf32>
    %178 = vector.broadcast %177 : vector<2x32x1xf32> to vector<2x32x32xf32>
    %179 = arith.mulf %174, %178 : vector<2x32x32xf32>
    %180 = arith.truncf %179 : vector<2x32x32xf32> to vector<2x32x32xbf16>
    "tpu.trace_start"() <{level = 10 : i32, message = "bqk,bkd->bqd"}> : () -> ()
    %cst_110 = arith.constant dense<0.000000e+00> : vector<2x32x16xf32>
    %181 = tpu.matmul %180, %168, %cst_110 {dimension_numbers = #tpu.dot_dimension_numbers<[2], [1], [1], [2], [0, 0, 0, 1, 1, 2], [0], [0]>} : vector<2x32x32xbf16>, vector<2x32x16xbf16>, vector<2x32x16xf32> -> vector<2x32x16xf32>
    "tpu.trace_stop"() : () -> ()
    %182 = vector.shape_cast %181 : vector<2x32x16xf32> to vector<64x16xf32>
    %183 = arith.truncf %182 : vector<64x16xf32> to vector<64x16xbf16>
    %c3_111 = arith.constant 3 : index
    %c0_112 = arith.constant 0 : index
    %c0_113 = arith.constant 0 : index
    %184 = vector.load %arg8[%c3_111, %c0_112, %c0_113] : memref<8x16x128xbf16, #tpu.memory_space<vmem>>, vector<1x16x128xbf16>
    %185 = vector.shape_cast %184 : vector<1x16x128xbf16> to vector<16x128xbf16>
    %cst_114 = arith.constant dense<0.000000e+00> : vector<64x128xf32>
    %186 = tpu.matmul %183, %185, %cst_114 {dimension_numbers = #tpu.dot_dimension_numbers<[1], [0], [0], [1], [0, 0, 1, 1], [], []>} : vector<64x16xbf16>, vector<16x128xbf16>, vector<64x128xf32> -> vector<64x128xf32>
    %187 = arith.addf %141, %186 : vector<64x128xf32>
    %c4 = arith.constant 4 : index
    %c0_115 = arith.constant 0 : index
    %c0_116 = arith.constant 0 : index
    %188 = vector.load %arg2[%c4, %c0_115, %c0_116] : memref<8x128x16xbf16, #tpu.memory_space<vmem>>, vector<1x128x16xbf16>
    %189 = vector.shape_cast %188 : vector<1x128x16xbf16> to vector<128x16xbf16>
    %cst_117 = arith.constant dense<0.000000e+00> : vector<64x16xf32>
    %190 = tpu.matmul %2, %189, %cst_117 {dimension_numbers = #tpu.dot_dimension_numbers<[1], [0], [0], [1], [0, 0, 1, 1], [], []>} : vector<64x128xbf16>, vector<128x16xbf16>, vector<64x16xf32> -> vector<64x16xf32>
    %c4_118 = arith.constant 4 : index
    %c0_119 = arith.constant 0 : index
    %c0_120 = arith.constant 0 : index
    %191 = vector.load %arg3[%c4_118, %c0_119, %c0_120] : memref<8x1x16xf32, #tpu.memory_space<vmem>>, vector<1x1x16xf32>
    %192 = vector.shape_cast %191 : vector<1x1x16xf32> to vector<1x16xf32>
    %193 = vector.broadcast %192 : vector<1x16xf32> to vector<64x16xf32>
    %194 = arith.addf %190, %193 : vector<64x16xf32>
    %c4_121 = arith.constant 4 : index
    %c0_122 = arith.constant 0 : index
    %c0_123 = arith.constant 0 : index
    %195 = vector.load %arg4[%c4_121, %c0_122, %c0_123] : memref<8x128x16xbf16, #tpu.memory_space<vmem>>, vector<1x128x16xbf16>
    %196 = vector.shape_cast %195 : vector<1x128x16xbf16> to vector<128x16xbf16>
    %cst_124 = arith.constant dense<0.000000e+00> : vector<64x16xf32>
    %197 = tpu.matmul %2, %196, %cst_124 {dimension_numbers = #tpu.dot_dimension_numbers<[1], [0], [0], [1], [0, 0, 1, 1], [], []>} : vector<64x128xbf16>, vector<128x16xbf16>, vector<64x16xf32> -> vector<64x16xf32>
    %c4_125 = arith.constant 4 : index
    %c0_126 = arith.constant 0 : index
    %c0_127 = arith.constant 0 : index
    %198 = vector.load %arg5[%c4_125, %c0_126, %c0_127] : memref<8x1x16xf32, #tpu.memory_space<vmem>>, vector<1x1x16xf32>
    %199 = vector.shape_cast %198 : vector<1x1x16xf32> to vector<1x16xf32>
    %200 = vector.broadcast %199 : vector<1x16xf32> to vector<64x16xf32>
    %201 = arith.addf %197, %200 : vector<64x16xf32>
    %c4_128 = arith.constant 4 : index
    %c0_129 = arith.constant 0 : index
    %c0_130 = arith.constant 0 : index
    %202 = vector.load %arg6[%c4_128, %c0_129, %c0_130] : memref<8x128x16xbf16, #tpu.memory_space<vmem>>, vector<1x128x16xbf16>
    %203 = vector.shape_cast %202 : vector<1x128x16xbf16> to vector<128x16xbf16>
    %cst_131 = arith.constant dense<0.000000e+00> : vector<64x16xf32>
    %204 = tpu.matmul %2, %203, %cst_131 {dimension_numbers = #tpu.dot_dimension_numbers<[1], [0], [0], [1], [0, 0, 1, 1], [], []>} : vector<64x128xbf16>, vector<128x16xbf16>, vector<64x16xf32> -> vector<64x16xf32>
    %c4_132 = arith.constant 4 : index
    %c0_133 = arith.constant 0 : index
    %c0_134 = arith.constant 0 : index
    %205 = vector.load %arg7[%c4_132, %c0_133, %c0_134] : memref<8x1x16xf32, #tpu.memory_space<vmem>>, vector<1x1x16xf32>
    %206 = vector.shape_cast %205 : vector<1x1x16xf32> to vector<1x16xf32>
    %207 = vector.broadcast %206 : vector<1x16xf32> to vector<64x16xf32>
    %208 = arith.addf %204, %207 : vector<64x16xf32>
    %209 = vector.shape_cast %194 : vector<64x16xf32> to vector<2x32x16xf32>
    %210 = arith.truncf %209 : vector<2x32x16xf32> to vector<2x32x16xbf16>
    %211 = vector.shape_cast %201 : vector<64x16xf32> to vector<2x32x16xf32>
    %212 = arith.truncf %211 : vector<2x32x16xf32> to vector<2x32x16xbf16>
    %213 = vector.shape_cast %208 : vector<64x16xf32> to vector<2x32x16xf32>
    %214 = arith.truncf %213 : vector<2x32x16xf32> to vector<2x32x16xbf16>
    "tpu.trace_start"() <{level = 10 : i32, message = "bqd,bkd->bqk"}> : () -> ()
    %cst_135 = arith.constant dense<0.000000e+00> : vector<2x32x32xf32>
    %215 = tpu.matmul %210, %212, %cst_135 {dimension_numbers = #tpu.dot_dimension_numbers<[2], [2], [1], [1], [0, 0, 0, 1, 1, 1], [0], [0]>} : vector<2x32x16xbf16>, vector<2x32x16xbf16>, vector<2x32x32xf32> -> vector<2x32x32xf32>
    "tpu.trace_stop"() : () -> ()
    %cst_136 = arith.constant dense<0xFF800000> : vector<2x32xf32>
    %216 = vector.multi_reduction <maximumf>, %215, %cst_136 [2] : vector<2x32x32xf32> to vector<2x32xf32>
    %217 = vector.shape_cast %216 : vector<2x32xf32> to vector<2x32x1xf32>
    %218 = vector.broadcast %217 : vector<2x32x1xf32> to vector<2x32x32xf32>
    %219 = arith.subf %215, %218 : vector<2x32x32xf32>
    %220 = math.exp %219 : vector<2x32x32xf32>
    %cst_137 = arith.constant dense<0.000000e+00> : vector<2x32xf32>
    %221 = vector.multi_reduction <add>, %220, %cst_137 [2] : vector<2x32x32xf32> to vector<2x32xf32>
    %222 = vector.shape_cast %221 : vector<2x32xf32> to vector<2x32x1xf32>
    %223 = tpu.reciprocal %222 {approx = true} : vector<2x32x1xf32> -> vector<2x32x1xf32>
    %224 = vector.broadcast %223 : vector<2x32x1xf32> to vector<2x32x32xf32>
    %225 = arith.mulf %220, %224 : vector<2x32x32xf32>
    %226 = arith.truncf %225 : vector<2x32x32xf32> to vector<2x32x32xbf16>
    "tpu.trace_start"() <{level = 10 : i32, message = "bqk,bkd->bqd"}> : () -> ()
    %cst_138 = arith.constant dense<0.000000e+00> : vector<2x32x16xf32>
    %227 = tpu.matmul %226, %214, %cst_138 {dimension_numbers = #tpu.dot_dimension_numbers<[2], [1], [1], [2], [0, 0, 0, 1, 1, 2], [0], [0]>} : vector<2x32x32xbf16>, vector<2x32x16xbf16>, vector<2x32x16xf32> -> vector<2x32x16xf32>
    "tpu.trace_stop"() : () -> ()
    %228 = vector.shape_cast %227 : vector<2x32x16xf32> to vector<64x16xf32>
    %229 = arith.truncf %228 : vector<64x16xf32> to vector<64x16xbf16>
    %c4_139 = arith.constant 4 : index
    %c0_140 = arith.constant 0 : index
    %c0_141 = arith.constant 0 : index
    %230 = vector.load %arg8[%c4_139, %c0_140, %c0_141] : memref<8x16x128xbf16, #tpu.memory_space<vmem>>, vector<1x16x128xbf16>
    %231 = vector.shape_cast %230 : vector<1x16x128xbf16> to vector<16x128xbf16>
    %cst_142 = arith.constant dense<0.000000e+00> : vector<64x128xf32>
    %232 = tpu.matmul %229, %231, %cst_142 {dimension_numbers = #tpu.dot_dimension_numbers<[1], [0], [0], [1], [0, 0, 1, 1], [], []>} : vector<64x16xbf16>, vector<16x128xbf16>, vector<64x128xf32> -> vector<64x128xf32>
    %233 = arith.addf %187, %232 : vector<64x128xf32>
    %c5 = arith.constant 5 : index
    %c0_143 = arith.constant 0 : index
    %c0_144 = arith.constant 0 : index
    %234 = vector.load %arg2[%c5, %c0_143, %c0_144] : memref<8x128x16xbf16, #tpu.memory_space<vmem>>, vector<1x128x16xbf16>
    %235 = vector.shape_cast %234 : vector<1x128x16xbf16> to vector<128x16xbf16>
    %cst_145 = arith.constant dense<0.000000e+00> : vector<64x16xf32>
    %236 = tpu.matmul %2, %235, %cst_145 {dimension_numbers = #tpu.dot_dimension_numbers<[1], [0], [0], [1], [0, 0, 1, 1], [], []>} : vector<64x128xbf16>, vector<128x16xbf16>, vector<64x16xf32> -> vector<64x16xf32>
    %c5_146 = arith.constant 5 : index
    %c0_147 = arith.constant 0 : index
    %c0_148 = arith.constant 0 : index
    %237 = vector.load %arg3[%c5_146, %c0_147, %c0_148] : memref<8x1x16xf32, #tpu.memory_space<vmem>>, vector<1x1x16xf32>
    %238 = vector.shape_cast %237 : vector<1x1x16xf32> to vector<1x16xf32>
    %239 = vector.broadcast %238 : vector<1x16xf32> to vector<64x16xf32>
    %240 = arith.addf %236, %239 : vector<64x16xf32>
    %c5_149 = arith.constant 5 : index
    %c0_150 = arith.constant 0 : index
    %c0_151 = arith.constant 0 : index
    %241 = vector.load %arg4[%c5_149, %c0_150, %c0_151] : memref<8x128x16xbf16, #tpu.memory_space<vmem>>, vector<1x128x16xbf16>
    %242 = vector.shape_cast %241 : vector<1x128x16xbf16> to vector<128x16xbf16>
    %cst_152 = arith.constant dense<0.000000e+00> : vector<64x16xf32>
    %243 = tpu.matmul %2, %242, %cst_152 {dimension_numbers = #tpu.dot_dimension_numbers<[1], [0], [0], [1], [0, 0, 1, 1], [], []>} : vector<64x128xbf16>, vector<128x16xbf16>, vector<64x16xf32> -> vector<64x16xf32>
    %c5_153 = arith.constant 5 : index
    %c0_154 = arith.constant 0 : index
    %c0_155 = arith.constant 0 : index
    %244 = vector.load %arg5[%c5_153, %c0_154, %c0_155] : memref<8x1x16xf32, #tpu.memory_space<vmem>>, vector<1x1x16xf32>
    %245 = vector.shape_cast %244 : vector<1x1x16xf32> to vector<1x16xf32>
    %246 = vector.broadcast %245 : vector<1x16xf32> to vector<64x16xf32>
    %247 = arith.addf %243, %246 : vector<64x16xf32>
    %c5_156 = arith.constant 5 : index
    %c0_157 = arith.constant 0 : index
    %c0_158 = arith.constant 0 : index
    %248 = vector.load %arg6[%c5_156, %c0_157, %c0_158] : memref<8x128x16xbf16, #tpu.memory_space<vmem>>, vector<1x128x16xbf16>
    %249 = vector.shape_cast %248 : vector<1x128x16xbf16> to vector<128x16xbf16>
    %cst_159 = arith.constant dense<0.000000e+00> : vector<64x16xf32>
    %250 = tpu.matmul %2, %249, %cst_159 {dimension_numbers = #tpu.dot_dimension_numbers<[1], [0], [0], [1], [0, 0, 1, 1], [], []>} : vector<64x128xbf16>, vector<128x16xbf16>, vector<64x16xf32> -> vector<64x16xf32>
    %c5_160 = arith.constant 5 : index
    %c0_161 = arith.constant 0 : index
    %c0_162 = arith.constant 0 : index
    %251 = vector.load %arg7[%c5_160, %c0_161, %c0_162] : memref<8x1x16xf32, #tpu.memory_space<vmem>>, vector<1x1x16xf32>
    %252 = vector.shape_cast %251 : vector<1x1x16xf32> to vector<1x16xf32>
    %253 = vector.broadcast %252 : vector<1x16xf32> to vector<64x16xf32>
    %254 = arith.addf %250, %253 : vector<64x16xf32>
    %255 = vector.shape_cast %240 : vector<64x16xf32> to vector<2x32x16xf32>
    %256 = arith.truncf %255 : vector<2x32x16xf32> to vector<2x32x16xbf16>
    %257 = vector.shape_cast %247 : vector<64x16xf32> to vector<2x32x16xf32>
    %258 = arith.truncf %257 : vector<2x32x16xf32> to vector<2x32x16xbf16>
    %259 = vector.shape_cast %254 : vector<64x16xf32> to vector<2x32x16xf32>
    %260 = arith.truncf %259 : vector<2x32x16xf32> to vector<2x32x16xbf16>
    "tpu.trace_start"() <{level = 10 : i32, message = "bqd,bkd->bqk"}> : () -> ()
    %cst_163 = arith.constant dense<0.000000e+00> : vector<2x32x32xf32>
    %261 = tpu.matmul %256, %258, %cst_163 {dimension_numbers = #tpu.dot_dimension_numbers<[2], [2], [1], [1], [0, 0, 0, 1, 1, 1], [0], [0]>} : vector<2x32x16xbf16>, vector<2x32x16xbf16>, vector<2x32x32xf32> -> vector<2x32x32xf32>
    "tpu.trace_stop"() : () -> ()
    %cst_164 = arith.constant dense<0xFF800000> : vector<2x32xf32>
    %262 = vector.multi_reduction <maximumf>, %261, %cst_164 [2] : vector<2x32x32xf32> to vector<2x32xf32>
    %263 = vector.shape_cast %262 : vector<2x32xf32> to vector<2x32x1xf32>
    %264 = vector.broadcast %263 : vector<2x32x1xf32> to vector<2x32x32xf32>
    %265 = arith.subf %261, %264 : vector<2x32x32xf32>
    %266 = math.exp %265 : vector<2x32x32xf32>
    %cst_165 = arith.constant dense<0.000000e+00> : vector<2x32xf32>
    %267 = vector.multi_reduction <add>, %266, %cst_165 [2] : vector<2x32x32xf32> to vector<2x32xf32>
    %268 = vector.shape_cast %267 : vector<2x32xf32> to vector<2x32x1xf32>
    %269 = tpu.reciprocal %268 {approx = true} : vector<2x32x1xf32> -> vector<2x32x1xf32>
    %270 = vector.broadcast %269 : vector<2x32x1xf32> to vector<2x32x32xf32>
    %271 = arith.mulf %266, %270 : vector<2x32x32xf32>
    %272 = arith.truncf %271 : vector<2x32x32xf32> to vector<2x32x32xbf16>
    "tpu.trace_start"() <{level = 10 : i32, message = "bqk,bkd->bqd"}> : () -> ()
    %cst_166 = arith.constant dense<0.000000e+00> : vector<2x32x16xf32>
    %273 = tpu.matmul %272, %260, %cst_166 {dimension_numbers = #tpu.dot_dimension_numbers<[2], [1], [1], [2], [0, 0, 0, 1, 1, 2], [0], [0]>} : vector<2x32x32xbf16>, vector<2x32x16xbf16>, vector<2x32x16xf32> -> vector<2x32x16xf32>
    "tpu.trace_stop"() : () -> ()
    %274 = vector.shape_cast %273 : vector<2x32x16xf32> to vector<64x16xf32>
    %275 = arith.truncf %274 : vector<64x16xf32> to vector<64x16xbf16>
    %c5_167 = arith.constant 5 : index
    %c0_168 = arith.constant 0 : index
    %c0_169 = arith.constant 0 : index
    %276 = vector.load %arg8[%c5_167, %c0_168, %c0_169] : memref<8x16x128xbf16, #tpu.memory_space<vmem>>, vector<1x16x128xbf16>
    %277 = vector.shape_cast %276 : vector<1x16x128xbf16> to vector<16x128xbf16>
    %cst_170 = arith.constant dense<0.000000e+00> : vector<64x128xf32>
    %278 = tpu.matmul %275, %277, %cst_170 {dimension_numbers = #tpu.dot_dimension_numbers<[1], [0], [0], [1], [0, 0, 1, 1], [], []>} : vector<64x16xbf16>, vector<16x128xbf16>, vector<64x128xf32> -> vector<64x128xf32>
    %279 = arith.addf %233, %278 : vector<64x128xf32>
    %c6 = arith.constant 6 : index
    %c0_171 = arith.constant 0 : index
    %c0_172 = arith.constant 0 : index
    %280 = vector.load %arg2[%c6, %c0_171, %c0_172] : memref<8x128x16xbf16, #tpu.memory_space<vmem>>, vector<1x128x16xbf16>
    %281 = vector.shape_cast %280 : vector<1x128x16xbf16> to vector<128x16xbf16>
    %cst_173 = arith.constant dense<0.000000e+00> : vector<64x16xf32>
    %282 = tpu.matmul %2, %281, %cst_173 {dimension_numbers = #tpu.dot_dimension_numbers<[1], [0], [0], [1], [0, 0, 1, 1], [], []>} : vector<64x128xbf16>, vector<128x16xbf16>, vector<64x16xf32> -> vector<64x16xf32>
    %c6_174 = arith.constant 6 : index
    %c0_175 = arith.constant 0 : index
    %c0_176 = arith.constant 0 : index
    %283 = vector.load %arg3[%c6_174, %c0_175, %c0_176] : memref<8x1x16xf32, #tpu.memory_space<vmem>>, vector<1x1x16xf32>
    %284 = vector.shape_cast %283 : vector<1x1x16xf32> to vector<1x16xf32>
    %285 = vector.broadcast %284 : vector<1x16xf32> to vector<64x16xf32>
    %286 = arith.addf %282, %285 : vector<64x16xf32>
    %c6_177 = arith.constant 6 : index
    %c0_178 = arith.constant 0 : index
    %c0_179 = arith.constant 0 : index
    %287 = vector.load %arg4[%c6_177, %c0_178, %c0_179] : memref<8x128x16xbf16, #tpu.memory_space<vmem>>, vector<1x128x16xbf16>
    %288 = vector.shape_cast %287 : vector<1x128x16xbf16> to vector<128x16xbf16>
    %cst_180 = arith.constant dense<0.000000e+00> : vector<64x16xf32>
    %289 = tpu.matmul %2, %288, %cst_180 {dimension_numbers = #tpu.dot_dimension_numbers<[1], [0], [0], [1], [0, 0, 1, 1], [], []>} : vector<64x128xbf16>, vector<128x16xbf16>, vector<64x16xf32> -> vector<64x16xf32>
    %c6_181 = arith.constant 6 : index
    %c0_182 = arith.constant 0 : index
    %c0_183 = arith.constant 0 : index
    %290 = vector.load %arg5[%c6_181, %c0_182, %c0_183] : memref<8x1x16xf32, #tpu.memory_space<vmem>>, vector<1x1x16xf32>
    %291 = vector.shape_cast %290 : vector<1x1x16xf32> to vector<1x16xf32>
    %292 = vector.broadcast %291 : vector<1x16xf32> to vector<64x16xf32>
    %293 = arith.addf %289, %292 : vector<64x16xf32>
    %c6_184 = arith.constant 6 : index
    %c0_185 = arith.constant 0 : index
    %c0_186 = arith.constant 0 : index
    %294 = vector.load %arg6[%c6_184, %c0_185, %c0_186] : memref<8x128x16xbf16, #tpu.memory_space<vmem>>, vector<1x128x16xbf16>
    %295 = vector.shape_cast %294 : vector<1x128x16xbf16> to vector<128x16xbf16>
    %cst_187 = arith.constant dense<0.000000e+00> : vector<64x16xf32>
    %296 = tpu.matmul %2, %295, %cst_187 {dimension_numbers = #tpu.dot_dimension_numbers<[1], [0], [0], [1], [0, 0, 1, 1], [], []>} : vector<64x128xbf16>, vector<128x16xbf16>, vector<64x16xf32> -> vector<64x16xf32>
    %c6_188 = arith.constant 6 : index
    %c0_189 = arith.constant 0 : index
    %c0_190 = arith.constant 0 : index
    %297 = vector.load %arg7[%c6_188, %c0_189, %c0_190] : memref<8x1x16xf32, #tpu.memory_space<vmem>>, vector<1x1x16xf32>
    %298 = vector.shape_cast %297 : vector<1x1x16xf32> to vector<1x16xf32>
    %299 = vector.broadcast %298 : vector<1x16xf32> to vector<64x16xf32>
    %300 = arith.addf %296, %299 : vector<64x16xf32>
    %301 = vector.shape_cast %286 : vector<64x16xf32> to vector<2x32x16xf32>
    %302 = arith.truncf %301 : vector<2x32x16xf32> to vector<2x32x16xbf16>
    %303 = vector.shape_cast %293 : vector<64x16xf32> to vector<2x32x16xf32>
    %304 = arith.truncf %303 : vector<2x32x16xf32> to vector<2x32x16xbf16>
    %305 = vector.shape_cast %300 : vector<64x16xf32> to vector<2x32x16xf32>
    %306 = arith.truncf %305 : vector<2x32x16xf32> to vector<2x32x16xbf16>
    "tpu.trace_start"() <{level = 10 : i32, message = "bqd,bkd->bqk"}> : () -> ()
    %cst_191 = arith.constant dense<0.000000e+00> : vector<2x32x32xf32>
    %307 = tpu.matmul %302, %304, %cst_191 {dimension_numbers = #tpu.dot_dimension_numbers<[2], [2], [1], [1], [0, 0, 0, 1, 1, 1], [0], [0]>} : vector<2x32x16xbf16>, vector<2x32x16xbf16>, vector<2x32x32xf32> -> vector<2x32x32xf32>
    "tpu.trace_stop"() : () -> ()
    %cst_192 = arith.constant dense<0xFF800000> : vector<2x32xf32>
    %308 = vector.multi_reduction <maximumf>, %307, %cst_192 [2] : vector<2x32x32xf32> to vector<2x32xf32>
    %309 = vector.shape_cast %308 : vector<2x32xf32> to vector<2x32x1xf32>
    %310 = vector.broadcast %309 : vector<2x32x1xf32> to vector<2x32x32xf32>
    %311 = arith.subf %307, %310 : vector<2x32x32xf32>
    %312 = math.exp %311 : vector<2x32x32xf32>
    %cst_193 = arith.constant dense<0.000000e+00> : vector<2x32xf32>
    %313 = vector.multi_reduction <add>, %312, %cst_193 [2] : vector<2x32x32xf32> to vector<2x32xf32>
    %314 = vector.shape_cast %313 : vector<2x32xf32> to vector<2x32x1xf32>
    %315 = tpu.reciprocal %314 {approx = true} : vector<2x32x1xf32> -> vector<2x32x1xf32>
    %316 = vector.broadcast %315 : vector<2x32x1xf32> to vector<2x32x32xf32>
    %317 = arith.mulf %312, %316 : vector<2x32x32xf32>
    %318 = arith.truncf %317 : vector<2x32x32xf32> to vector<2x32x32xbf16>
    "tpu.trace_start"() <{level = 10 : i32, message = "bqk,bkd->bqd"}> : () -> ()
    %cst_194 = arith.constant dense<0.000000e+00> : vector<2x32x16xf32>
    %319 = tpu.matmul %318, %306, %cst_194 {dimension_numbers = #tpu.dot_dimension_numbers<[2], [1], [1], [2], [0, 0, 0, 1, 1, 2], [0], [0]>} : vector<2x32x32xbf16>, vector<2x32x16xbf16>, vector<2x32x16xf32> -> vector<2x32x16xf32>
    "tpu.trace_stop"() : () -> ()
    %320 = vector.shape_cast %319 : vector<2x32x16xf32> to vector<64x16xf32>
    %321 = arith.truncf %320 : vector<64x16xf32> to vector<64x16xbf16>
    %c6_195 = arith.constant 6 : index
    %c0_196 = arith.constant 0 : index
    %c0_197 = arith.constant 0 : index
    %322 = vector.load %arg8[%c6_195, %c0_196, %c0_197] : memref<8x16x128xbf16, #tpu.memory_space<vmem>>, vector<1x16x128xbf16>
    %323 = vector.shape_cast %322 : vector<1x16x128xbf16> to vector<16x128xbf16>
    %cst_198 = arith.constant dense<0.000000e+00> : vector<64x128xf32>
    %324 = tpu.matmul %321, %323, %cst_198 {dimension_numbers = #tpu.dot_dimension_numbers<[1], [0], [0], [1], [0, 0, 1, 1], [], []>} : vector<64x16xbf16>, vector<16x128xbf16>, vector<64x128xf32> -> vector<64x128xf32>
    %325 = arith.addf %279, %324 : vector<64x128xf32>
    %c7 = arith.constant 7 : index
    %c0_199 = arith.constant 0 : index
    %c0_200 = arith.constant 0 : index
    %326 = vector.load %arg2[%c7, %c0_199, %c0_200] : memref<8x128x16xbf16, #tpu.memory_space<vmem>>, vector<1x128x16xbf16>
    %327 = vector.shape_cast %326 : vector<1x128x16xbf16> to vector<128x16xbf16>
    %cst_201 = arith.constant dense<0.000000e+00> : vector<64x16xf32>
    %328 = tpu.matmul %2, %327, %cst_201 {dimension_numbers = #tpu.dot_dimension_numbers<[1], [0], [0], [1], [0, 0, 1, 1], [], []>} : vector<64x128xbf16>, vector<128x16xbf16>, vector<64x16xf32> -> vector<64x16xf32>
    %c7_202 = arith.constant 7 : index
    %c0_203 = arith.constant 0 : index
    %c0_204 = arith.constant 0 : index
    %329 = vector.load %arg3[%c7_202, %c0_203, %c0_204] : memref<8x1x16xf32, #tpu.memory_space<vmem>>, vector<1x1x16xf32>
    %330 = vector.shape_cast %329 : vector<1x1x16xf32> to vector<1x16xf32>
    %331 = vector.broadcast %330 : vector<1x16xf32> to vector<64x16xf32>
    %332 = arith.addf %328, %331 : vector<64x16xf32>
    %c7_205 = arith.constant 7 : index
    %c0_206 = arith.constant 0 : index
    %c0_207 = arith.constant 0 : index
    %333 = vector.load %arg4[%c7_205, %c0_206, %c0_207] : memref<8x128x16xbf16, #tpu.memory_space<vmem>>, vector<1x128x16xbf16>
    %334 = vector.shape_cast %333 : vector<1x128x16xbf16> to vector<128x16xbf16>
    %cst_208 = arith.constant dense<0.000000e+00> : vector<64x16xf32>
    %335 = tpu.matmul %2, %334, %cst_208 {dimension_numbers = #tpu.dot_dimension_numbers<[1], [0], [0], [1], [0, 0, 1, 1], [], []>} : vector<64x128xbf16>, vector<128x16xbf16>, vector<64x16xf32> -> vector<64x16xf32>
    %c7_209 = arith.constant 7 : index
    %c0_210 = arith.constant 0 : index
    %c0_211 = arith.constant 0 : index
    %336 = vector.load %arg5[%c7_209, %c0_210, %c0_211] : memref<8x1x16xf32, #tpu.memory_space<vmem>>, vector<1x1x16xf32>
    %337 = vector.shape_cast %336 : vector<1x1x16xf32> to vector<1x16xf32>
    %338 = vector.broadcast %337 : vector<1x16xf32> to vector<64x16xf32>
    %339 = arith.addf %335, %338 : vector<64x16xf32>
    %c7_212 = arith.constant 7 : index
    %c0_213 = arith.constant 0 : index
    %c0_214 = arith.constant 0 : index
    %340 = vector.load %arg6[%c7_212, %c0_213, %c0_214] : memref<8x128x16xbf16, #tpu.memory_space<vmem>>, vector<1x128x16xbf16>
    %341 = vector.shape_cast %340 : vector<1x128x16xbf16> to vector<128x16xbf16>
    %cst_215 = arith.constant dense<0.000000e+00> : vector<64x16xf32>
    %342 = tpu.matmul %2, %341, %cst_215 {dimension_numbers = #tpu.dot_dimension_numbers<[1], [0], [0], [1], [0, 0, 1, 1], [], []>} : vector<64x128xbf16>, vector<128x16xbf16>, vector<64x16xf32> -> vector<64x16xf32>
    %c7_216 = arith.constant 7 : index
    %c0_217 = arith.constant 0 : index
    %c0_218 = arith.constant 0 : index
    %343 = vector.load %arg7[%c7_216, %c0_217, %c0_218] : memref<8x1x16xf32, #tpu.memory_space<vmem>>, vector<1x1x16xf32>
    %344 = vector.shape_cast %343 : vector<1x1x16xf32> to vector<1x16xf32>
    %345 = vector.broadcast %344 : vector<1x16xf32> to vector<64x16xf32>
    %346 = arith.addf %342, %345 : vector<64x16xf32>
    %347 = vector.shape_cast %332 : vector<64x16xf32> to vector<2x32x16xf32>
    %348 = arith.truncf %347 : vector<2x32x16xf32> to vector<2x32x16xbf16>
    %349 = vector.shape_cast %339 : vector<64x16xf32> to vector<2x32x16xf32>
    %350 = arith.truncf %349 : vector<2x32x16xf32> to vector<2x32x16xbf16>
    %351 = vector.shape_cast %346 : vector<64x16xf32> to vector<2x32x16xf32>
    %352 = arith.truncf %351 : vector<2x32x16xf32> to vector<2x32x16xbf16>
    "tpu.trace_start"() <{level = 10 : i32, message = "bqd,bkd->bqk"}> : () -> ()
    %cst_219 = arith.constant dense<0.000000e+00> : vector<2x32x32xf32>
    %353 = tpu.matmul %348, %350, %cst_219 {dimension_numbers = #tpu.dot_dimension_numbers<[2], [2], [1], [1], [0, 0, 0, 1, 1, 1], [0], [0]>} : vector<2x32x16xbf16>, vector<2x32x16xbf16>, vector<2x32x32xf32> -> vector<2x32x32xf32>
    "tpu.trace_stop"() : () -> ()
    %cst_220 = arith.constant dense<0xFF800000> : vector<2x32xf32>
    %354 = vector.multi_reduction <maximumf>, %353, %cst_220 [2] : vector<2x32x32xf32> to vector<2x32xf32>
    %355 = vector.shape_cast %354 : vector<2x32xf32> to vector<2x32x1xf32>
    %356 = vector.broadcast %355 : vector<2x32x1xf32> to vector<2x32x32xf32>
    %357 = arith.subf %353, %356 : vector<2x32x32xf32>
    %358 = math.exp %357 : vector<2x32x32xf32>
    %cst_221 = arith.constant dense<0.000000e+00> : vector<2x32xf32>
    %359 = vector.multi_reduction <add>, %358, %cst_221 [2] : vector<2x32x32xf32> to vector<2x32xf32>
    %360 = vector.shape_cast %359 : vector<2x32xf32> to vector<2x32x1xf32>
    %361 = tpu.reciprocal %360 {approx = true} : vector<2x32x1xf32> -> vector<2x32x1xf32>
    %362 = vector.broadcast %361 : vector<2x32x1xf32> to vector<2x32x32xf32>
    %363 = arith.mulf %358, %362 : vector<2x32x32xf32>
    %364 = arith.truncf %363 : vector<2x32x32xf32> to vector<2x32x32xbf16>
    "tpu.trace_start"() <{level = 10 : i32, message = "bqk,bkd->bqd"}> : () -> ()
    %cst_222 = arith.constant dense<0.000000e+00> : vector<2x32x16xf32>
    %365 = tpu.matmul %364, %352, %cst_222 {dimension_numbers = #tpu.dot_dimension_numbers<[2], [1], [1], [2], [0, 0, 0, 1, 1, 2], [0], [0]>} : vector<2x32x32xbf16>, vector<2x32x16xbf16>, vector<2x32x16xf32> -> vector<2x32x16xf32>
    "tpu.trace_stop"() : () -> ()
    %366 = vector.shape_cast %365 : vector<2x32x16xf32> to vector<64x16xf32>
    %367 = arith.truncf %366 : vector<64x16xf32> to vector<64x16xbf16>
    %c7_223 = arith.constant 7 : index
    %c0_224 = arith.constant 0 : index
    %c0_225 = arith.constant 0 : index
    %368 = vector.load %arg8[%c7_223, %c0_224, %c0_225] : memref<8x16x128xbf16, #tpu.memory_space<vmem>>, vector<1x16x128xbf16>
    %369 = vector.shape_cast %368 : vector<1x16x128xbf16> to vector<16x128xbf16>
    %cst_226 = arith.constant dense<0.000000e+00> : vector<64x128xf32>
    %370 = tpu.matmul %367, %369, %cst_226 {dimension_numbers = #tpu.dot_dimension_numbers<[1], [0], [0], [1], [0, 0, 1, 1], [], []>} : vector<64x16xbf16>, vector<16x128xbf16>, vector<64x128xf32> -> vector<64x128xf32>
    %371 = arith.addf %325, %370 : vector<64x128xf32>
    %c0_227 = arith.constant 0 : index
    %c0_228 = arith.constant 0 : index
    %372 = vector.load %arg9[%c0_227, %c0_228] : memref<1x128xf32, #tpu.memory_space<vmem>>, vector<1x128xf32>
    %373 = vector.broadcast %372 : vector<1x128xf32> to vector<64x128xf32>
    %374 = arith.addf %371, %373 : vector<64x128xf32>
    %375 = arith.addf %1, %374 : vector<64x128xf32>
    %c0_229 = arith.constant 0 : index
    %c0_230 = arith.constant 0 : index
    %376 = vector.load %arg10[%c0_229, %c0_230] : memref<1x128xf32, #tpu.memory_space<vmem>>, vector<1x128xf32>
    %c0_231 = arith.constant 0 : index
    %c0_232 = arith.constant 0 : index
    %377 = vector.load %arg11[%c0_231, %c0_232] : memref<1x128xf32, #tpu.memory_space<vmem>>, vector<1x128xf32>
    %cst_233 = arith.constant dense<0.000000e+00> : vector<64xf32>
    %378 = vector.multi_reduction <add>, %375, %cst_233 [1] : vector<64x128xf32> to vector<64xf32>
    %379 = vector.shape_cast %378 : vector<64xf32> to vector<64x1xf32>
    %cst_234 = arith.constant 1.280000e+02 : f32
    %380 = vector.broadcast %cst_234 : f32 to vector<64x1xf32>
    %381 = arith.divf %379, %380 : vector<64x1xf32>
    %382 = vector.broadcast %381 : vector<64x1xf32> to vector<64x128xf32>
    %383 = arith.subf %375, %382 : vector<64x128xf32>
    %384 = arith.mulf %383, %383 : vector<64x128xf32>
    %cst_235 = arith.constant dense<0.000000e+00> : vector<64xf32>
    %385 = vector.multi_reduction <add>, %384, %cst_235 [1] : vector<64x128xf32> to vector<64xf32>
    %386 = vector.shape_cast %385 : vector<64xf32> to vector<64x1xf32>
    %cst_236 = arith.constant 1.280000e+02 : f32
    %387 = vector.broadcast %cst_236 : f32 to vector<64x1xf32>
    %388 = arith.divf %386, %387 : vector<64x1xf32>
    %cst_237 = arith.constant 9.99999974E-6 : f32
    %389 = vector.broadcast %cst_237 : f32 to vector<64x1xf32>
    %390 = arith.addf %388, %389 : vector<64x1xf32>
    %391 = math.rsqrt %390 : vector<64x1xf32>
    %392 = vector.broadcast %391 : vector<64x1xf32> to vector<64x128xf32>
    %393 = arith.mulf %383, %392 : vector<64x128xf32>
    %394 = vector.broadcast %376 : vector<1x128xf32> to vector<64x128xf32>
    %395 = arith.mulf %393, %394 : vector<64x128xf32>
    %396 = vector.broadcast %377 : vector<1x128xf32> to vector<64x128xf32>
    %397 = arith.addf %395, %396 : vector<64x128xf32>
    %398 = arith.truncf %397 : vector<64x128xf32> to vector<64x128xbf16>
    %c0_238 = arith.constant 0 : index
    %c0_239 = arith.constant 0 : index
    %399 = vector.load %arg12[%c0_238, %c0_239] : memref<128x128xbf16, #tpu.memory_space<vmem>>, vector<128x128xbf16>
    %cst_240 = arith.constant dense<0.000000e+00> : vector<64x128xf32>
    %400 = tpu.matmul %398, %399, %cst_240 {dimension_numbers = #tpu.dot_dimension_numbers<[1], [0], [0], [1], [0, 0, 1, 1], [], []>} : vector<64x128xbf16>, vector<128x128xbf16>, vector<64x128xf32> -> vector<64x128xf32>
    %c0_241 = arith.constant 0 : index
    %c0_242 = arith.constant 0 : index
    %401 = vector.load %arg13[%c0_241, %c0_242] : memref<1x128xf32, #tpu.memory_space<vmem>>, vector<1x128xf32>
    %402 = vector.broadcast %401 : vector<1x128xf32> to vector<64x128xf32>
    %403 = arith.addf %400, %402 : vector<64x128xf32>
    %cst_243 = arith.constant 5.000000e-01 : f32
    %404 = vector.broadcast %cst_243 : f32 to vector<64x128xf32>
    %405 = arith.mulf %404, %403 : vector<64x128xf32>
    %cst_244 = arith.constant 4.471500e-02 : f32
    %406 = vector.broadcast %cst_244 : f32 to vector<64x128xf32>
    %407 = arith.mulf %406, %403 : vector<64x128xf32>
    %408 = arith.mulf %407, %403 : vector<64x128xf32>
    %409 = arith.mulf %408, %403 : vector<64x128xf32>
    %410 = arith.addf %403, %409 : vector<64x128xf32>
    %cst_245 = arith.constant 0.797884583 : f32
    %411 = vector.broadcast %cst_245 : f32 to vector<64x128xf32>
    %412 = arith.mulf %411, %410 : vector<64x128xf32>
    %413 = math.tanh %412 : vector<64x128xf32>
    %cst_246 = arith.constant 1.000000e+00 : f32
    %414 = vector.broadcast %cst_246 : f32 to vector<64x128xf32>
    %415 = arith.addf %414, %413 : vector<64x128xf32>
    %416 = arith.mulf %405, %415 : vector<64x128xf32>
    %417 = arith.truncf %416 : vector<64x128xf32> to vector<64x128xbf16>
    %c0_247 = arith.constant 0 : index
    %c0_248 = arith.constant 0 : index
    %418 = vector.load %arg14[%c0_247, %c0_248] : memref<128x128xbf16, #tpu.memory_space<vmem>>, vector<128x128xbf16>
    %cst_249 = arith.constant dense<0.000000e+00> : vector<64x128xf32>
    %419 = tpu.matmul %417, %418, %cst_249 {dimension_numbers = #tpu.dot_dimension_numbers<[1], [0], [0], [1], [0, 0, 1, 1], [], []>} : vector<64x128xbf16>, vector<128x128xbf16>, vector<64x128xf32> -> vector<64x128xf32>
    %c0_250 = arith.constant 0 : index
    %c0_251 = arith.constant 0 : index
    %420 = vector.load %arg15[%c0_250, %c0_251] : memref<1x128xf32, #tpu.memory_space<vmem>>, vector<1x128xf32>
    %421 = vector.broadcast %420 : vector<1x128xf32> to vector<64x128xf32>
    %422 = arith.addf %419, %421 : vector<64x128xf32>
    %423 = arith.addf %397, %422 : vector<64x128xf32>
    %c0_252 = arith.constant 0 : index
    %c0_253 = arith.constant 0 : index
    %424 = vector.load %arg16[%c0_252, %c0_253] : memref<1x128xf32, #tpu.memory_space<vmem>>, vector<1x128xf32>
    %c0_254 = arith.constant 0 : index
    %c0_255 = arith.constant 0 : index
    %425 = vector.load %arg17[%c0_254, %c0_255] : memref<1x128xf32, #tpu.memory_space<vmem>>, vector<1x128xf32>
    %cst_256 = arith.constant dense<0.000000e+00> : vector<64xf32>
    %426 = vector.multi_reduction <add>, %423, %cst_256 [1] : vector<64x128xf32> to vector<64xf32>
    %427 = vector.shape_cast %426 : vector<64xf32> to vector<64x1xf32>
    %cst_257 = arith.constant 1.280000e+02 : f32
    %428 = vector.broadcast %cst_257 : f32 to vector<64x1xf32>
    %429 = arith.divf %427, %428 : vector<64x1xf32>
    %430 = vector.broadcast %429 : vector<64x1xf32> to vector<64x128xf32>
    %431 = arith.subf %423, %430 : vector<64x128xf32>
    %432 = arith.mulf %431, %431 : vector<64x128xf32>
    %cst_258 = arith.constant dense<0.000000e+00> : vector<64xf32>
    %433 = vector.multi_reduction <add>, %432, %cst_258 [1] : vector<64x128xf32> to vector<64xf32>
    %434 = vector.shape_cast %433 : vector<64xf32> to vector<64x1xf32>
    %cst_259 = arith.constant 1.280000e+02 : f32
    %435 = vector.broadcast %cst_259 : f32 to vector<64x1xf32>
    %436 = arith.divf %434, %435 : vector<64x1xf32>
    %cst_260 = arith.constant 9.99999974E-6 : f32
    %437 = vector.broadcast %cst_260 : f32 to vector<64x1xf32>
    %438 = arith.addf %436, %437 : vector<64x1xf32>
    %439 = math.rsqrt %438 : vector<64x1xf32>
    %440 = vector.broadcast %439 : vector<64x1xf32> to vector<64x128xf32>
    %441 = arith.mulf %431, %440 : vector<64x128xf32>
    %442 = vector.broadcast %424 : vector<1x128xf32> to vector<64x128xf32>
    %443 = arith.mulf %441, %442 : vector<64x128xf32>
    %444 = vector.broadcast %425 : vector<1x128xf32> to vector<64x128xf32>
    %445 = arith.addf %443, %444 : vector<64x128xf32>
    %446 = vector.shape_cast %445 : vector<64x128xf32> to vector<2x32x128xf32>
    %c0_261 = arith.constant 0 : index
    %c0_262 = arith.constant 0 : index
    %c0_263 = arith.constant 0 : index
    %447 = vector.load %arg18[%c0_261, %c0_262, %c0_263] : memref<2x32x128xf32, #tpu.memory_space<vmem>>, vector<2x32x128xf32>
    tpu.vector_store %arg18[%c0_261, %c0_262, %c0_263], %446 {strides = array<i32>} : memref<2x32x128xf32, #tpu.memory_space<vmem>>, vector<2x32x128xf32>,
    return
  }
  func.func @transform_0(%arg0: i32) -> (i32, i32, i32) {
    %c0_i32 = arith.constant 0 : i32
    %c0_i32_0 = arith.constant 0 : i32
    %c0_i32_1 = arith.constant 0 : i32
    return %arg0, %c0_i32, %c0_i32_0 : i32, i32, i32
  }
  func.func @transform_1(%arg0: i32) -> (i32, i32, i32) {
    %c0_i32 = arith.constant 0 : i32
    %c0_i32_0 = arith.constant 0 : i32
    %c0_i32_1 = arith.constant 0 : i32
    %c0_i32_2 = arith.constant 0 : i32
    return %c0_i32, %c0_i32_0, %c0_i32_1 : i32, i32, i32
  }
  func.func @transform_2(%arg0: i32) -> (i32, i32, i32) {
    %c0_i32 = arith.constant 0 : i32
    %c0_i32_0 = arith.constant 0 : i32
    %c0_i32_1 = arith.constant 0 : i32
    %c0_i32_2 = arith.constant 0 : i32
    return %c0_i32, %c0_i32_0, %c0_i32_1 : i32, i32, i32
  }
  func.func @transform_3(%arg0: i32) -> (i32, i32, i32) {
    %c0_i32 = arith.constant 0 : i32
    %c0_i32_0 = arith.constant 0 : i32
    %c0_i32_1 = arith.constant 0 : i32
    %c0_i32_2 = arith.constant 0 : i32
    return %c0_i32, %c0_i32_0, %c0_i32_1 : i32, i32, i32
  }
  func.func @transform_4(%arg0: i32) -> (i32, i32, i32) {
    %c0_i32 = arith.constant 0 : i32
    %c0_i32_0 = arith.constant 0 : i32
    %c0_i32_1 = arith.constant 0 : i32
    %c0_i32_2 = arith.constant 0 : i32
    return %c0_i32, %c0_i32_0, %c0_i32_1 : i32, i32, i32
  }
  func.func @transform_5(%arg0: i32) -> (i32, i32, i32) {
    %c0_i32 = arith.constant 0 : i32
    %c0_i32_0 = arith.constant 0 : i32
    %c0_i32_1 = arith.constant 0 : i32
    %c0_i32_2 = arith.constant 0 : i32
    return %c0_i32, %c0_i32_0, %c0_i32_1 : i32, i32, i32
  }
  func.func @transform_6(%arg0: i32) -> (i32, i32, i32) {
    %c0_i32 = arith.constant 0 : i32
    %c0_i32_0 = arith.constant 0 : i32
    %c0_i32_1 = arith.constant 0 : i32
    %c0_i32_2 = arith.constant 0 : i32
    return %c0_i32, %c0_i32_0, %c0_i32_1 : i32, i32, i32
  }
  func.func @transform_7(%arg0: i32) -> (i32, i32, i32) {
    %c0_i32 = arith.constant 0 : i32
    %c0_i32_0 = arith.constant 0 : i32
    %c0_i32_1 = arith.constant 0 : i32
    %c0_i32_2 = arith.constant 0 : i32
    return %c0_i32, %c0_i32_0, %c0_i32_1 : i32, i32, i32
  }
  func.func @transform_8(%arg0: i32) -> (i32, i32) {
    %c0_i32 = arith.constant 0 : i32
    %c0_i32_0 = arith.constant 0 : i32
    %c0_i32_1 = arith.constant 0 : i32
    return %c0_i32, %c0_i32_0 : i32, i32
  }
  func.func @transform_9(%arg0: i32) -> (i32, i32) {
    %c0_i32 = arith.constant 0 : i32
    %c0_i32_0 = arith.constant 0 : i32
    %c0_i32_1 = arith.constant 0 : i32
    return %c0_i32, %c0_i32_0 : i32, i32
  }
  func.func @transform_10(%arg0: i32) -> (i32, i32) {
    %c0_i32 = arith.constant 0 : i32
    %c0_i32_0 = arith.constant 0 : i32
    %c0_i32_1 = arith.constant 0 : i32
    return %c0_i32, %c0_i32_0 : i32, i32
  }
  func.func @transform_11(%arg0: i32) -> (i32, i32) {
    %c0_i32 = arith.constant 0 : i32
    %c0_i32_0 = arith.constant 0 : i32
    %c0_i32_1 = arith.constant 0 : i32
    return %c0_i32, %c0_i32_0 : i32, i32
  }
  func.func @transform_12(%arg0: i32) -> (i32, i32) {
    %c0_i32 = arith.constant 0 : i32
    %c0_i32_0 = arith.constant 0 : i32
    %c0_i32_1 = arith.constant 0 : i32
    return %c0_i32, %c0_i32_0 : i32, i32
  }
  func.func @transform_13(%arg0: i32) -> (i32, i32) {
    %c0_i32 = arith.constant 0 : i32
    %c0_i32_0 = arith.constant 0 : i32
    %c0_i32_1 = arith.constant 0 : i32
    return %c0_i32, %c0_i32_0 : i32, i32
  }
  func.func @transform_14(%arg0: i32) -> (i32, i32) {
    %c0_i32 = arith.constant 0 : i32
    %c0_i32_0 = arith.constant 0 : i32
    %c0_i32_1 = arith.constant 0 : i32
    return %c0_i32, %c0_i32_0 : i32, i32
  }
  func.func @transform_15(%arg0: i32) -> (i32, i32) {
    %c0_i32 = arith.constant 0 : i32
    %c0_i32_0 = arith.constant 0 : i32
    %c0_i32_1 = arith.constant 0 : i32
    return %c0_i32, %c0_i32_0 : i32, i32
  }
  func.func @transform_16(%arg0: i32) -> (i32, i32) {
    %c0_i32 = arith.constant 0 : i32
    %c0_i32_0 = arith.constant 0 : i32
    %c0_i32_1 = arith.constant 0 : i32
    return %c0_i32, %c0_i32_0 : i32, i32
  }
  func.func @transform_17(%arg0: i32) -> (i32, i32, i32) {
    %c0_i32 = arith.constant 0 : i32
    %c0_i32_0 = arith.constant 0 : i32
    %c0_i32_1 = arith.constant 0 : i32
    return %arg0, %c0_i32, %c0_i32_0 : i32, i32, i32
  }
}

</mosaic_0001>

<llo_original>
// kernel: tpu_custom_call.1
$region0: #{tpu_custom_call.1}
  #allocation0 [shape = 'u32[]', space=smem, size = 0x4, offset = 0x4, fixed_abs, tag = 'smem constant byte address 0x4 - core index']
  #allocation1 [shape = 'u32[72,128]{1,0:T(1,128)}', space=vmem, size = 0x9000, scoped, tag = 'internal scratch']
  %s0 = inlined_call_operand.vmem [shape: f32[2,32,128], index: 0, kind: input, shape index: {}]
  %s1 = inlined_call_operand.vmem [shape: bf16[8,128,16], index: 1, kind: input, shape index: {}]
  %s2 = inlined_call_operand.vmem [shape: f32[8,1,16], index: 2, kind: input, shape index: {}]
  %s3 = inlined_call_operand.vmem [shape: bf16[8,128,16], index: 3, kind: input, shape index: {}]
  %s4 = inlined_call_operand.vmem [shape: f32[8,1,16], index: 4, kind: input, shape index: {}]
  %s5 = inlined_call_operand.vmem [shape: bf16[8,128,16], index: 5, kind: input, shape index: {}]
  %s6 = inlined_call_operand.vmem [shape: f32[8,1,16], index: 6, kind: input, shape index: {}]
  %s7 = inlined_call_operand.vmem [shape: bf16[8,16,128], index: 7, kind: input, shape index: {}]
  %s8 = inlined_call_operand.vmem [shape: f32[1,128], index: 8, kind: input, shape index: {}]
  %s9 = inlined_call_operand.vmem [shape: f32[1,128], index: 9, kind: input, shape index: {}]
  %s10 = inlined_call_operand.vmem [shape: f32[1,128], index: 10, kind: input, shape index: {}]
  %s11 = inlined_call_operand.vmem [shape: bf16[128,128], index: 11, kind: input, shape index: {}]
  %s12 = inlined_call_operand.vmem [shape: f32[1,128], index: 12, kind: input, shape index: {}]
  %s13 = inlined_call_operand.vmem [shape: bf16[128,128], index: 13, kind: input, shape index: {}]
  %s14 = inlined_call_operand.vmem [shape: f32[1,128], index: 14, kind: input, shape index: {}]
  %s15 = inlined_call_operand.vmem [shape: f32[1,128], index: 15, kind: input, shape index: {}]
  %s16 = inlined_call_operand.vmem [shape: f32[1,128], index: 16, kind: input, shape index: {}]
  %s17 = inlined_call_operand.hbm [shape: f32[2,32,128], index: 17, kind: output, shape index: {}]
  %s18 = sld [smem:[#allocation0]]
  $region78: #{tpu_custom_call.1} parent=0
    _
  %s20 = ssub.s32 1, %s18
  %s21 = scalar_select 0, %s20, %s18
  $region1: #{tpu_custom_call.1} parent=0
    #allocation2 [shape = 'u8[32768]{0}', space=vmem, size = 0x8000, scoped, tag = 'output window, operand 0, single buffered']
    #allocation3 [shape = 's32[1]{0}', space=sflag, size = 0x4, scoped, tag = 'scoped memory for tpu_custom_call.1']
    %22 = vsyncpa [#allocation3], 0
    // Predicated region
    $region2: #{tpu_custom_call.1} parent=1 // pred_check
      _
    $region3: #{tpu_custom_call.1} parent=1 // pred_check_branch
      %24 = sbr.rel (0) target = $region5
    $region4: #{tpu_custom_call.1} parent=1 // pred_region
      _
    $region5: #{tpu_custom_call.1} parent=1 // pred_fallthru
      _
    // Predicated region
    $region6: #{tpu_custom_call.1} parent=1 // pred_check
      _
    $region7: #{tpu_custom_call.1} parent=1 // pred_check_branch
      %26 = sbr.rel (0) target = $region9
    $region8: #{tpu_custom_call.1} parent=1 // pred_region
      _
    $region9: #{tpu_custom_call.1} parent=1 // pred_fallthru
      _
    // Predicated region
    $region10: #{tpu_custom_call.1} parent=1 // pred_check
      _
    $region11: #{tpu_custom_call.1} parent=1 // pred_check_branch
      %28 = sbr.rel (0) target = $region13
    $region12: #{tpu_custom_call.1} parent=1 // pred_region
      _
    $region13: #{tpu_custom_call.1} parent=1 // pred_fallthru
      _
    // Predicated region
    $region14: #{tpu_custom_call.1} parent=1 // pred_check
      _
    $region15: #{tpu_custom_call.1} parent=1 // pred_check_branch
      %30 = sbr.rel (0) target = $region17
    $region16: #{tpu_custom_call.1} parent=1 // pred_region
      _
    $region17: #{tpu_custom_call.1} parent=1 // pred_fallthru
      _
    // Predicated region
    $region18: #{tpu_custom_call.1} parent=1 // pred_check
      _
    $region19: #{tpu_custom_call.1} parent=1 // pred_check_branch
      %32 = sbr.rel (0) target = $region21
    $region20: #{tpu_custom_call.1} parent=1 // pred_region
      _
    $region21: #{tpu_custom_call.1} parent=1 // pred_fallthru
      _
    // Predicated region
    $region22: #{tpu_custom_call.1} parent=1 // pred_check
      _
    $region23: #{tpu_custom_call.1} parent=1 // pred_check_branch
      %34 = sbr.rel (0) target = $region25
    $region24: #{tpu_custom_call.1} parent=1 // pred_region
      _
    $region25: #{tpu_custom_call.1} parent=1 // pred_fallthru
      _
    // Predicated region
    $region26: #{tpu_custom_call.1} parent=1 // pred_check
      _
    $region27: #{tpu_custom_call.1} parent=1 // pred_check_branch
      %36 = sbr.rel (0) target = $region29
    $region28: #{tpu_custom_call.1} parent=1 // pred_region
      _
    $region29: #{tpu_custom_call.1} parent=1 // pred_fallthru
      _
    // Predicated region
    $region30: #{tpu_custom_call.1} parent=1 // pred_check
      _
    $region31: #{tpu_custom_call.1} parent=1 // pred_check_branch
      %38 = sbr.rel (0) target = $region33
    $region32: #{tpu_custom_call.1} parent=1 // pred_region
      _
    $region33: #{tpu_custom_call.1} parent=1 // pred_fallthru
      _
    // Predicated region
    $region34: #{tpu_custom_call.1} parent=1 // pred_check
      _
    $region35: #{tpu_custom_call.1} parent=1 // pred_check_branch
      %40 = sbr.rel (0) target = $region37
    $region36: #{tpu_custom_call.1} parent=1 // pred_region
      _
    $region37: #{tpu_custom_call.1} parent=1 // pred_fallthru
      _
    // Predicated region
    $region38: #{tpu_custom_call.1} parent=1 // pred_check
      _
    $region39: #{tpu_custom_call.1} parent=1 // pred_check_branch
      %42 = sbr.rel (0) target = $region41
    $region40: #{tpu_custom_call.1} parent=1 // pred_region
      _
    $region41: #{tpu_custom_call.1} parent=1 // pred_fallthru
      _
    // Predicated region
    $region42: #{tpu_custom_call.1} parent=1 // pred_check
      _
    $region43: #{tpu_custom_call.1} parent=1 // pred_check_branch
      %44 = sbr.rel (0) target = $region45
    $region44: #{tpu_custom_call.1} parent=1 // pred_region
      _
    $region45: #{tpu_custom_call.1} parent=1 // pred_fallthru
      _
    // Predicated region
    $region46: #{tpu_custom_call.1} parent=1 // pred_check
      _
    $region47: #{tpu_custom_call.1} parent=1 // pred_check_branch
      %46 = sbr.rel (0) target = $region49
    $region48: #{tpu_custom_call.1} parent=1 // pred_region
      _
    $region49: #{tpu_custom_call.1} parent=1 // pred_fallthru
      _
    // Predicated region
    $region50: #{tpu_custom_call.1} parent=1 // pred_check
      _
    $region51: #{tpu_custom_call.1} parent=1 // pred_check_branch
      %48 = sbr.rel (0) target = $region53
    $region52: #{tpu_custom_call.1} parent=1 // pred_region
      _
    $region53: #{tpu_custom_call.1} parent=1 // pred_fallthru
      _
    // Predicated region
    $region54: #{tpu_custom_call.1} parent=1 // pred_check
      _
    $region55: #{tpu_custom_call.1} parent=1 // pred_check_branch
      %50 = sbr.rel (0) target = $region57
    $region56: #{tpu_custom_call.1} parent=1 // pred_region
      _
    $region57: #{tpu_custom_call.1} parent=1 // pred_fallthru
      _
    // Predicated region
    $region58: #{tpu_custom_call.1} parent=1 // pred_check
      _
    $region59: #{tpu_custom_call.1} parent=1 // pred_check_branch
      %52 = sbr.rel (0) target = $region61
    $region60: #{tpu_custom_call.1} parent=1 // pred_region
      _
    $region61: #{tpu_custom_call.1} parent=1 // pred_fallthru
      _
    // Predicated region
    $region62: #{tpu_custom_call.1} parent=1 // pred_check
      _
    $region63: #{tpu_custom_call.1} parent=1 // pred_check_branch
      %54 = sbr.rel (0) target = $region65
    $region64: #{tpu_custom_call.1} parent=1 // pred_region
      _
    $region65: #{tpu_custom_call.1} parent=1 // pred_fallthru
      _
    // Predicated region
    $region66: #{tpu_custom_call.1} parent=1 // pred_check
      _
    $region67: #{tpu_custom_call.1} parent=1 // pred_check_branch
      %56 = sbr.rel (0) target = $region69
    $region68: #{tpu_custom_call.1} parent=1 // pred_region
      _
    $region69: #{tpu_custom_call.1} parent=1 // pred_fallthru
      _
    %v58 = vld [vmem:[%s0] sm:$0xff]
    %v59 = vld [vmem:[%s0 + $0x8] sm:$0xff]
    %v60 = vld [vmem:[%s0 + $0x10] sm:$0xff]
    %v61 = vld [vmem:[%s0 + $0x18] sm:$0xff]
    %v62 = vld [vmem:[%s0 + $0x20] sm:$0xff]
    %v63 = vld [vmem:[%s0 + $0x28] sm:$0xff]
    %v64 = vld [vmem:[%s0 + $0x30] sm:$0xff]
    %v65 = vld [vmem:[%s0 + $0x38] sm:$0xff]
    %v66 = vpack.c.bf16 %v59, %v58
    %v67 = vpack.c.bf16 %v61, %v60
    %v68 = vpack.c.bf16 %v63, %v62
    %v69 = vpack.c.bf16 %v65, %v64
    %v70 = vld [vmem:[%s1] sm:$0xf]
    %v71 = vld [vmem:[%s1 + $0x4] sm:$0xf]
    %v72 = vld [vmem:[%s1 + $0x8] sm:$0xf]
    %v73 = vld [vmem:[%s1 + $0xc] sm:$0xf]
    %v74 = vld [vmem:[%s1 + $0x10] sm:$0xf]
    %v75 = vld [vmem:[%s1 + $0x14] sm:$0xf]
    %v76 = vld [vmem:[%s1 + $0x18] sm:$0xf]
    %v77 = vld [vmem:[%s1 + $0x1c] sm:$0xf]
    %v78 = vld [vmem:[%s1 + $0x20] sm:$0xf]
    %v79 = vld [vmem:[%s1 + $0x24] sm:$0xf]
    %v80 = vld [vmem:[%s1 + $0x28] sm:$0xf]
    %v81 = vld [vmem:[%s1 + $0x2c] sm:$0xf]
    %v82 = vld [vmem:[%s1 + $0x30] sm:$0xf]
    %v83 = vld [vmem:[%s1 + $0x34] sm:$0xf]
    %v84 = vld [vmem:[%s1 + $0x38] sm:$0xf]
    %v85 = vld [vmem:[%s1 + $0x3c] sm:$0xf]
    %v86 = vld [vmem:[%s2] sm:$0x1]
    %v88 = vperm.slane %v86, 0
    %v106 = vunpack.c.l.b16 %v70
    %v107 = vunpack.c.l.b16 %v71
    %v108 = vunpack.c.l.b16 %v72
    %v109 = vunpack.c.l.b16 %v73
    %v110 = vunpack.c.l.b16 %v74
    %v111 = vunpack.c.l.b16 %v75
    %v112 = vunpack.c.l.b16 %v76
    %v113 = vunpack.c.l.b16 %v77
    %v114 = vunpack.c.l.b16 %v78
    %v115 = vunpack.c.l.b16 %v79
    %v116 = vunpack.c.l.b16 %v80
    %v117 = vunpack.c.l.b16 %v81
    %v118 = vunpack.c.l.b16 %v82
    %v119 = vunpack.c.l.b16 %v83
    %v120 = vunpack.c.l.b16 %v84
    %v121 = vunpack.c.l.b16 %v85
    %v122 = vpack.c.b16 %v107, %v106
    %v123 = vpack.c.b16 %v109, %v108
    %v124 = vpack.c.b16 %v111, %v110
    %v125 = vpack.c.b16 %v113, %v112
    %v126 = vpack.c.b16 %v115, %v114
    %v127 = vpack.c.b16 %v117, %v116
    %v128 = vpack.c.b16 %v119, %v118
    %v129 = vpack.c.b16 %v121, %v120
    %138 = vmatpush.bf16.msra.mxu0 %v129
    %139 = vmatpush.bf16.msra.mxu0 %v128
    %140 = vmatpush.bf16.msra.mxu0 %v127
    %141 = vmatpush.bf16.msra.mxu0 %v126
    %142 = vmatpush.bf16.msra.mxu0 %v125
    %143 = vmatpush.bf16.msra.mxu0 %v124
    %144 = vmatpush.bf16.msra.mxu0 %v123
    %145 = vmatpush.bf16.msra.mxu0 %v122
    %146 = vmatmul.bf16.gmra.mxu0 %v66
    %v147 = vpop.f32.mrf.mxu0
    %v148 = vadd.f32 %v88, %v147
    %v149 = vpop.f32.mrf.mxu0
    %v150 = vadd.f32 %v88, %v149
    %151 = vmatmul.bf16.gmra.mxu0 %v67
    %v152 = vpop.f32.mrf.mxu0
    %v153 = vadd.f32 %v88, %v152
    %v154 = vpop.f32.mrf.mxu0
    %v155 = vadd.f32 %v88, %v154
    %156 = vmatmul.bf16.gmra.mxu0 %v68
    %v157 = vpop.f32.mrf.mxu0
    %v158 = vadd.f32 %v88, %v157
    %v159 = vpop.f32.mrf.mxu0
    %v160 = vadd.f32 %v88, %v159
    %161 = vmatmul.bf16.gmra.mxu0 %v69
    %v162 = vpop.f32.mrf.mxu0
    %v163 = vadd.f32 %v88, %v162
    %v164 = vpop.f32.mrf.mxu0
    %v165 = vadd.f32 %v88, %v164
    %166 = vdwg.mxu0
    %v167 = vld [vmem:[%s3] sm:$0xf]
    %v168 = vld [vmem:[%s3 + $0x4] sm:$0xf]
    %v169 = vld [vmem:[%s3 + $0x8] sm:$0xf]
    %v170 = vld [vmem:[%s3 + $0xc] sm:$0xf]
    %v171 = vld [vmem:[%s3 + $0x10] sm:$0xf]
    %v172 = vld [vmem:[%s3 + $0x14] sm:$0xf]
    %v173 = vld [vmem:[%s3 + $0x18] sm:$0xf]
    %v174 = vld [vmem:[%s3 + $0x1c] sm:$0xf]
    %v175 = vld [vmem:[%s3 + $0x20] sm:$0xf]
    %v176 = vld [vmem:[%s3 + $0x24] sm:$0xf]
    %v177 = vld [vmem:[%s3 + $0x28] sm:$0xf]
    %v178 = vld [vmem:[%s3 + $0x2c] sm:$0xf]
    %v179 = vld [vmem:[%s3 + $0x30] sm:$0xf]
    %v180 = vld [vmem:[%s3 + $0x34] sm:$0xf]
    %v181 = vld [vmem:[%s3 + $0x38] sm:$0xf]
    %v182 = vld [vmem:[%s3 + $0x3c] sm:$0xf]
    %v183 = vld [vmem:[%s4] sm:$0x1]
    %v185 = vperm.slane %v183, 0
    %v203 = vunpack.c.l.b16 %v167
    %v204 = vunpack.c.l.b16 %v168
    %v205 = vunpack.c.l.b16 %v169
    %v206 = vunpack.c.l.b16 %v170
    %v207 = vunpack.c.l.b16 %v171
    %v208 = vunpack.c.l.b16 %v172
    %v209 = vunpack.c.l.b16 %v173
    %v210 = vunpack.c.l.b16 %v174
    %v211 = vunpack.c.l.b16 %v175
    %v212 = vunpack.c.l.b16 %v176
    %v213 = vunpack.c.l.b16 %v177
    %v214 = vunpack.c.l.b16 %v178
    %v215 = vunpack.c.l.b16 %v179
    %v216 = vunpack.c.l.b16 %v180
    %v217 = vunpack.c.l.b16 %v181
    %v218 = vunpack.c.l.b16 %v182
    %v219 = vpack.c.b16 %v204, %v203
    %v220 = vpack.c.b16 %v206, %v205
    %v221 = vpack.c.b16 %v208, %v207
    %v222 = vpack.c.b16 %v210, %v209
    %v223 = vpack.c.b16 %v212, %v211
    %v224 = vpack.c.b16 %v214, %v213
    %v225 = vpack.c.b16 %v216, %v215
    %v226 = vpack.c.b16 %v218, %v217
    %235 = vmatpush.bf16.msra.mxu0 %v226
    %236 = vmatpush.bf16.msra.mxu0 %v225
    %237 = vmatpush.bf16.msra.mxu0 %v224
    %238 = vmatpush.bf16.msra.mxu0 %v223
    %239 = vmatpush.bf16.msra.mxu0 %v222
    %240 = vmatpush.bf16.msra.mxu0 %v221
    %241 = vmatpush.bf16.msra.mxu0 %v220
    %242 = vmatpush.bf16.msra.mxu0 %v219
    %243 = vmatmul.bf16.gmra.mxu0 %v66
    %v244 = vpop.f32.mrf.mxu0
    %v245 = vadd.f32 %v185, %v244
    %v246 = vpop.f32.mrf.mxu0
    %v247 = vadd.f32 %v185, %v246
    %248 = vmatmul.bf16.gmra.mxu0 %v67
    %v249 = vpop.f32.mrf.mxu0
    %v250 = vadd.f32 %v185, %v249
    %v251 = vpop.f32.mrf.mxu0
    %v252 = vadd.f32 %v185, %v251
    %253 = vmatmul.bf16.gmra.mxu0 %v68
    %v254 = vpop.f32.mrf.mxu0
    %v255 = vadd.f32 %v185, %v254
    %v256 = vpop.f32.mrf.mxu0
    %v257 = vadd.f32 %v185, %v256
    %258 = vmatmul.bf16.gmra.mxu0 %v69
    %v259 = vpop.f32.mrf.mxu0
    %v260 = vadd.f32 %v185, %v259
    %v261 = vpop.f32.mrf.mxu0
    %v262 = vadd.f32 %v185, %v261
    %263 = vdwg.mxu0
    %v264 = vld [vmem:[%s5] sm:$0xf]
    %v265 = vld [vmem:[%s5 + $0x4] sm:$0xf]
    %v266 = vld [vmem:[%s5 + $0x8] sm:$0xf]
    %v267 = vld [vmem:[%s5 + $0xc] sm:$0xf]
    %v268 = vld [vmem:[%s5 + $0x10] sm:$0xf]
    %v269 = vld [vmem:[%s5 + $0x14] sm:$0xf]
    %v270 = vld [vmem:[%s5 + $0x18] sm:$0xf]
    %v271 = vld [vmem:[%s5 + $0x1c] sm:$0xf]
    %v272 = vld [vmem:[%s5 + $0x20] sm:$0xf]
    %v273 = vld [vmem:[%s5 + $0x24] sm:$0xf]
    %v274 = vld [vmem:[%s5 + $0x28] sm:$0xf]
    %v275 = vld [vmem:[%s5 + $0x2c] sm:$0xf]
    %v276 = vld [vmem:[%s5 + $0x30] sm:$0xf]
    %v277 = vld [vmem:[%s5 + $0x34] sm:$0xf]
    %v278 = vld [vmem:[%s5 + $0x38] sm:$0xf]
    %v279 = vld [vmem:[%s5 + $0x3c] sm:$0xf]
    %v280 = vld [vmem:[%s6] sm:$0x1]
    %v282 = vperm.slane %v280, 0
    %v300 = vunpack.c.l.b16 %v264
    %v301 = vunpack.c.l.b16 %v265
    %v302 = vunpack.c.l.b16 %v266
    %v303 = vunpack.c.l.b16 %v267
    %v304 = vunpack.c.l.b16 %v268
    %v305 = vunpack.c.l.b16 %v269
    %v306 = vunpack.c.l.b16 %v270
    %v307 = vunpack.c.l.b16 %v271
    %v308 = vunpack.c.l.b16 %v272
    %v309 = vunpack.c.l.b16 %v273
    %v310 = vunpack.c.l.b16 %v274
    %v311 = vunpack.c.l.b16 %v275
    %v312 = vunpack.c.l.b16 %v276
    %v313 = vunpack.c.l.b16 %v277
    %v314 = vunpack.c.l.b16 %v278
    %v315 = vunpack.c.l.b16 %v279
    %v316 = vpack.c.b16 %v301, %v300
    %v317 = vpack.c.b16 %v303, %v302
    %v318 = vpack.c.b16 %v305, %v304
    %v319 = vpack.c.b16 %v307, %v306
    %v320 = vpack.c.b16 %v309, %v308
    %v321 = vpack.c.b16 %v311, %v310
    %v322 = vpack.c.b16 %v313, %v312
    %v323 = vpack.c.b16 %v315, %v314
    %332 = vmatpush.bf16.msra.mxu0 %v323
    %333 = vmatpush.bf16.msra.mxu0 %v322
    %334 = vmatpush.bf16.msra.mxu0 %v321
    %335 = vmatpush.bf16.msra.mxu0 %v320
    %336 = vmatpush.bf16.msra.mxu0 %v319
    %337 = vmatpush.bf16.msra.mxu0 %v318
    %338 = vmatpush.bf16.msra.mxu0 %v317
    %339 = vmatpush.bf16.msra.mxu0 %v316
    %340 = vmatmul.bf16.gmra.mxu0 %v66
    %v341 = vpop.f32.mrf.mxu0
    %v342 = vadd.f32 %v282, %v341
    %v343 = vpop.f32.mrf.mxu0
    %v344 = vadd.f32 %v282, %v343
    %345 = vmatmul.bf16.gmra.mxu0 %v67
    %v346 = vpop.f32.mrf.mxu0
    %v347 = vadd.f32 %v282, %v346
    %v348 = vpop.f32.mrf.mxu0
    %v349 = vadd.f32 %v282, %v348
    %350 = vmatmul.bf16.gmra.mxu0 %v68
    %v351 = vpop.f32.mrf.mxu0
    %v352 = vadd.f32 %v282, %v351
    %v353 = vpop.f32.mrf.mxu0
    %v354 = vadd.f32 %v282, %v353
    %355 = vmatmul.bf16.gmra.mxu0 %v69
    %v356 = vpop.f32.mrf.mxu0
    %v357 = vadd.f32 %v282, %v356
    %v358 = vpop.f32.mrf.mxu0
    %v359 = vadd.f32 %v282, %v358
    %360 = vdwg.mxu0
    %v361 = vpack.c.bf16 %v148, %v148
    %v362 = vpack.c.bf16 %v150, %v150
    %v363 = vpack.c.bf16 %v153, %v153
    %v364 = vpack.c.bf16 %v155, %v155
    %v365 = vpack.c.bf16 %v158, %v158
    %v366 = vpack.c.bf16 %v160, %v160
    %v367 = vpack.c.bf16 %v163, %v163
    %v368 = vpack.c.bf16 %v165, %v165
    %v369 = vpack.c.bf16 %v245, %v245
    %v370 = vpack.c.bf16 %v247, %v247
    %v371 = vpack.c.bf16 %v250, %v250
    %v372 = vpack.c.bf16 %v252, %v252
    %v373 = vpack.c.bf16 %v255, %v255
    %v374 = vpack.c.bf16 %v257, %v257
    %v375 = vpack.c.bf16 %v260, %v260
    %v376 = vpack.c.bf16 %v262, %v262
    %v377 = vpack.c.bf16 %v342, %v342
    %v378 = vpack.c.bf16 %v344, %v344
    %v379 = vpack.c.bf16 %v347, %v347
    %v380 = vpack.c.bf16 %v349, %v349
    %v381 = vpack.c.bf16 %v352, %v352
    %v382 = vpack.c.bf16 %v354, %v354
    %v383 = vpack.c.bf16 %v357, %v357
    %v384 = vpack.c.bf16 %v359, %v359
    %v389 = vunpack.c.l.b16 %v361
    %v390 = vunpack.c.l.b16 %v362
    %v391 = vunpack.c.l.b16 %v363
    %v392 = vunpack.c.l.b16 %v364
    %v393 = vpack.c.b16 %v390, %v389
    %v394 = vpack.c.b16 %v392, %v391
    %v399 = vunpack.c.l.b16 %v369
    %v400 = vunpack.c.l.b16 %v370
    %v401 = vunpack.c.l.b16 %v371
    %v402 = vunpack.c.l.b16 %v372
    %v403 = vpack.c.b16 %v400, %v399
    %v404 = vpack.c.b16 %v402, %v401
    %vm405 = vcmask 130048
    %v407 = vsel %vm405, %v393, 0
    %v410 = vsel %vm405, %v394, 0
    %v413 = vsel %vm405, %v403, 0
    %v416 = vsel %vm405, %v404, 0
    %418 = vmatpush.bf16.xpose.msra.mxu0 0
    %419 = vmatpush.bf16.xpose.msra.mxu0 0
    %420 = vmatpush.bf16.xpose.msra.mxu0 0
    %421 = vmatpush.bf16.xpose.msra.mxu0 0
    %422 = vmatpush.bf16.xpose.msra.mxu0 0
    %423 = vmatpush.bf16.xpose.msra.mxu0 0
    %424 = vmatpush.bf16.xpose.msra.mxu0 %v416
    %425 = vmatpush.bf16.xpose.msra.mxu0 %v413
    %426 = vmatmul.bf16.gmra.mxu0 %v407
    %v427 = vpop.f32.mrf.mxu0
    %v428 = vadd.f32 0.0, %v427
    %v429 = vpop.f32.mrf.mxu0
    %v430 = vadd.f32 0.0, %v429
    %431 = vmatmul.bf16.gmra.mxu0 %v410
    %v432 = vpop.f32.mrf.mxu0
    %v433 = vadd.f32 0.0, %v432
    %v434 = vpop.f32.mrf.mxu0
    %v435 = vadd.f32 0.0, %v434
    %436 = vdwg.mxu0
    %v441 = vunpack.c.l.b16 %v365
    %v442 = vunpack.c.l.b16 %v366
    %v443 = vunpack.c.l.b16 %v367
    %v444 = vunpack.c.l.b16 %v368
    %v445 = vpack.c.b16 %v442, %v441
    %v446 = vpack.c.b16 %v444, %v443
    %v451 = vunpack.c.l.b16 %v373
    %v452 = vunpack.c.l.b16 %v374
    %v453 = vunpack.c.l.b16 %v375
    %v454 = vunpack.c.l.b16 %v376
    %v455 = vpack.c.b16 %v452, %v451
    %v456 = vpack.c.b16 %v454, %v453
    %v458 = vsel %vm405, %v445, 0
    %v461 = vsel %vm405, %v446, 0
    %v464 = vsel %vm405, %v455, 0
    %v467 = vsel %vm405, %v456, 0
    %469 = vmatpush.bf16.xpose.msra.mxu0 0
    %470 = vmatpush.bf16.xpose.msra.mxu0 0
    %471 = vmatpush.bf16.xpose.msra.mxu0 0
    %472 = vmatpush.bf16.xpose.msra.mxu0 0
    %473 = vmatpush.bf16.xpose.msra.mxu0 0
    %474 = vmatpush.bf16.xpose.msra.mxu0 0
    %475 = vmatpush.bf16.xpose.msra.mxu0 %v467
    %476 = vmatpush.bf16.xpose.msra.mxu0 %v464
    %477 = vmatmul.bf16.gmra.mxu0 %v458
    %v478 = vpop.f32.mrf.mxu0
    %v479 = vadd.f32 0.0, %v478
    %v480 = vpop.f32.mrf.mxu0
    %v481 = vadd.f32 0.0, %v480
    %482 = vmatmul.bf16.gmra.mxu0 %v461
    %v483 = vpop.f32.mrf.mxu0
    %v484 = vadd.f32 0.0, %v483
    %v485 = vpop.f32.mrf.mxu0
    %v486 = vadd.f32 0.0, %v485
    %487 = vdwg.mxu0
    %vm488 = vcmask 261120
    %v489 = vsel %vm488, %v428, -inf
    %490 = vmax.xlane.f32.xlu0 %v489
    %v491 = vpop.xlane.xlu0 %490
    %v492 = vsel %vm488, %v430, -inf
    %493 = vmax.xlane.f32.xlu0 %v492
    %v494 = vpop.xlane.xlu0 %493
    %v495 = vsel %vm488, %v433, -inf
    %496 = vmax.xlane.f32.xlu0 %v495
    %v497 = vpop.xlane.xlu0 %496
    %v498 = vsel %vm488, %v435, -inf
    %499 = vmax.xlane.f32.xlu0 %v498
    %v500 = vpop.xlane.xlu0 %499
    %v501 = vsel %vm488, %v479, -inf
    %502 = vmax.xlane.f32.xlu0 %v501
    %v503 = vpop.xlane.xlu0 %502
    %v504 = vsel %vm488, %v481, -inf
    %505 = vmax.xlane.f32.xlu0 %v504
    %v506 = vpop.xlane.xlu0 %505
    %v507 = vsel %vm488, %v484, -inf
    %508 = vmax.xlane.f32.xlu0 %v507
    %v509 = vpop.xlane.xlu0 %508
    %v510 = vsel %vm488, %v486, -inf
    %511 = vmax.xlane.f32.xlu0 %v510
    %v512 = vpop.xlane.xlu0 %511
    %v513 = vsub.f32 %v428, %v491
    %v514 = vsub.f32 %v430, %v494
    %v515 = vsub.f32 %v433, %v497
    %v516 = vsub.f32 %v435, %v500
    %v517 = vsub.f32 %v479, %v503
    %v518 = vsub.f32 %v481, %v506
    %v519 = vsub.f32 %v484, %v509
    %v520 = vsub.f32 %v486, %v512
    %v521 = vmul.f32 %v513, 1.442695
    %v522 = vpow.pop %v521
    %v523 = vmul.f32 %v514, 1.442695
    %v524 = vpow.pop %v523
    %v525 = vmul.f32 %v515, 1.442695
    %v526 = vpow.pop %v525
    %v527 = vmul.f32 %v516, 1.442695
    %v528 = vpow.pop %v527
    %v529 = vmul.f32 %v517, 1.442695
    %v530 = vpow.pop %v529
    %v531 = vmul.f32 %v518, 1.442695
    %v532 = vpow.pop %v531
    %v533 = vmul.f32 %v519, 1.442695
    %v534 = vpow.pop %v533
    %v535 = vmul.f32 %v520, 1.442695
    %v536 = vpow.pop %v535
    %v537 = vsel %vm488, %v522, 0.0
    %538 = vadd.xlane.f32.xlu0 %v537
    %v539 = vpop.xlane.xlu0 %538
    %v540 = vsel %vm488, %v524, 0.0
    %541 = vadd.xlane.f32.xlu0 %v540
    %v542 = vpop.xlane.xlu0 %541
    %v543 = vsel %vm488, %v526, 0.0
    %544 = vadd.xlane.f32.xlu0 %v543
    %v545 = vpop.xlane.xlu0 %544
    %v546 = vsel %vm488, %v528, 0.0
    %547 = vadd.xlane.f32.xlu0 %v546
    %v548 = vpop.xlane.xlu0 %547
    %v549 = vsel %vm488, %v530, 0.0
    %550 = vadd.xlane.f32.xlu0 %v549
    %v551 = vpop.xlane.xlu0 %550
    %v552 = vsel %vm488, %v532, 0.0
    %553 = vadd.xlane.f32.xlu0 %v552
    %v554 = vpop.xlane.xlu0 %553
    %v555 = vsel %vm488, %v534, 0.0
    %556 = vadd.xlane.f32.xlu0 %v555
    %v557 = vpop.xlane.xlu0 %556
    %v558 = vsel %vm488, %v536, 0.0
    %559 = vadd.xlane.f32.xlu0 %v558
    %v560 = vpop.xlane.xlu0 %559
    %v561 = vrcp.pop %v539
    %v562 = vrcp.pop %v542
    %v563 = vrcp.pop %v545
    %v564 = vrcp.pop %v548
    %v565 = vrcp.pop %v551
    %v566 = vrcp.pop %v554
    %v567 = vrcp.pop %v557
    %v568 = vrcp.pop %v560
    %v569 = vmul.f32 %v522, %v561
    %v570 = vmul.f32 %v524, %v562
    %v571 = vmul.f32 %v526, %v563
    %v572 = vmul.f32 %v528, %v564
    %v573 = vmul.f32 %v530, %v565
    %v574 = vmul.f32 %v532, %v566
    %v575 = vmul.f32 %v534, %v567
    %v576 = vmul.f32 %v536, %v568
    %v577 = vpack.c.bf16 %v569, %v569
    %v578 = vpack.c.bf16 %v570, %v570
    %v579 = vpack.c.bf16 %v571, %v571
    %v580 = vpack.c.bf16 %v572, %v572
    %v581 = vpack.c.bf16 %v573, %v573
    %v582 = vpack.c.bf16 %v574, %v574
    %v583 = vpack.c.bf16 %v575, %v575
    %v584 = vpack.c.bf16 %v576, %v576
    %v589 = vunpack.c.l.b16 %v577
    %v590 = vunpack.c.l.b16 %v578
    %v591 = vunpack.c.l.b16 %v579
    %v592 = vunpack.c.l.b16 %v580
    %v593 = vpack.c.b16 %v590, %v589
    %v594 = vpack.c.b16 %v592, %v591
    %v599 = vunpack.c.l.b16 %v377
    %v600 = vunpack.c.l.b16 %v378
    %v601 = vunpack.c.l.b16 %v379
    %v602 = vunpack.c.l.b16 %v380
    %v603 = vpack.c.b16 %v600, %v599
    %v604 = vpack.c.b16 %v602, %v601
    %v608 = vsel %vm488, %v593, 0
    %v611 = vsel %vm488, %v594, 0
    %613 = vmatpush.bf16.msra.mxu0 0
    %614 = vmatpush.bf16.msra.mxu0 0
    %615 = vmatpush.bf16.msra.mxu0 0
    %616 = vmatpush.bf16.msra.mxu0 0
    %617 = vmatpush.bf16.msra.mxu0 0
    %618 = vmatpush.bf16.msra.mxu0 0
    %619 = vmatpush.bf16.msra.mxu0 %v604
    %620 = vmatpush.bf16.msra.mxu0 %v603
    %621 = vmatmul.bf16.gmra.mxu0 %v608
    %v622 = vpop.f32.mrf.mxu0
    %v623 = vadd.f32 0.0, %v622
    %v624 = vpop.f32.mrf.mxu0
    %v625 = vadd.f32 0.0, %v624
    %626 = vmatmul.bf16.gmra.mxu0 %v611
    %v627 = vpop.f32.mrf.mxu0
    %v628 = vadd.f32 0.0, %v627
    %v629 = vpop.f32.mrf.mxu0
    %v630 = vadd.f32 0.0, %v629
    %631 = vdwg.mxu0
    %v636 = vunpack.c.l.b16 %v581
    %v637 = vunpack.c.l.b16 %v582
    %v638 = vunpack.c.l.b16 %v583
    %v639 = vunpack.c.l.b16 %v584
    %v640 = vpack.c.b16 %v637, %v636
    %v641 = vpack.c.b16 %v639, %v638
    %v646 = vunpack.c.l.b16 %v381
    %v647 = vunpack.c.l.b16 %v382
    %v648 = vunpack.c.l.b16 %v383
    %v649 = vunpack.c.l.b16 %v384
    %v650 = vpack.c.b16 %v647, %v646
    %v651 = vpack.c.b16 %v649, %v648
    %v655 = vsel %vm488, %v640, 0
    %v658 = vsel %vm488, %v641, 0
    %660 = vmatpush.bf16.msra.mxu0 0
    %661 = vmatpush.bf16.msra.mxu0 0
    %662 = vmatpush.bf16.msra.mxu0 0
    %663 = vmatpush.bf16.msra.mxu0 0
    %664 = vmatpush.bf16.msra.mxu0 0
    %665 = vmatpush.bf16.msra.mxu0 0
    %666 = vmatpush.bf16.msra.mxu0 %v651
    %667 = vmatpush.bf16.msra.mxu0 %v650
    %668 = vmatmul.bf16.gmra.mxu0 %v655
    %v669 = vpop.f32.mrf.mxu0
    %v670 = vadd.f32 0.0, %v669
    %v671 = vpop.f32.mrf.mxu0
    %v672 = vadd.f32 0.0, %v671
    %673 = vmatmul.bf16.gmra.mxu0 %v658
    %v674 = vpop.f32.mrf.mxu0
    %v675 = vadd.f32 0.0, %v674
    %v676 = vpop.f32.mrf.mxu0
    %v677 = vadd.f32 0.0, %v676
    %678 = vdwg.mxu0
    %v679 = vpack.c.bf16 %v625, %v623
    %v680 = vpack.c.bf16 %v630, %v628
    %v681 = vpack.c.bf16 %v672, %v670
    %v682 = vpack.c.bf16 %v677, %v675
    %v683 = vld [vmem:[%s7] sm:$0xf]
    %v684 = vld [vmem:[%s7 + $0x4] sm:$0xf]
    %s685 = scalar_lea.vmem %s1, 64
    %v686 = vld [vmem:[%s685] sm:$0xf]
    %v687 = vld [vmem:[%s685 + $0x4] sm:$0xf]
    %v688 = vld [vmem:[%s685 + $0x8] sm:$0xf]
    %v689 = vld [vmem:[%s685 + $0xc] sm:$0xf]
    %v690 = vld [vmem:[%s685 + $0x10] sm:$0xf]
    %v691 = vld [vmem:[%s685 + $0x14] sm:$0xf]
    %v692 = vld [vmem:[%s685 + $0x18] sm:$0xf]
    %v693 = vld [vmem:[%s685 + $0x1c] sm:$0xf]
    %v694 = vld [vmem:[%s685 + $0x20] sm:$0xf]
    %v695 = vld [vmem:[%s685 + $0x24] sm:$0xf]
    %v696 = vld [vmem:[%s685 + $0x28] sm:$0xf]
    %v697 = vld [vmem:[%s685 + $0x2c] sm:$0xf]
    %v698 = vld [vmem:[%s685 + $0x30] sm:$0xf]
    %v699 = vld [vmem:[%s685 + $0x34] sm:$0xf]
    %v700 = vld [vmem:[%s685 + $0x38] sm:$0xf]
    %v701 = vld [vmem:[%s685 + $0x3c] sm:$0xf]
    %s702 = scalar_lea.vmem %s2, 1
    %v703 = vld [vmem:[%s702] sm:$0x1]
    %v705 = vperm.slane %v703, 0
    %v723 = vunpack.c.l.b16 %v686
    %v724 = vunpack.c.l.b16 %v687
    %v725 = vunpack.c.l.b16 %v688
    %v726 = vunpack.c.l.b16 %v689
    %v727 = vunpack.c.l.b16 %v690
    %v728 = vunpack.c.l.b16 %v691
    %v729 = vunpack.c.l.b16 %v692
    %v730 = vunpack.c.l.b16 %v693
    %v731 = vunpack.c.l.b16 %v694
    %v732 = vunpack.c.l.b16 %v695
    %v733 = vunpack.c.l.b16 %v696
    %v734 = vunpack.c.l.b16 %v697
    %v735 = vunpack.c.l.b16 %v698
    %v736 = vunpack.c.l.b16 %v699
    %v737 = vunpack.c.l.b16 %v700
    %v738 = vunpack.c.l.b16 %v701
    %v739 = vpack.c.b16 %v724, %v723
    %v740 = vpack.c.b16 %v726, %v725
    %v741 = vpack.c.b16 %v728, %v727
    %v742 = vpack.c.b16 %v730, %v729
    %v743 = vpack.c.b16 %v732, %v731
    %v744 = vpack.c.b16 %v734, %v733
    %v745 = vpack.c.b16 %v736, %v735
    %v746 = vpack.c.b16 %v738, %v737
    %755 = vmatpush.bf16.msra.mxu0 %v746
    %756 = vmatpush.bf16.msra.mxu0 %v745
    %757 = vmatpush.bf16.msra.mxu0 %v744
    %758 = vmatpush.bf16.msra.mxu0 %v743
    %759 = vmatpush.bf16.msra.mxu0 %v742
    %760 = vmatpush.bf16.msra.mxu0 %v741
    %761 = vmatpush.bf16.msra.mxu0 %v740
    %762 = vmatpush.bf16.msra.mxu0 %v739
    %763 = vmatmul.bf16.gmra.mxu0 %v66
    %v764 = vpop.f32.mrf.mxu0
    %v765 = vadd.f32 %v705, %v764
    %v766 = vpop.f32.mrf.mxu0
    %v767 = vadd.f32 %v705, %v766
    %768 = vmatmul.bf16.gmra.mxu0 %v67
    %v769 = vpop.f32.mrf.mxu0
    %v770 = vadd.f32 %v705, %v769
    %v771 = vpop.f32.mrf.mxu0
    %v772 = vadd.f32 %v705, %v771
    %773 = vmatmul.bf16.gmra.mxu0 %v68
    %v774 = vpop.f32.mrf.mxu0
    %v775 = vadd.f32 %v705, %v774
    %v776 = vpop.f32.mrf.mxu0
    %v777 = vadd.f32 %v705, %v776
    %778 = vmatmul.bf16.gmra.mxu0 %v69
    %v779 = vpop.f32.mrf.mxu0
    %v780 = vadd.f32 %v705, %v779
    %v781 = vpop.f32.mrf.mxu0
    %v782 = vadd.f32 %v705, %v781
    %783 = vdwg.mxu0
    %s784 = scalar_lea.vmem %s3, 64
    %v785 = vld [vmem:[%s784] sm:$0xf]
    %v786 = vld [vmem:[%s784 + $0x4] sm:$0xf]
    %v787 = vld [vmem:[%s784 + $0x8] sm:$0xf]
    %v788 = vld [vmem:[%s784 + $0xc] sm:$0xf]
    %v789 = vld [vmem:[%s784 + $0x10] sm:$0xf]
    %v790 = vld [vmem:[%s784 + $0x14] sm:$0xf]
    %v791 = vld [vmem:[%s784 + $0x18] sm:$0xf]
    %v792 = vld [vmem:[%s784 + $0x1c] sm:$0xf]
    %v793 = vld [vmem:[%s784 + $0x20] sm:$0xf]
    %v794 = vld [vmem:[%s784 + $0x24] sm:$0xf]
    %v795 = vld [vmem:[%s784 + $0x28] sm:$0xf]
    %v796 = vld [vmem:[%s784 + $0x2c] sm:$0xf]
    %v797 = vld [vmem:[%s784 + $0x30] sm:$0xf]
    %v798 = vld [vmem:[%s784 + $0x34] sm:$0xf]
    %v799 = vld [vmem:[%s784 + $0x38] sm:$0xf]
    %v800 = vld [vmem:[%s784 + $0x3c] sm:$0xf]
    %s801 = scalar_lea.vmem %s4, 1
    %v802 = vld [vmem:[%s801] sm:$0x1]
    %v804 = vperm.slane %v802, 0
    %v822 = vunpack.c.l.b16 %v785
    %v823 = vunpack.c.l.b16 %v786
    %v824 = vunpack.c.l.b16 %v787
    %v825 = vunpack.c.l.b16 %v788
    %v826 = vunpack.c.l.b16 %v789
    %v827 = vunpack.c.l.b16 %v790
    %v828 = vunpack.c.l.b16 %v791
    %v829 = vunpack.c.l.b16 %v792
    %v830 = vunpack.c.l.b16 %v793
    %v831 = vunpack.c.l.b16 %v794
    %v832 = vunpack.c.l.b16 %v795
    %v833 = vunpack.c.l.b16 %v796
    %v834 = vunpack.c.l.b16 %v797
    %v835 = vunpack.c.l.b16 %v798
    %v836 = vunpack.c.l.b16 %v799
    %v837 = vunpack.c.l.b16 %v800
    %v838 = vpack.c.b16 %v823, %v822
    %v839 = vpack.c.b16 %v825, %v824
    %v840 = vpack.c.b16 %v827, %v826
    %v841 = vpack.c.b16 %v829, %v828
    %v842 = vpack.c.b16 %v831, %v830
    %v843 = vpack.c.b16 %v833, %v832
    %v844 = vpack.c.b16 %v835, %v834
    %v845 = vpack.c.b16 %v837, %v836
    %854 = vmatpush.bf16.msra.mxu0 %v845
    %855 = vmatpush.bf16.msra.mxu0 %v844
    %856 = vmatpush.bf16.msra.mxu0 %v843
    %857 = vmatpush.bf16.msra.mxu0 %v842
    %858 = vmatpush.bf16.msra.mxu0 %v841
    %859 = vmatpush.bf16.msra.mxu0 %v840
    %860 = vmatpush.bf16.msra.mxu0 %v839
    %861 = vmatpush.bf16.msra.mxu0 %v838
    %862 = vmatmul.bf16.gmra.mxu0 %v66
    %v863 = vpop.f32.mrf.mxu0
    %v864 = vadd.f32 %v804, %v863
    %v865 = vpop.f32.mrf.mxu0
    %v866 = vadd.f32 %v804, %v865
    %867 = vmatmul.bf16.gmra.mxu0 %v67
    %v868 = vpop.f32.mrf.mxu0
    %v869 = vadd.f32 %v804, %v868
    %v870 = vpop.f32.mrf.mxu0
    %v871 = vadd.f32 %v804, %v870
    %872 = vmatmul.bf16.gmra.mxu0 %v68
    %v873 = vpop.f32.mrf.mxu0
    %v874 = vadd.f32 %v804, %v873
    %v875 = vpop.f32.mrf.mxu0
    %v876 = vadd.f32 %v804, %v875
    %877 = vmatmul.bf16.gmra.mxu0 %v69
    %v878 = vpop.f32.mrf.mxu0
    %v879 = vadd.f32 %v804, %v878
    %v880 = vpop.f32.mrf.mxu0
    %v881 = vadd.f32 %v804, %v880
    %882 = vdwg.mxu0
    %s883 = scalar_lea.vmem %s5, 64
    %v884 = vld [vmem:[%s883] sm:$0xf]
    %v885 = vld [vmem:[%s883 + $0x4] sm:$0xf]
    %v886 = vld [vmem:[%s883 + $0x8] sm:$0xf]
    %v887 = vld [vmem:[%s883 + $0xc] sm:$0xf]
    %v888 = vld [vmem:[%s883 + $0x10] sm:$0xf]
    %v889 = vld [vmem:[%s883 + $0x14] sm:$0xf]
    %v890 = vld [vmem:[%s883 + $0x18] sm:$0xf]
    %v891 = vld [vmem:[%s883 + $0x1c] sm:$0xf]
    %v892 = vld [vmem:[%s883 + $0x20] sm:$0xf]
    %v893 = vld [vmem:[%s883 + $0x24] sm:$0xf]
    %v894 = vld [vmem:[%s883 + $0x28] sm:$0xf]
    %v895 = vld [vmem:[%s883 + $0x2c] sm:$0xf]
    %v896 = vld [vmem:[%s883 + $0x30] sm:$0xf]
    %v897 = vld [vmem:[%s883 + $0x34] sm:$0xf]
    %v898 = vld [vmem:[%s883 + $0x38] sm:$0xf]
    %v899 = vld [vmem:[%s883 + $0x3c] sm:$0xf]
    %s900 = scalar_lea.vmem %s6, 1
    %v901 = vld [vmem:[%s900] sm:$0x1]
    %v903 = vperm.slane %v901, 0
    %v921 = vunpack.c.l.b16 %v884
    %v922 = vunpack.c.l.b16 %v885
    %v923 = vunpack.c.l.b16 %v886
    %v924 = vunpack.c.l.b16 %v887
    %v925 = vunpack.c.l.b16 %v888
    %v926 = vunpack.c.l.b16 %v889
    %v927 = vunpack.c.l.b16 %v890
    %v928 = vunpack.c.l.b16 %v891
    %v929 = vunpack.c.l.b16 %v892
    %v930 = vunpack.c.l.b16 %v893
    %v931 = vunpack.c.l.b16 %v894
    %v932 = vunpack.c.l.b16 %v895
    %v933 = vunpack.c.l.b16 %v896
    %v934 = vunpack.c.l.b16 %v897
    %v935 = vunpack.c.l.b16 %v898
    %v936 = vunpack.c.l.b16 %v899
    %v937 = vpack.c.b16 %v922, %v921
    %v938 = vpack.c.b16 %v924, %v923
    %v939 = vpack.c.b16 %v926, %v925
    %v940 = vpack.c.b16 %v928, %v927
    %v941 = vpack.c.b16 %v930, %v929
    %v942 = vpack.c.b16 %v932, %v931
    %v943 = vpack.c.b16 %v934, %v933
    %v944 = vpack.c.b16 %v936, %v935
    %953 = vmatpush.bf16.msra.mxu0 %v944
    %954 = vmatpush.bf16.msra.mxu0 %v943
    %955 = vmatpush.bf16.msra.mxu0 %v942
    %956 = vmatpush.bf16.msra.mxu0 %v941
    %957 = vmatpush.bf16.msra.mxu0 %v940
    %958 = vmatpush.bf16.msra.mxu0 %v939
    %959 = vmatpush.bf16.msra.mxu0 %v938
    %960 = vmatpush.bf16.msra.mxu0 %v937
    %961 = vmatmul.bf16.gmra.mxu0 %v66
    %v962 = vpop.f32.mrf.mxu0
    %v963 = vadd.f32 %v903, %v962
    %v964 = vpop.f32.mrf.mxu0
    %v965 = vadd.f32 %v903, %v964
    %966 = vmatmul.bf16.gmra.mxu0 %v67
    %v967 = vpop.f32.mrf.mxu0
    %v968 = vadd.f32 %v903, %v967
    %v969 = vpop.f32.mrf.mxu0
    %v970 = vadd.f32 %v903, %v969
    %971 = vmatmul.bf16.gmra.mxu0 %v68
    %v972 = vpop.f32.mrf.mxu0
    %v973 = vadd.f32 %v903, %v972
    %v974 = vpop.f32.mrf.mxu0
    %v975 = vadd.f32 %v903, %v974
    %976 = vmatmul.bf16.gmra.mxu0 %v69
    %v977 = vpop.f32.mrf.mxu0
    %v978 = vadd.f32 %v903, %v977
    %v979 = vpop.f32.mrf.mxu0
    %v980 = vadd.f32 %v903, %v979
    %981 = vdwg.mxu0
    %v982 = vpack.c.bf16 %v765, %v765
    %v983 = vpack.c.bf16 %v767, %v767
    %v984 = vpack.c.bf16 %v770, %v770
    %v985 = vpack.c.bf16 %v772, %v772
    %v986 = vpack.c.bf16 %v775, %v775
    %v987 = vpack.c.bf16 %v777, %v777
    %v988 = vpack.c.bf16 %v780, %v780
    %v989 = vpack.c.bf16 %v782, %v782
    %v990 = vpack.c.bf16 %v864, %v864
    %v991 = vpack.c.bf16 %v866, %v866
    %v992 = vpack.c.bf16 %v869, %v869
    %v993 = vpack.c.bf16 %v871, %v871
    %v994 = vpack.c.bf16 %v874, %v874
    %v995 = vpack.c.bf16 %v876, %v876
    %v996 = vpack.c.bf16 %v879, %v879
    %v997 = vpack.c.bf16 %v881, %v881
    %v998 = vpack.c.bf16 %v963, %v963
    %v999 = vpack.c.bf16 %v965, %v965
    %v1000 = vpack.c.bf16 %v968, %v968
    %v1001 = vpack.c.bf16 %v970, %v970
    %v1002 = vpack.c.bf16 %v973, %v973
    %v1003 = vpack.c.bf16 %v975, %v975
    %v1004 = vpack.c.bf16 %v978, %v978
    %v1005 = vpack.c.bf16 %v980, %v980
    %v1010 = vunpack.c.l.b16 %v982
    %v1011 = vunpack.c.l.b16 %v983
    %v1012 = vunpack.c.l.b16 %v984
    %v1013 = vunpack.c.l.b16 %v985
    %v1014 = vpack.c.b16 %v1011, %v1010
    %v1015 = vpack.c.b16 %v1013, %v1012
    %v1020 = vunpack.c.l.b16 %v990
    %v1021 = vunpack.c.l.b16 %v991
    %v1022 = vunpack.c.l.b16 %v992
    %v1023 = vunpack.c.l.b16 %v993
    %v1024 = vpack.c.b16 %v1021, %v1020
    %v1025 = vpack.c.b16 %v1023, %v1022
    %v1027 = vsel %vm405, %v1014, 0
    %v1030 = vsel %vm405, %v1015, 0
    %v1033 = vsel %vm405, %v1024, 0
    %v1036 = vsel %vm405, %v1025, 0
    %1038 = vmatpush.bf16.xpose.msra.mxu0 0
    %1039 = vmatpush.bf16.xpose.msra.mxu0 0
    %1040 = vmatpush.bf16.xpose.msra.mxu0 0
    %1041 = vmatpush.bf16.xpose.msra.mxu0 0
    %1042 = vmatpush.bf16.xpose.msra.mxu0 0
    %1043 = vmatpush.bf16.xpose.msra.mxu0 0
    %1044 = vmatpush.bf16.xpose.msra.mxu0 %v1036
    %1045 = vmatpush.bf16.xpose.msra.mxu0 %v1033
    %1046 = vmatmul.bf16.gmra.mxu0 %v1027
    %v1047 = vpop.f32.mrf.mxu0
    %v1048 = vadd.f32 0.0, %v1047
    %v1049 = vpop.f32.mrf.mxu0
    %v1050 = vadd.f32 0.0, %v1049
    %1051 = vmatmul.bf16.gmra.mxu0 %v1030
    %v1052 = vpop.f32.mrf.mxu0
    %v1053 = vadd.f32 0.0, %v1052
    %v1054 = vpop.f32.mrf.mxu0
    %v1055 = vadd.f32 0.0, %v1054
    %1056 = vdwg.mxu0
    %v1061 = vunpack.c.l.b16 %v986
    %v1062 = vunpack.c.l.b16 %v987
    %v1063 = vunpack.c.l.b16 %v988
    %v1064 = vunpack.c.l.b16 %v989
    %v1065 = vpack.c.b16 %v1062, %v1061
    %v1066 = vpack.c.b16 %v1064, %v1063
    %v1071 = vunpack.c.l.b16 %v994
    %v1072 = vunpack.c.l.b16 %v995
    %v1073 = vunpack.c.l.b16 %v996
    %v1074 = vunpack.c.l.b16 %v997
    %v1075 = vpack.c.b16 %v1072, %v1071
    %v1076 = vpack.c.b16 %v1074, %v1073
    %v1078 = vsel %vm405, %v1065, 0
    %v1081 = vsel %vm405, %v1066, 0
    %v1084 = vsel %vm405, %v1075, 0
    %v1087 = vsel %vm405, %v1076, 0
    %1089 = vmatpush.bf16.xpose.msra.mxu0 0
    %1090 = vmatpush.bf16.xpose.msra.mxu0 0
    %1091 = vmatpush.bf16.xpose.msra.mxu0 0
    %1092 = vmatpush.bf16.xpose.msra.mxu0 0
    %1093 = vmatpush.bf16.xpose.msra.mxu0 0
    %1094 = vmatpush.bf16.xpose.msra.mxu0 0
    %1095 = vmatpush.bf16.xpose.msra.mxu0 %v1087
    %1096 = vmatpush.bf16.xpose.msra.mxu0 %v1084
    %1097 = vmatmul.bf16.gmra.mxu0 %v1078
    %v1098 = vpop.f32.mrf.mxu0
    %v1099 = vadd.f32 0.0, %v1098
    %v1100 = vpop.f32.mrf.mxu0
    %v1101 = vadd.f32 0.0, %v1100
    %1102 = vmatmul.bf16.gmra.mxu0 %v1081
    %v1103 = vpop.f32.mrf.mxu0
    %v1104 = vadd.f32 0.0, %v1103
    %v1105 = vpop.f32.mrf.mxu0
    %v1106 = vadd.f32 0.0, %v1105
    %1107 = vdwg.mxu0
    %v1108 = vsel %vm488, %v1048, -inf
    %1109 = vmax.xlane.f32.xlu0 %v1108
    %v1110 = vpop.xlane.xlu0 %1109
    %v1111 = vsel %vm488, %v1050, -inf
    %1112 = vmax.xlane.f32.xlu0 %v1111
    %v1113 = vpop.xlane.xlu0 %1112
    %v1114 = vsel %vm488, %v1053, -inf
    %1115 = vmax.xlane.f32.xlu0 %v1114
    %v1116 = vpop.xlane.xlu0 %1115
    %v1117 = vsel %vm488, %v1055, -inf
    %1118 = vmax.xlane.f32.xlu0 %v1117
    %v1119 = vpop.xlane.xlu0 %1118
    %v1120 = vsel %vm488, %v1099, -inf
    %1121 = vmax.xlane.f32.xlu0 %v1120
    %v1122 = vpop.xlane.xlu0 %1121
    %v1123 = vsel %vm488, %v1101, -inf
    %1124 = vmax.xlane.f32.xlu0 %v1123
    %v1125 = vpop.xlane.xlu0 %1124
    %v1126 = vsel %vm488, %v1104, -inf
    %1127 = vmax.xlane.f32.xlu0 %v1126
    %v1128 = vpop.xlane.xlu0 %1127
    %v1129 = vsel %vm488, %v1106, -inf
    %1130 = vmax.xlane.f32.xlu0 %v1129
    %v1131 = vpop.xlane.xlu0 %1130
    %v1132 = vsub.f32 %v1048, %v1110
    %v1133 = vsub.f32 %v1050, %v1113
    %v1134 = vsub.f32 %v1053, %v1116
    %v1135 = vsub.f32 %v1055, %v1119
    %v1136 = vsub.f32 %v1099, %v1122
    %v1137 = vsub.f32 %v1101, %v1125
    %v1138 = vsub.f32 %v1104, %v1128
    %v1139 = vsub.f32 %v1106, %v1131
    %v1140 = vmul.f32 %v1132, 1.442695
    %v1141 = vpow.pop %v1140
    %v1142 = vmul.f32 %v1133, 1.442695
    %v1143 = vpow.pop %v1142
    %v1144 = vmul.f32 %v1134, 1.442695
    %v1145 = vpow.pop %v1144
    %v1146 = vmul.f32 %v1135, 1.442695
    %v1147 = vpow.pop %v1146
    %v1148 = vmul.f32 %v1136, 1.442695
    %v1149 = vpow.pop %v1148
    %v1150 = vmul.f32 %v1137, 1.442695
    %v1151 = vpow.pop %v1150
    %v1152 = vmul.f32 %v1138, 1.442695
    %v1153 = vpow.pop %v1152
    %v1154 = vmul.f32 %v1139, 1.442695
    %v1155 = vpow.pop %v1154
    %v1156 = vsel %vm488, %v1141, 0.0
    %1157 = vadd.xlane.f32.xlu0 %v1156
    %v1158 = vpop.xlane.xlu0 %1157
    %v1159 = vsel %vm488, %v1143, 0.0
    %1160 = vadd.xlane.f32.xlu0 %v1159
    %v1161 = vpop.xlane.xlu0 %1160
    %v1162 = vsel %vm488, %v1145, 0.0
    %1163 = vadd.xlane.f32.xlu0 %v1162
    %v1164 = vpop.xlane.xlu0 %1163
    %v1165 = vsel %vm488, %v1147, 0.0
    %1166 = vadd.xlane.f32.xlu0 %v1165
    %v1167 = vpop.xlane.xlu0 %1166
    %v1168 = vsel %vm488, %v1149, 0.0
    %1169 = vadd.xlane.f32.xlu0 %v1168
    %v1170 = vpop.xlane.xlu0 %1169
    %v1171 = vsel %vm488, %v1151, 0.0
    %1172 = vadd.xlane.f32.xlu0 %v1171
    %v1173 = vpop.xlane.xlu0 %1172
    %v1174 = vsel %vm488, %v1153, 0.0
    %1175 = vadd.xlane.f32.xlu0 %v1174
    %v1176 = vpop.xlane.xlu0 %1175
    %v1177 = vsel %vm488, %v1155, 0.0
    %1178 = vadd.xlane.f32.xlu0 %v1177
    %v1179 = vpop.xlane.xlu0 %1178
    %v1180 = vrcp.pop %v1158
    %v1181 = vrcp.pop %v1161
    %v1182 = vrcp.pop %v1164
    %v1183 = vrcp.pop %v1167
    %v1184 = vrcp.pop %v1170
    %v1185 = vrcp.pop %v1173
    %v1186 = vrcp.pop %v1176
    %v1187 = vrcp.pop %v1179
    %v1188 = vmul.f32 %v1141, %v1180
    %v1189 = vmul.f32 %v1143, %v1181
    %v1190 = vmul.f32 %v1145, %v1182
    %v1191 = vmul.f32 %v1147, %v1183
    %v1192 = vmul.f32 %v1149, %v1184
    %v1193 = vmul.f32 %v1151, %v1185
    %v1194 = vmul.f32 %v1153, %v1186
    %v1195 = vmul.f32 %v1155, %v1187
    %v1196 = vpack.c.bf16 %v1188, %v1188
    %v1197 = vpack.c.bf16 %v1189, %v1189
    %v1198 = vpack.c.bf16 %v1190, %v1190
    %v1199 = vpack.c.bf16 %v1191, %v1191
    %v1200 = vpack.c.bf16 %v1192, %v1192
    %v1201 = vpack.c.bf16 %v1193, %v1193
    %v1202 = vpack.c.bf16 %v1194, %v1194
    %v1203 = vpack.c.bf16 %v1195, %v1195
    %v1208 = vunpack.c.l.b16 %v1196
    %v1209 = vunpack.c.l.b16 %v1197
    %v1210 = vunpack.c.l.b16 %v1198
    %v1211 = vunpack.c.l.b16 %v1199
    %v1212 = vpack.c.b16 %v1209, %v1208
    %v1213 = vpack.c.b16 %v1211, %v1210
    %v1218 = vunpack.c.l.b16 %v998
    %v1219 = vunpack.c.l.b16 %v999
    %v1220 = vunpack.c.l.b16 %v1000
    %v1221 = vunpack.c.l.b16 %v1001
    %v1222 = vpack.c.b16 %v1219, %v1218
    %v1223 = vpack.c.b16 %v1221, %v1220
    %v1227 = vsel %vm488, %v1212, 0
    %v1230 = vsel %vm488, %v1213, 0
    %1232 = vmatpush.bf16.msra.mxu0 0
    %1233 = vmatpush.bf16.msra.mxu0 0
    %1234 = vmatpush.bf16.msra.mxu0 0
    %1235 = vmatpush.bf16.msra.mxu0 0
    %1236 = vmatpush.bf16.msra.mxu0 0
    %1237 = vmatpush.bf16.msra.mxu0 0
    %1238 = vmatpush.bf16.msra.mxu0 %v1223
    %1239 = vmatpush.bf16.msra.mxu0 %v1222
    %1240 = vmatmul.bf16.gmra.mxu0 %v1227
    %v1241 = vpop.f32.mrf.mxu0
    %v1242 = vadd.f32 0.0, %v1241
    %v1243 = vpop.f32.mrf.mxu0
    %v1244 = vadd.f32 0.0, %v1243
    %1245 = vmatmul.bf16.gmra.mxu0 %v1230
    %v1246 = vpop.f32.mrf.mxu0
    %v1247 = vadd.f32 0.0, %v1246
    %v1248 = vpop.f32.mrf.mxu0
    %v1249 = vadd.f32 0.0, %v1248
    %1250 = vdwg.mxu0
    %v1255 = vunpack.c.l.b16 %v1200
    %v1256 = vunpack.c.l.b16 %v1201
    %v1257 = vunpack.c.l.b16 %v1202
    %v1258 = vunpack.c.l.b16 %v1203
    %v1259 = vpack.c.b16 %v1256, %v1255
    %v1260 = vpack.c.b16 %v1258, %v1257
    %v1265 = vunpack.c.l.b16 %v1002
    %v1266 = vunpack.c.l.b16 %v1003
    %v1267 = vunpack.c.l.b16 %v1004
    %v1268 = vunpack.c.l.b16 %v1005
    %v1269 = vpack.c.b16 %v1266, %v1265
    %v1270 = vpack.c.b16 %v1268, %v1267
    %v1274 = vsel %vm488, %v1259, 0
    %v1277 = vsel %vm488, %v1260, 0
    %1279 = vmatpush.bf16.msra.mxu0 0
    %1280 = vmatpush.bf16.msra.mxu0 0
    %1281 = vmatpush.bf16.msra.mxu0 0
    %1282 = vmatpush.bf16.msra.mxu0 0
    %1283 = vmatpush.bf16.msra.mxu0 0
    %1284 = vmatpush.bf16.msra.mxu0 0
    %1285 = vmatpush.bf16.msra.mxu0 %v1270
    %1286 = vmatpush.bf16.msra.mxu0 %v1269
    %1287 = vmatmul.bf16.gmra.mxu0 %v1274
    %v1288 = vpop.f32.mrf.mxu0
    %v1289 = vadd.f32 0.0, %v1288
    %v1290 = vpop.f32.mrf.mxu0
    %v1291 = vadd.f32 0.0, %v1290
    %1292 = vmatmul.bf16.gmra.mxu0 %v1277
    %v1293 = vpop.f32.mrf.mxu0
    %v1294 = vadd.f32 0.0, %v1293
    %v1295 = vpop.f32.mrf.mxu0
    %v1296 = vadd.f32 0.0, %v1295
    %1297 = vdwg.mxu0
    %v1298 = vpack.c.bf16 %v1244, %v1242
    %v1299 = vpack.c.bf16 %v1249, %v1247
    %v1300 = vpack.c.bf16 %v1291, %v1289
    %v1301 = vpack.c.bf16 %v1296, %v1294
    %s1302 = scalar_lea.vmem %s7, 8
    %v1303 = vld [vmem:[%s1302] sm:$0xf]
    %v1304 = vld [vmem:[%s1302 + $0x4] sm:$0xf]
    %v1307 = vunpack.c.l.b16 %v1303
    %v1308 = vunpack.c.l.b16 %v1304
    %v1309 = vpack.c.b16 %v1308, %v1307
    %v1312 = vsel %vm405, %v1298, 0
    %v1315 = vsel %vm405, %v1299, 0
    %v1318 = vsel %vm405, %v1300, 0
    %v1321 = vsel %vm405, %v1301, 0
    %1323 = vmatpush.bf16.msra.mxu0 0
    %1324 = vmatpush.bf16.msra.mxu0 0
    %1325 = vmatpush.bf16.msra.mxu0 0
    %1326 = vmatpush.bf16.msra.mxu0 0
    %1327 = vmatpush.bf16.msra.mxu0 0
    %1328 = vmatpush.bf16.msra.mxu0 0
    %1329 = vmatpush.bf16.msra.mxu0 0
    %1330 = vmatpush.bf16.msra.mxu0 %v1309
    %1331 = vmatmul.bf16.gmra.mxu0 %v1312
    %v1332 = vpop.f32.mrf.mxu0
    %v1333 = vadd.f32 0.0, %v1332
    %v1334 = vpop.f32.mrf.mxu0
    %v1335 = vadd.f32 0.0, %v1334
    %1336 = vmatmul.bf16.gmra.mxu0 %v1315
    %v1337 = vpop.f32.mrf.mxu0
    %v1338 = vadd.f32 0.0, %v1337
    %v1339 = vpop.f32.mrf.mxu0
    %v1340 = vadd.f32 0.0, %v1339
    %1341 = vmatmul.bf16.gmra.mxu0 %v1318
    %v1342 = vpop.f32.mrf.mxu0
    %v1343 = vadd.f32 0.0, %v1342
    %v1344 = vpop.f32.mrf.mxu0
    %v1345 = vadd.f32 0.0, %v1344
    %1346 = vmatmul.bf16.gmra.mxu0 %v1321
    %v1347 = vpop.f32.mrf.mxu0
    %v1348 = vadd.f32 0.0, %v1347
    %v1349 = vpop.f32.mrf.mxu0
    %v1350 = vadd.f32 0.0, %v1349
    %1351 = vdwg.mxu0
    %v1354 = vunpack.c.l.b16 %v683
    %v1355 = vunpack.c.l.b16 %v684
    %v1356 = vpack.c.b16 %v1355, %v1354
    %v1359 = vsel %vm405, %v679, 0
    %v1362 = vsel %vm405, %v680, 0
    %v1365 = vsel %vm405, %v681, 0
    %v1368 = vsel %vm405, %v682, 0
    %1370 = vmatpush.bf16.msra.mxu0 0
    %1371 = vmatpush.bf16.msra.mxu0 0
    %1372 = vmatpush.bf16.msra.mxu0 0
    %1373 = vmatpush.bf16.msra.mxu0 0
    %1374 = vmatpush.bf16.msra.mxu0 0
    %1375 = vmatpush.bf16.msra.mxu0 0
    %1376 = vmatpush.bf16.msra.mxu0 0
    %1377 = vmatpush.bf16.msra.mxu0 %v1356
    %1378 = vmatmul.bf16.gmra.mxu0 %v1359
    %v1379 = vpop.f32.mrf.mxu0
    %v1380 = vadd.f32 %v1333, %v1379
    %v1381 = vpop.f32.mrf.mxu0
    %v1382 = vadd.f32 %v1335, %v1381
    %1383 = vmatmul.bf16.gmra.mxu0 %v1362
    %v1384 = vpop.f32.mrf.mxu0
    %v1385 = vadd.f32 %v1338, %v1384
    %v1386 = vpop.f32.mrf.mxu0
    %v1387 = vadd.f32 %v1340, %v1386
    %1388 = vmatmul.bf16.gmra.mxu0 %v1365
    %v1389 = vpop.f32.mrf.mxu0
    %v1390 = vadd.f32 %v1343, %v1389
    %v1391 = vpop.f32.mrf.mxu0
    %v1392 = vadd.f32 %v1345, %v1391
    %1393 = vmatmul.bf16.gmra.mxu0 %v1368
    %v1394 = vpop.f32.mrf.mxu0
    %v1395 = vadd.f32 %v1348, %v1394
    %v1396 = vpop.f32.mrf.mxu0
    %v1397 = vadd.f32 %v1350, %v1396
    %1398 = vdwg.mxu0
    %s1399 = scalar_lea.vmem %s1, 128
    %v1400 = vld [vmem:[%s1399] sm:$0xf]
    %v1401 = vld [vmem:[%s1399 + $0x4] sm:$0xf]
    %v1402 = vld [vmem:[%s1399 + $0x8] sm:$0xf]
    %v1403 = vld [vmem:[%s1399 + $0xc] sm:$0xf]
    %v1404 = vld [vmem:[%s1399 + $0x10] sm:$0xf]
    %v1405 = vld [vmem:[%s1399 + $0x14] sm:$0xf]
    %v1406 = vld [vmem:[%s1399 + $0x18] sm:$0xf]
    %v1407 = vld [vmem:[%s1399 + $0x1c] sm:$0xf]
    %v1408 = vld [vmem:[%s1399 + $0x20] sm:$0xf]
    %v1409 = vld [vmem:[%s1399 + $0x24] sm:$0xf]
    %v1410 = vld [vmem:[%s1399 + $0x28] sm:$0xf]
    %v1411 = vld [vmem:[%s1399 + $0x2c] sm:$0xf]
    %v1412 = vld [vmem:[%s1399 + $0x30] sm:$0xf]
    %v1413 = vld [vmem:[%s1399 + $0x34] sm:$0xf]
    %v1414 = vld [vmem:[%s1399 + $0x38] sm:$0xf]
    %v1415 = vld [vmem:[%s1399 + $0x3c] sm:$0xf]
    %s1416 = scalar_lea.vmem %s2, 2
    %v1417 = vld [vmem:[%s1416] sm:$0x1]
    %v1419 = vperm.slane %v1417, 0
    %v1437 = vunpack.c.l.b16 %v1400
    %v1438 = vunpack.c.l.b16 %v1401
    %v1439 = vunpack.c.l.b16 %v1402
    %v1440 = vunpack.c.l.b16 %v1403
    %v1441 = vunpack.c.l.b16 %v1404
    %v1442 = vunpack.c.l.b16 %v1405
    %v1443 = vunpack.c.l.b16 %v1406
    %v1444 = vunpack.c.l.b16 %v1407
    %v1445 = vunpack.c.l.b16 %v1408
    %v1446 = vunpack.c.l.b16 %v1409
    %v1447 = vunpack.c.l.b16 %v1410
    %v1448 = vunpack.c.l.b16 %v1411
    %v1449 = vunpack.c.l.b16 %v1412
    %v1450 = vunpack.c.l.b16 %v1413
    %v1451 = vunpack.c.l.b16 %v1414
    %v1452 = vunpack.c.l.b16 %v1415
    %v1453 = vpack.c.b16 %v1438, %v1437
    %v1454 = vpack.c.b16 %v1440, %v1439
    %v1455 = vpack.c.b16 %v1442, %v1441
    %v1456 = vpack.c.b16 %v1444, %v1443
    %v1457 = vpack.c.b16 %v1446, %v1445
    %v1458 = vpack.c.b16 %v1448, %v1447
    %v1459 = vpack.c.b16 %v1450, %v1449
    %v1460 = vpack.c.b16 %v1452, %v1451
    %1469 = vmatpush.bf16.msra.mxu0 %v1460
    %1470 = vmatpush.bf16.msra.mxu0 %v1459
    %1471 = vmatpush.bf16.msra.mxu0 %v1458
    %1472 = vmatpush.bf16.msra.mxu0 %v1457
    %1473 = vmatpush.bf16.msra.mxu0 %v1456
    %1474 = vmatpush.bf16.msra.mxu0 %v1455
    %1475 = vmatpush.bf16.msra.mxu0 %v1454
    %1476 = vmatpush.bf16.msra.mxu0 %v1453
    %1477 = vmatmul.bf16.gmra.mxu0 %v66
    %v1478 = vpop.f32.mrf.mxu0
    %v1479 = vadd.f32 %v1419, %v1478
    %v1480 = vpop.f32.mrf.mxu0
    %v1481 = vadd.f32 %v1419, %v1480
    %1482 = vmatmul.bf16.gmra.mxu0 %v67
    %v1483 = vpop.f32.mrf.mxu0
    %v1484 = vadd.f32 %v1419, %v1483
    %v1485 = vpop.f32.mrf.mxu0
    %v1486 = vadd.f32 %v1419, %v1485
    %1487 = vmatmul.bf16.gmra.mxu0 %v68
    %v1488 = vpop.f32.mrf.mxu0
    %v1489 = vadd.f32 %v1419, %v1488
    %v1490 = vpop.f32.mrf.mxu0
    %v1491 = vadd.f32 %v1419, %v1490
    %1492 = vmatmul.bf16.gmra.mxu0 %v69
    %v1493 = vpop.f32.mrf.mxu0
    %v1494 = vadd.f32 %v1419, %v1493
    %v1495 = vpop.f32.mrf.mxu0
    %v1496 = vadd.f32 %v1419, %v1495
    %1497 = vdwg.mxu0
    %s1498 = scalar_lea.vmem %s3, 128
    %v1499 = vld [vmem:[%s1498] sm:$0xf]
    %v1500 = vld [vmem:[%s1498 + $0x4] sm:$0xf]
    %v1501 = vld [vmem:[%s1498 + $0x8] sm:$0xf]
    %v1502 = vld [vmem:[%s1498 + $0xc] sm:$0xf]
    %v1503 = vld [vmem:[%s1498 + $0x10] sm:$0xf]
    %v1504 = vld [vmem:[%s1498 + $0x14] sm:$0xf]
    %v1505 = vld [vmem:[%s1498 + $0x18] sm:$0xf]
    %v1506 = vld [vmem:[%s1498 + $0x1c] sm:$0xf]
    %v1507 = vld [vmem:[%s1498 + $0x20] sm:$0xf]
    %v1508 = vld [vmem:[%s1498 + $0x24] sm:$0xf]
    %v1509 = vld [vmem:[%s1498 + $0x28] sm:$0xf]
    %v1510 = vld [vmem:[%s1498 + $0x2c] sm:$0xf]
    %v1511 = vld [vmem:[%s1498 + $0x30] sm:$0xf]
    %v1512 = vld [vmem:[%s1498 + $0x34] sm:$0xf]
    %v1513 = vld [vmem:[%s1498 + $0x38] sm:$0xf]
    %v1514 = vld [vmem:[%s1498 + $0x3c] sm:$0xf]
    %s1515 = scalar_lea.vmem %s4, 2
    %v1516 = vld [vmem:[%s1515] sm:$0x1]
    %v1518 = vperm.slane %v1516, 0
    %v1536 = vunpack.c.l.b16 %v1499
    %v1537 = vunpack.c.l.b16 %v1500
    %v1538 = vunpack.c.l.b16 %v1501
    %v1539 = vunpack.c.l.b16 %v1502
    %v1540 = vunpack.c.l.b16 %v1503
    %v1541 = vunpack.c.l.b16 %v1504
    %v1542 = vunpack.c.l.b16 %v1505
    %v1543 = vunpack.c.l.b16 %v1506
    %v1544 = vunpack.c.l.b16 %v1507
    %v1545 = vunpack.c.l.b16 %v1508
    %v1546 = vunpack.c.l.b16 %v1509
    %v1547 = vunpack.c.l.b16 %v1510
    %v1548 = vunpack.c.l.b16 %v1511
    %v1549 = vunpack.c.l.b16 %v1512
    %v1550 = vunpack.c.l.b16 %v1513
    %v1551 = vunpack.c.l.b16 %v1514
    %v1552 = vpack.c.b16 %v1537, %v1536
    %v1553 = vpack.c.b16 %v1539, %v1538
    %v1554 = vpack.c.b16 %v1541, %v1540
    %v1555 = vpack.c.b16 %v1543, %v1542
    %v1556 = vpack.c.b16 %v1545, %v1544
    %v1557 = vpack.c.b16 %v1547, %v1546
    %v1558 = vpack.c.b16 %v1549, %v1548
    %v1559 = vpack.c.b16 %v1551, %v1550
    %1568 = vmatpush.bf16.msra.mxu0 %v1559
    %1569 = vmatpush.bf16.msra.mxu0 %v1558
    %1570 = vmatpush.bf16.msra.mxu0 %v1557
    %1571 = vmatpush.bf16.msra.mxu0 %v1556
    %1572 = vmatpush.bf16.msra.mxu0 %v1555
    %1573 = vmatpush.bf16.msra.mxu0 %v1554
    %1574 = vmatpush.bf16.msra.mxu0 %v1553
    %1575 = vmatpush.bf16.msra.mxu0 %v1552
    %1576 = vmatmul.bf16.gmra.mxu0 %v66
    %v1577 = vpop.f32.mrf.mxu0
    %v1578 = vadd.f32 %v1518, %v1577
    %v1579 = vpop.f32.mrf.mxu0
    %v1580 = vadd.f32 %v1518, %v1579
    %1581 = vmatmul.bf16.gmra.mxu0 %v67
    %v1582 = vpop.f32.mrf.mxu0
    %v1583 = vadd.f32 %v1518, %v1582
    %v1584 = vpop.f32.mrf.mxu0
    %v1585 = vadd.f32 %v1518, %v1584
    %1586 = vmatmul.bf16.gmra.mxu0 %v68
    %v1587 = vpop.f32.mrf.mxu0
    %v1588 = vadd.f32 %v1518, %v1587
    %v1589 = vpop.f32.mrf.mxu0
    %v1590 = vadd.f32 %v1518, %v1589
    %1591 = vmatmul.bf16.gmra.mxu0 %v69
    %v1592 = vpop.f32.mrf.mxu0
    %v1593 = vadd.f32 %v1518, %v1592
    %v1594 = vpop.f32.mrf.mxu0
    %v1595 = vadd.f32 %v1518, %v1594
    %1596 = vdwg.mxu0
    %s1597 = scalar_lea.vmem %s5, 128
    %v1598 = vld [vmem:[%s1597] sm:$0xf]
    %v1599 = vld [vmem:[%s1597 + $0x4] sm:$0xf]
    %v1600 = vld [vmem:[%s1597 + $0x8] sm:$0xf]
    %v1601 = vld [vmem:[%s1597 + $0xc] sm:$0xf]
    %v1602 = vld [vmem:[%s1597 + $0x10] sm:$0xf]
    %v1603 = vld [vmem:[%s1597 + $0x14] sm:$0xf]
    %v1604 = vld [vmem:[%s1597 + $0x18] sm:$0xf]
    %v1605 = vld [vmem:[%s1597 + $0x1c] sm:$0xf]
    %v1606 = vld [vmem:[%s1597 + $0x20] sm:$0xf]
    %v1607 = vld [vmem:[%s1597 + $0x24] sm:$0xf]
    %v1608 = vld [vmem:[%s1597 + $0x28] sm:$0xf]
    %v1609 = vld [vmem:[%s1597 + $0x2c] sm:$0xf]
    %v1610 = vld [vmem:[%s1597 + $0x30] sm:$0xf]
    %v1611 = vld [vmem:[%s1597 + $0x34] sm:$0xf]
    %v1612 = vld [vmem:[%s1597 + $0x38] sm:$0xf]
    %v1613 = vld [vmem:[%s1597 + $0x3c] sm:$0xf]
    %s1614 = scalar_lea.vmem %s6, 2
    %v1615 = vld [vmem:[%s1614] sm:$0x1]
    %v1617 = vperm.slane %v1615, 0
    %v1635 = vunpack.c.l.b16 %v1598
    %v1636 = vunpack.c.l.b16 %v1599
    %v1637 = vunpack.c.l.b16 %v1600
    %v1638 = vunpack.c.l.b16 %v1601
    %v1639 = vunpack.c.l.b16 %v1602
    %v1640 = vunpack.c.l.b16 %v1603
    %v1641 = vunpack.c.l.b16 %v1604
    %v1642 = vunpack.c.l.b16 %v1605
    %v1643 = vunpack.c.l.b16 %v1606
    %v1644 = vunpack.c.l.b16 %v1607
    %v1645 = vunpack.c.l.b16 %v1608
    %v1646 = vunpack.c.l.b16 %v1609
    %v1647 = vunpack.c.l.b16 %v1610
    %v1648 = vunpack.c.l.b16 %v1611
    %v1649 = vunpack.c.l.b16 %v1612
    %v1650 = vunpack.c.l.b16 %v1613
    %v1651 = vpack.c.b16 %v1636, %v1635
    %v1652 = vpack.c.b16 %v1638, %v1637
    %v1653 = vpack.c.b16 %v1640, %v1639
    %v1654 = vpack.c.b16 %v1642, %v1641
    %v1655 = vpack.c.b16 %v1644, %v1643
    %v1656 = vpack.c.b16 %v1646, %v1645
    %v1657 = vpack.c.b16 %v1648, %v1647
    %v1658 = vpack.c.b16 %v1650, %v1649
    %1667 = vmatpush.bf16.msra.mxu0 %v1658
    %1668 = vmatpush.bf16.msra.mxu0 %v1657
    %1669 = vmatpush.bf16.msra.mxu0 %v1656
    %1670 = vmatpush.bf16.msra.mxu0 %v1655
    %1671 = vmatpush.bf16.msra.mxu0 %v1654
    %1672 = vmatpush.bf16.msra.mxu0 %v1653
    %1673 = vmatpush.bf16.msra.mxu0 %v1652
    %1674 = vmatpush.bf16.msra.mxu0 %v1651
    %1675 = vmatmul.bf16.gmra.mxu0 %v66
    %v1676 = vpop.f32.mrf.mxu0
    %v1677 = vadd.f32 %v1617, %v1676
    %v1678 = vpop.f32.mrf.mxu0
    %v1679 = vadd.f32 %v1617, %v1678
    %1680 = vmatmul.bf16.gmra.mxu0 %v67
    %v1681 = vpop.f32.mrf.mxu0
    %v1682 = vadd.f32 %v1617, %v1681
    %v1683 = vpop.f32.mrf.mxu0
    %v1684 = vadd.f32 %v1617, %v1683
    %1685 = vmatmul.bf16.gmra.mxu0 %v68
    %v1686 = vpop.f32.mrf.mxu0
    %v1687 = vadd.f32 %v1617, %v1686
    %v1688 = vpop.f32.mrf.mxu0
    %v1689 = vadd.f32 %v1617, %v1688
    %1690 = vmatmul.bf16.gmra.mxu0 %v69
    %v1691 = vpop.f32.mrf.mxu0
    %v1692 = vadd.f32 %v1617, %v1691
    %v1693 = vpop.f32.mrf.mxu0
    %v1694 = vadd.f32 %v1617, %v1693
    %1695 = vdwg.mxu0
    %v1696 = vpack.c.bf16 %v1479, %v1479
    %v1697 = vpack.c.bf16 %v1481, %v1481
    %v1698 = vpack.c.bf16 %v1484, %v1484
    %v1699 = vpack.c.bf16 %v1486, %v1486
    %v1700 = vpack.c.bf16 %v1489, %v1489
    %v1701 = vpack.c.bf16 %v1491, %v1491
    %v1702 = vpack.c.bf16 %v1494, %v1494
    %v1703 = vpack.c.bf16 %v1496, %v1496
    %v1704 = vpack.c.bf16 %v1578, %v1578
    %v1705 = vpack.c.bf16 %v1580, %v1580
    %v1706 = vpack.c.bf16 %v1583, %v1583
    %v1707 = vpack.c.bf16 %v1585, %v1585
    %v1708 = vpack.c.bf16 %v1588, %v1588
    %v1709 = vpack.c.bf16 %v1590, %v1590
    %v1710 = vpack.c.bf16 %v1593, %v1593
    %v1711 = vpack.c.bf16 %v1595, %v1595
    %v1712 = vpack.c.bf16 %v1677, %v1677
    %v1713 = vpack.c.bf16 %v1679, %v1679
    %v1714 = vpack.c.bf16 %v1682, %v1682
    %v1715 = vpack.c.bf16 %v1684, %v1684
    %v1716 = vpack.c.bf16 %v1687, %v1687
    %v1717 = vpack.c.bf16 %v1689, %v1689
    %v1718 = vpack.c.bf16 %v1692, %v1692
    %v1719 = vpack.c.bf16 %v1694, %v1694
    %v1724 = vunpack.c.l.b16 %v1696
    %v1725 = vunpack.c.l.b16 %v1697
    %v1726 = vunpack.c.l.b16 %v1698
    %v1727 = vunpack.c.l.b16 %v1699
    %v1728 = vpack.c.b16 %v1725, %v1724
    %v1729 = vpack.c.b16 %v1727, %v1726
    %v1734 = vunpack.c.l.b16 %v1704
    %v1735 = vunpack.c.l.b16 %v1705
    %v1736 = vunpack.c.l.b16 %v1706
    %v1737 = vunpack.c.l.b16 %v1707
    %v1738 = vpack.c.b16 %v1735, %v1734
    %v1739 = vpack.c.b16 %v1737, %v1736
    %v1741 = vsel %vm405, %v1728, 0
    %v1744 = vsel %vm405, %v1729, 0
    %v1747 = vsel %vm405, %v1738, 0
    %v1750 = vsel %vm405, %v1739, 0
    %1752 = vmatpush.bf16.xpose.msra.mxu0 0
    %1753 = vmatpush.bf16.xpose.msra.mxu0 0
    %1754 = vmatpush.bf16.xpose.msra.mxu0 0
    %1755 = vmatpush.bf16.xpose.msra.mxu0 0
    %1756 = vmatpush.bf16.xpose.msra.mxu0 0
    %1757 = vmatpush.bf16.xpose.msra.mxu0 0
    %1758 = vmatpush.bf16.xpose.msra.mxu0 %v1750
    %1759 = vmatpush.bf16.xpose.msra.mxu0 %v1747
    %1760 = vmatmul.bf16.gmra.mxu0 %v1741
    %v1761 = vpop.f32.mrf.mxu0
    %v1762 = vadd.f32 0.0, %v1761
    %v1763 = vpop.f32.mrf.mxu0
    %v1764 = vadd.f32 0.0, %v1763
    %1765 = vmatmul.bf16.gmra.mxu0 %v1744
    %v1766 = vpop.f32.mrf.mxu0
    %v1767 = vadd.f32 0.0, %v1766
    %v1768 = vpop.f32.mrf.mxu0
    %v1769 = vadd.f32 0.0, %v1768
    %1770 = vdwg.mxu0
    %v1775 = vunpack.c.l.b16 %v1700
    %v1776 = vunpack.c.l.b16 %v1701
    %v1777 = vunpack.c.l.b16 %v1702
    %v1778 = vunpack.c.l.b16 %v1703
    %v1779 = vpack.c.b16 %v1776, %v1775
    %v1780 = vpack.c.b16 %v1778, %v1777
    %v1785 = vunpack.c.l.b16 %v1708
    %v1786 = vunpack.c.l.b16 %v1709
    %v1787 = vunpack.c.l.b16 %v1710
    %v1788 = vunpack.c.l.b16 %v1711
    %v1789 = vpack.c.b16 %v1786, %v1785
    %v1790 = vpack.c.b16 %v1788, %v1787
    %v1792 = vsel %vm405, %v1779, 0
    %v1795 = vsel %vm405, %v1780, 0
    %v1798 = vsel %vm405, %v1789, 0
    %v1801 = vsel %vm405, %v1790, 0
    %1803 = vmatpush.bf16.xpose.msra.mxu0 0
    %1804 = vmatpush.bf16.xpose.msra.mxu0 0
    %1805 = vmatpush.bf16.xpose.msra.mxu0 0
    %1806 = vmatpush.bf16.xpose.msra.mxu0 0
    %1807 = vmatpush.bf16.xpose.msra.mxu0 0
    %1808 = vmatpush.bf16.xpose.msra.mxu0 0
    %1809 = vmatpush.bf16.xpose.msra.mxu0 %v1801
    %1810 = vmatpush.bf16.xpose.msra.mxu0 %v1798
    %1811 = vmatmul.bf16.gmra.mxu0 %v1792
    %v1812 = vpop.f32.mrf.mxu0
    %v1813 = vadd.f32 0.0, %v1812
    %v1814 = vpop.f32.mrf.mxu0
    %v1815 = vadd.f32 0.0, %v1814
    %1816 = vmatmul.bf16.gmra.mxu0 %v1795
    %v1817 = vpop.f32.mrf.mxu0
    %v1818 = vadd.f32 0.0, %v1817
    %v1819 = vpop.f32.mrf.mxu0
    %v1820 = vadd.f32 0.0, %v1819
    %1821 = vdwg.mxu0
    %v1822 = vsel %vm488, %v1762, -inf
    %1823 = vmax.xlane.f32.xlu0 %v1822
    %v1824 = vpop.xlane.xlu0 %1823
    %v1825 = vsel %vm488, %v1764, -inf
    %1826 = vmax.xlane.f32.xlu0 %v1825
    %v1827 = vpop.xlane.xlu0 %1826
    %v1828 = vsel %vm488, %v1767, -inf
    %1829 = vmax.xlane.f32.xlu0 %v1828
    %v1830 = vpop.xlane.xlu0 %1829
    %v1831 = vsel %vm488, %v1769, -inf
    %1832 = vmax.xlane.f32.xlu0 %v1831
    %v1833 = vpop.xlane.xlu0 %1832
    %v1834 = vsel %vm488, %v1813, -inf
    %1835 = vmax.xlane.f32.xlu0 %v1834
    %v1836 = vpop.xlane.xlu0 %1835
    %v1837 = vsel %vm488, %v1815, -inf
    %1838 = vmax.xlane.f32.xlu0 %v1837
    %v1839 = vpop.xlane.xlu0 %1838
    %v1840 = vsel %vm488, %v1818, -inf
    %1841 = vmax.xlane.f32.xlu0 %v1840
    %v1842 = vpop.xlane.xlu0 %1841
    %v1843 = vsel %vm488, %v1820, -inf
    %1844 = vmax.xlane.f32.xlu0 %v1843
    %v1845 = vpop.xlane.xlu0 %1844
    %v1846 = vsub.f32 %v1762, %v1824
    %v1847 = vsub.f32 %v1764, %v1827
    %v1848 = vsub.f32 %v1767, %v1830
    %v1849 = vsub.f32 %v1769, %v1833
    %v1850 = vsub.f32 %v1813, %v1836
    %v1851 = vsub.f32 %v1815, %v1839
    %v1852 = vsub.f32 %v1818, %v1842
    %v1853 = vsub.f32 %v1820, %v1845
    %v1854 = vmul.f32 %v1846, 1.442695
    %v1855 = vpow.pop %v1854
    %v1856 = vmul.f32 %v1847, 1.442695
    %v1857 = vpow.pop %v1856
    %v1858 = vmul.f32 %v1848, 1.442695
    %v1859 = vpow.pop %v1858
    %v1860 = vmul.f32 %v1849, 1.442695
    %v1861 = vpow.pop %v1860
    %v1862 = vmul.f32 %v1850, 1.442695
    %v1863 = vpow.pop %v1862
    %v1864 = vmul.f32 %v1851, 1.442695
    %v1865 = vpow.pop %v1864
    %v1866 = vmul.f32 %v1852, 1.442695
    %v1867 = vpow.pop %v1866
    %v1868 = vmul.f32 %v1853, 1.442695
    %v1869 = vpow.pop %v1868
    %v1870 = vsel %vm488, %v1855, 0.0
    %1871 = vadd.xlane.f32.xlu0 %v1870
    %v1872 = vpop.xlane.xlu0 %1871
    %v1873 = vsel %vm488, %v1857, 0.0
    %1874 = vadd.xlane.f32.xlu0 %v1873
    %v1875 = vpop.xlane.xlu0 %1874
    %v1876 = vsel %vm488, %v1859, 0.0
    %1877 = vadd.xlane.f32.xlu0 %v1876
    %v1878 = vpop.xlane.xlu0 %1877
    %v1879 = vsel %vm488, %v1861, 0.0
    %1880 = vadd.xlane.f32.xlu0 %v1879
    %v1881 = vpop.xlane.xlu0 %1880
    %v1882 = vsel %vm488, %v1863, 0.0
    %1883 = vadd.xlane.f32.xlu0 %v1882
    %v1884 = vpop.xlane.xlu0 %1883
    %v1885 = vsel %vm488, %v1865, 0.0
    %1886 = vadd.xlane.f32.xlu0 %v1885
    %v1887 = vpop.xlane.xlu0 %1886
    %v1888 = vsel %vm488, %v1867, 0.0
    %1889 = vadd.xlane.f32.xlu0 %v1888
    %v1890 = vpop.xlane.xlu0 %1889
    %v1891 = vsel %vm488, %v1869, 0.0
    %1892 = vadd.xlane.f32.xlu0 %v1891
    %v1893 = vpop.xlane.xlu0 %1892
    %v1894 = vrcp.pop %v1872
    %v1895 = vrcp.pop %v1875
    %v1896 = vrcp.pop %v1878
    %v1897 = vrcp.pop %v1881
    %v1898 = vrcp.pop %v1884
    %v1899 = vrcp.pop %v1887
    %v1900 = vrcp.pop %v1890
    %v1901 = vrcp.pop %v1893
    %v1902 = vmul.f32 %v1855, %v1894
    %v1903 = vmul.f32 %v1857, %v1895
    %v1904 = vmul.f32 %v1859, %v1896
    %v1905 = vmul.f32 %v1861, %v1897
    %v1906 = vmul.f32 %v1863, %v1898
    %v1907 = vmul.f32 %v1865, %v1899
    %v1908 = vmul.f32 %v1867, %v1900
    %v1909 = vmul.f32 %v1869, %v1901
    %v1910 = vpack.c.bf16 %v1902, %v1902
    %v1911 = vpack.c.bf16 %v1903, %v1903
    %v1912 = vpack.c.bf16 %v1904, %v1904
    %v1913 = vpack.c.bf16 %v1905, %v1905
    %v1914 = vpack.c.bf16 %v1906, %v1906
    %v1915 = vpack.c.bf16 %v1907, %v1907
    %v1916 = vpack.c.bf16 %v1908, %v1908
    %v1917 = vpack.c.bf16 %v1909, %v1909
    %v1922 = vunpack.c.l.b16 %v1910
    %v1923 = vunpack.c.l.b16 %v1911
    %v1924 = vunpack.c.l.b16 %v1912
    %v1925 = vunpack.c.l.b16 %v1913
    %v1926 = vpack.c.b16 %v1923, %v1922
    %v1927 = vpack.c.b16 %v1925, %v1924
    %v1932 = vunpack.c.l.b16 %v1712
    %v1933 = vunpack.c.l.b16 %v1713
    %v1934 = vunpack.c.l.b16 %v1714
    %v1935 = vunpack.c.l.b16 %v1715
    %v1936 = vpack.c.b16 %v1933, %v1932
    %v1937 = vpack.c.b16 %v1935, %v1934
    %v1941 = vsel %vm488, %v1926, 0
    %v1944 = vsel %vm488, %v1927, 0
    %1946 = vmatpush.bf16.msra.mxu0 0
    %1947 = vmatpush.bf16.msra.mxu0 0
    %1948 = vmatpush.bf16.msra.mxu0 0
    %1949 = vmatpush.bf16.msra.mxu0 0
    %1950 = vmatpush.bf16.msra.mxu0 0
    %1951 = vmatpush.bf16.msra.mxu0 0
    %1952 = vmatpush.bf16.msra.mxu0 %v1937
    %1953 = vmatpush.bf16.msra.mxu0 %v1936
    %1954 = vmatmul.bf16.gmra.mxu0 %v1941
    %v1955 = vpop.f32.mrf.mxu0
    %v1956 = vadd.f32 0.0, %v1955
    %v1957 = vpop.f32.mrf.mxu0
    %v1958 = vadd.f32 0.0, %v1957
    %1959 = vmatmul.bf16.gmra.mxu0 %v1944
    %v1960 = vpop.f32.mrf.mxu0
    %v1961 = vadd.f32 0.0, %v1960
    %v1962 = vpop.f32.mrf.mxu0
    %v1963 = vadd.f32 0.0, %v1962
    %1964 = vdwg.mxu0
    %v1969 = vunpack.c.l.b16 %v1914
    %v1970 = vunpack.c.l.b16 %v1915
    %v1971 = vunpack.c.l.b16 %v1916
    %v1972 = vunpack.c.l.b16 %v1917
    %v1973 = vpack.c.b16 %v1970, %v1969
    %v1974 = vpack.c.b16 %v1972, %v1971
    %v1979 = vunpack.c.l.b16 %v1716
    %v1980 = vunpack.c.l.b16 %v1717
    %v1981 = vunpack.c.l.b16 %v1718
    %v1982 = vunpack.c.l.b16 %v1719
    %v1983 = vpack.c.b16 %v1980, %v1979
    %v1984 = vpack.c.b16 %v1982, %v1981
    %v1988 = vsel %vm488, %v1973, 0
    %v1991 = vsel %vm488, %v1974, 0
    %1993 = vmatpush.bf16.msra.mxu0 0
    %1994 = vmatpush.bf16.msra.mxu0 0
    %1995 = vmatpush.bf16.msra.mxu0 0
    %1996 = vmatpush.bf16.msra.mxu0 0
    %1997 = vmatpush.bf16.msra.mxu0 0
    %1998 = vmatpush.bf16.msra.mxu0 0
    %1999 = vmatpush.bf16.msra.mxu0 %v1984
    %2000 = vmatpush.bf16.msra.mxu0 %v1983
    %2001 = vmatmul.bf16.gmra.mxu0 %v1988
    %v2002 = vpop.f32.mrf.mxu0
    %v2003 = vadd.f32 0.0, %v2002
    %v2004 = vpop.f32.mrf.mxu0
    %v2005 = vadd.f32 0.0, %v2004
    %2006 = vmatmul.bf16.gmra.mxu0 %v1991
    %v2007 = vpop.f32.mrf.mxu0
    %v2008 = vadd.f32 0.0, %v2007
    %v2009 = vpop.f32.mrf.mxu0
    %v2010 = vadd.f32 0.0, %v2009
    %2011 = vdwg.mxu0
    %v2012 = vpack.c.bf16 %v1958, %v1956
    %v2013 = vpack.c.bf16 %v1963, %v1961
    %v2014 = vpack.c.bf16 %v2005, %v2003
    %v2015 = vpack.c.bf16 %v2010, %v2008
    %s2016 = scalar_lea.vmem %s7, 16
    %v2017 = vld [vmem:[%s2016] sm:$0xf]
    %v2018 = vld [vmem:[%s2016 + $0x4] sm:$0xf]
    %v2021 = vunpack.c.l.b16 %v2017
    %v2022 = vunpack.c.l.b16 %v2018
    %v2023 = vpack.c.b16 %v2022, %v2021
    %v2026 = vsel %vm405, %v2012, 0
    %v2029 = vsel %vm405, %v2013, 0
    %v2032 = vsel %vm405, %v2014, 0
    %v2035 = vsel %vm405, %v2015, 0
    %2037 = vmatpush.bf16.msra.mxu0 0
    %2038 = vmatpush.bf16.msra.mxu0 0
    %2039 = vmatpush.bf16.msra.mxu0 0
    %2040 = vmatpush.bf16.msra.mxu0 0
    %2041 = vmatpush.bf16.msra.mxu0 0
    %2042 = vmatpush.bf16.msra.mxu0 0
    %2043 = vmatpush.bf16.msra.mxu0 0
    %2044 = vmatpush.bf16.msra.mxu0 %v2023
    %2045 = vmatmul.bf16.gmra.mxu0 %v2026
    %v2046 = vpop.f32.mrf.mxu0
    %v2047 = vadd.f32 0.0, %v2046
    %v2048 = vpop.f32.mrf.mxu0
    %v2049 = vadd.f32 0.0, %v2048
    %2050 = vmatmul.bf16.gmra.mxu0 %v2029
    %v2051 = vpop.f32.mrf.mxu0
    %v2052 = vadd.f32 0.0, %v2051
    %v2053 = vpop.f32.mrf.mxu0
    %v2054 = vadd.f32 0.0, %v2053
    %2055 = vmatmul.bf16.gmra.mxu0 %v2032
    %v2056 = vpop.f32.mrf.mxu0
    %v2057 = vadd.f32 0.0, %v2056
    %v2058 = vpop.f32.mrf.mxu0
    %v2059 = vadd.f32 0.0, %v2058
    %2060 = vmatmul.bf16.gmra.mxu0 %v2035
    %v2061 = vpop.f32.mrf.mxu0
    %v2062 = vadd.f32 0.0, %v2061
    %v2063 = vpop.f32.mrf.mxu0
    %v2064 = vadd.f32 0.0, %v2063
    %2065 = vdwg.mxu0
    %v2066 = vadd.f32 %v1380, %v2047
    %v2067 = vadd.f32 %v1382, %v2049
    %v2068 = vadd.f32 %v1385, %v2052
    %v2069 = vadd.f32 %v1387, %v2054
    %v2070 = vadd.f32 %v1390, %v2057
    %v2071 = vadd.f32 %v1392, %v2059
    %v2072 = vadd.f32 %v1395, %v2062
    %v2073 = vadd.f32 %v1397, %v2064
    %s2074 = scalar_lea.vmem %s1, 192
    %v2075 = vld [vmem:[%s2074] sm:$0xf]
    %v2076 = vld [vmem:[%s2074 + $0x4] sm:$0xf]
    %v2077 = vld [vmem:[%s2074 + $0x8] sm:$0xf]
    %v2078 = vld [vmem:[%s2074 + $0xc] sm:$0xf]
    %v2079 = vld [vmem:[%s2074 + $0x10] sm:$0xf]
    %v2080 = vld [vmem:[%s2074 + $0x14] sm:$0xf]
    %v2081 = vld [vmem:[%s2074 + $0x18] sm:$0xf]
    %v2082 = vld [vmem:[%s2074 + $0x1c] sm:$0xf]
    %v2083 = vld [vmem:[%s2074 + $0x20] sm:$0xf]
    %v2084 = vld [vmem:[%s2074 + $0x24] sm:$0xf]
    %v2085 = vld [vmem:[%s2074 + $0x28] sm:$0xf]
    %v2086 = vld [vmem:[%s2074 + $0x2c] sm:$0xf]
    %v2087 = vld [vmem:[%s2074 + $0x30] sm:$0xf]
    %v2088 = vld [vmem:[%s2074 + $0x34] sm:$0xf]
    %v2089 = vld [vmem:[%s2074 + $0x38] sm:$0xf]
    %v2090 = vld [vmem:[%s2074 + $0x3c] sm:$0xf]
    %s2091 = scalar_lea.vmem %s2, 3
    %v2092 = vld [vmem:[%s2091] sm:$0x1]
    %v2094 = vperm.slane %v2092, 0
    %v2112 = vunpack.c.l.b16 %v2075
    %v2113 = vunpack.c.l.b16 %v2076
    %v2114 = vunpack.c.l.b16 %v2077
    %v2115 = vunpack.c.l.b16 %v2078
    %v2116 = vunpack.c.l.b16 %v2079
    %v2117 = vunpack.c.l.b16 %v2080
    %v2118 = vunpack.c.l.b16 %v2081
    %v2119 = vunpack.c.l.b16 %v2082
    %v2120 = vunpack.c.l.b16 %v2083
    %v2121 = vunpack.c.l.b16 %v2084
    %v2122 = vunpack.c.l.b16 %v2085
    %v2123 = vunpack.c.l.b16 %v2086
    %v2124 = vunpack.c.l.b16 %v2087
    %v2125 = vunpack.c.l.b16 %v2088
    %v2126 = vunpack.c.l.b16 %v2089
    %v2127 = vunpack.c.l.b16 %v2090
    %v2128 = vpack.c.b16 %v2113, %v2112
    %v2129 = vpack.c.b16 %v2115, %v2114
    %v2130 = vpack.c.b16 %v2117, %v2116
    %v2131 = vpack.c.b16 %v2119, %v2118
    %v2132 = vpack.c.b16 %v2121, %v2120
    %v2133 = vpack.c.b16 %v2123, %v2122
    %v2134 = vpack.c.b16 %v2125, %v2124
    %v2135 = vpack.c.b16 %v2127, %v2126
    %2144 = vmatpush.bf16.msra.mxu0 %v2135
    %2145 = vmatpush.bf16.msra.mxu0 %v2134
    %2146 = vmatpush.bf16.msra.mxu0 %v2133
    %2147 = vmatpush.bf16.msra.mxu0 %v2132
    %2148 = vmatpush.bf16.msra.mxu0 %v2131
    %2149 = vmatpush.bf16.msra.mxu0 %v2130
    %2150 = vmatpush.bf16.msra.mxu0 %v2129
    %2151 = vmatpush.bf16.msra.mxu0 %v2128
    %2152 = vmatmul.bf16.gmra.mxu0 %v66
    %v2153 = vpop.f32.mrf.mxu0
    %v2154 = vadd.f32 %v2094, %v2153
    %v2155 = vpop.f32.mrf.mxu0
    %v2156 = vadd.f32 %v2094, %v2155
    %2157 = vmatmul.bf16.gmra.mxu0 %v67
    %v2158 = vpop.f32.mrf.mxu0
    %v2159 = vadd.f32 %v2094, %v2158
    %v2160 = vpop.f32.mrf.mxu0
    %v2161 = vadd.f32 %v2094, %v2160
    %2162 = vmatmul.bf16.gmra.mxu0 %v68
    %v2163 = vpop.f32.mrf.mxu0
    %v2164 = vadd.f32 %v2094, %v2163
    %v2165 = vpop.f32.mrf.mxu0
    %v2166 = vadd.f32 %v2094, %v2165
    %2167 = vmatmul.bf16.gmra.mxu0 %v69
    %v2168 = vpop.f32.mrf.mxu0
    %v2169 = vadd.f32 %v2094, %v2168
    %v2170 = vpop.f32.mrf.mxu0
    %v2171 = vadd.f32 %v2094, %v2170
    %2172 = vdwg.mxu0
    %s2173 = scalar_lea.vmem %s3, 192
    %v2174 = vld [vmem:[%s2173] sm:$0xf]
    %v2175 = vld [vmem:[%s2173 + $0x4] sm:$0xf]
    %v2176 = vld [vmem:[%s2173 + $0x8] sm:$0xf]
    %v2177 = vld [vmem:[%s2173 + $0xc] sm:$0xf]
    %v2178 = vld [vmem:[%s2173 + $0x10] sm:$0xf]
    %v2179 = vld [vmem:[%s2173 + $0x14] sm:$0xf]
    %v2180 = vld [vmem:[%s2173 + $0x18] sm:$0xf]
    %v2181 = vld [vmem:[%s2173 + $0x1c] sm:$0xf]
    %v2182 = vld [vmem:[%s2173 + $0x20] sm:$0xf]
    %v2183 = vld [vmem:[%s2173 + $0x24] sm:$0xf]
    %v2184 = vld [vmem:[%s2173 + $0x28] sm:$0xf]
    %v2185 = vld [vmem:[%s2173 + $0x2c] sm:$0xf]
    %v2186 = vld [vmem:[%s2173 + $0x30] sm:$0xf]
    %v2187 = vld [vmem:[%s2173 + $0x34] sm:$0xf]
    %v2188 = vld [vmem:[%s2173 + $0x38] sm:$0xf]
    %v2189 = vld [vmem:[%s2173 + $0x3c] sm:$0xf]
    %s2190 = scalar_lea.vmem %s4, 3
    %v2191 = vld [vmem:[%s2190] sm:$0x1]
    %v2193 = vperm.slane %v2191, 0
    %v2211 = vunpack.c.l.b16 %v2174
    %v2212 = vunpack.c.l.b16 %v2175
    %v2213 = vunpack.c.l.b16 %v2176
    %v2214 = vunpack.c.l.b16 %v2177
    %v2215 = vunpack.c.l.b16 %v2178
    %v2216 = vunpack.c.l.b16 %v2179
    %v2217 = vunpack.c.l.b16 %v2180
    %v2218 = vunpack.c.l.b16 %v2181
    %v2219 = vunpack.c.l.b16 %v2182
    %v2220 = vunpack.c.l.b16 %v2183
    %v2221 = vunpack.c.l.b16 %v2184
    %v2222 = vunpack.c.l.b16 %v2185
    %v2223 = vunpack.c.l.b16 %v2186
    %v2224 = vunpack.c.l.b16 %v2187
    %v2225 = vunpack.c.l.b16 %v2188
    %v2226 = vunpack.c.l.b16 %v2189
    %v2227 = vpack.c.b16 %v2212, %v2211
    %v2228 = vpack.c.b16 %v2214, %v2213
    %v2229 = vpack.c.b16 %v2216, %v2215
    %v2230 = vpack.c.b16 %v2218, %v2217
    %v2231 = vpack.c.b16 %v2220, %v2219
    %v2232 = vpack.c.b16 %v2222, %v2221
    %v2233 = vpack.c.b16 %v2224, %v2223
    %v2234 = vpack.c.b16 %v2226, %v2225
    %2243 = vmatpush.bf16.msra.mxu0 %v2234
    %2244 = vmatpush.bf16.msra.mxu0 %v2233
    %2245 = vmatpush.bf16.msra.mxu0 %v2232
    %2246 = vmatpush.bf16.msra.mxu0 %v2231
    %2247 = vmatpush.bf16.msra.mxu0 %v2230
    %2248 = vmatpush.bf16.msra.mxu0 %v2229
    %2249 = vmatpush.bf16.msra.mxu0 %v2228
    %2250 = vmatpush.bf16.msra.mxu0 %v2227
    %2251 = vmatmul.bf16.gmra.mxu0 %v66
    %v2252 = vpop.f32.mrf.mxu0
    %v2253 = vadd.f32 %v2193, %v2252
    %v2254 = vpop.f32.mrf.mxu0
    %v2255 = vadd.f32 %v2193, %v2254
    %2256 = vmatmul.bf16.gmra.mxu0 %v67
    %v2257 = vpop.f32.mrf.mxu0
    %v2258 = vadd.f32 %v2193, %v2257
    %v2259 = vpop.f32.mrf.mxu0
    %v2260 = vadd.f32 %v2193, %v2259
    %2261 = vmatmul.bf16.gmra.mxu0 %v68
    %v2262 = vpop.f32.mrf.mxu0
    %v2263 = vadd.f32 %v2193, %v2262
    %v2264 = vpop.f32.mrf.mxu0
    %v2265 = vadd.f32 %v2193, %v2264
    %2266 = vmatmul.bf16.gmra.mxu0 %v69
    %v2267 = vpop.f32.mrf.mxu0
    %v2268 = vadd.f32 %v2193, %v2267
    %v2269 = vpop.f32.mrf.mxu0
    %v2270 = vadd.f32 %v2193, %v2269
    %2271 = vdwg.mxu0
    %s2272 = scalar_lea.vmem %s5, 192
    %v2273 = vld [vmem:[%s2272] sm:$0xf]
    %v2274 = vld [vmem:[%s2272 + $0x4] sm:$0xf]
    %v2275 = vld [vmem:[%s2272 + $0x8] sm:$0xf]
    %v2276 = vld [vmem:[%s2272 + $0xc] sm:$0xf]
    %v2277 = vld [vmem:[%s2272 + $0x10] sm:$0xf]
    %v2278 = vld [vmem:[%s2272 + $0x14] sm:$0xf]
    %v2279 = vld [vmem:[%s2272 + $0x18] sm:$0xf]
    %v2280 = vld [vmem:[%s2272 + $0x1c] sm:$0xf]
    %v2281 = vld [vmem:[%s2272 + $0x20] sm:$0xf]
    %v2282 = vld [vmem:[%s2272 + $0x24] sm:$0xf]
    %v2283 = vld [vmem:[%s2272 + $0x28] sm:$0xf]
    %v2284 = vld [vmem:[%s2272 + $0x2c] sm:$0xf]
    %v2285 = vld [vmem:[%s2272 + $0x30] sm:$0xf]
    %v2286 = vld [vmem:[%s2272 + $0x34] sm:$0xf]
    %v2287 = vld [vmem:[%s2272 + $0x38] sm:$0xf]
    %v2288 = vld [vmem:[%s2272 + $0x3c] sm:$0xf]
    %s2289 = scalar_lea.vmem %s6, 3
    %v2290 = vld [vmem:[%s2289] sm:$0x1]
    %v2292 = vperm.slane %v2290, 0
    %v2310 = vunpack.c.l.b16 %v2273
    %v2311 = vunpack.c.l.b16 %v2274
    %v2312 = vunpack.c.l.b16 %v2275
    %v2313 = vunpack.c.l.b16 %v2276
    %v2314 = vunpack.c.l.b16 %v2277
    %v2315 = vunpack.c.l.b16 %v2278
    %v2316 = vunpack.c.l.b16 %v2279
    %v2317 = vunpack.c.l.b16 %v2280
    %v2318 = vunpack.c.l.b16 %v2281
    %v2319 = vunpack.c.l.b16 %v2282
    %v2320 = vunpack.c.l.b16 %v2283
    %v2321 = vunpack.c.l.b16 %v2284
    %v2322 = vunpack.c.l.b16 %v2285
    %v2323 = vunpack.c.l.b16 %v2286
    %v2324 = vunpack.c.l.b16 %v2287
    %v2325 = vunpack.c.l.b16 %v2288
    %v2326 = vpack.c.b16 %v2311, %v2310
    %v2327 = vpack.c.b16 %v2313, %v2312
    %v2328 = vpack.c.b16 %v2315, %v2314
    %v2329 = vpack.c.b16 %v2317, %v2316
    %v2330 = vpack.c.b16 %v2319, %v2318
    %v2331 = vpack.c.b16 %v2321, %v2320
    %v2332 = vpack.c.b16 %v2323, %v2322
    %v2333 = vpack.c.b16 %v2325, %v2324
    %2342 = vmatpush.bf16.msra.mxu0 %v2333
    %2343 = vmatpush.bf16.msra.mxu0 %v2332
    %2344 = vmatpush.bf16.msra.mxu0 %v2331
    %2345 = vmatpush.bf16.msra.mxu0 %v2330
    %2346 = vmatpush.bf16.msra.mxu0 %v2329
    %2347 = vmatpush.bf16.msra.mxu0 %v2328
    %2348 = vmatpush.bf16.msra.mxu0 %v2327
    %2349 = vmatpush.bf16.msra.mxu0 %v2326
    %2350 = vmatmul.bf16.gmra.mxu0 %v66
    %v2351 = vpop.f32.mrf.mxu0
    %v2352 = vadd.f32 %v2292, %v2351
    %v2353 = vpop.f32.mrf.mxu0
    %v2354 = vadd.f32 %v2292, %v2353
    %2355 = vmatmul.bf16.gmra.mxu0 %v67
    %v2356 = vpop.f32.mrf.mxu0
    %v2357 = vadd.f32 %v2292, %v2356
    %v2358 = vpop.f32.mrf.mxu0
    %v2359 = vadd.f32 %v2292, %v2358
    %2360 = vmatmul.bf16.gmra.mxu0 %v68
    %v2361 = vpop.f32.mrf.mxu0
    %v2362 = vadd.f32 %v2292, %v2361
    %v2363 = vpop.f32.mrf.mxu0
    %v2364 = vadd.f32 %v2292, %v2363
    %2365 = vmatmul.bf16.gmra.mxu0 %v69
    %v2366 = vpop.f32.mrf.mxu0
    %v2367 = vadd.f32 %v2292, %v2366
    %v2368 = vpop.f32.mrf.mxu0
    %v2369 = vadd.f32 %v2292, %v2368
    %2370 = vdwg.mxu0
    %v2371 = vpack.c.bf16 %v2154, %v2154
    %v2372 = vpack.c.bf16 %v2156, %v2156
    %v2373 = vpack.c.bf16 %v2159, %v2159
    %v2374 = vpack.c.bf16 %v2161, %v2161
    %v2375 = vpack.c.bf16 %v2164, %v2164
    %v2376 = vpack.c.bf16 %v2166, %v2166
    %v2377 = vpack.c.bf16 %v2169, %v2169
    %v2378 = vpack.c.bf16 %v2171, %v2171
    %v2379 = vpack.c.bf16 %v2253, %v2253
    %v2380 = vpack.c.bf16 %v2255, %v2255
    %v2381 = vpack.c.bf16 %v2258, %v2258
    %v2382 = vpack.c.bf16 %v2260, %v2260
    %v2383 = vpack.c.bf16 %v2263, %v2263
    %v2384 = vpack.c.bf16 %v2265, %v2265
    %v2385 = vpack.c.bf16 %v2268, %v2268
    %v2386 = vpack.c.bf16 %v2270, %v2270
    %v2387 = vpack.c.bf16 %v2352, %v2352
    %v2388 = vpack.c.bf16 %v2354, %v2354
    %v2389 = vpack.c.bf16 %v2357, %v2357
    %v2390 = vpack.c.bf16 %v2359, %v2359
    %v2391 = vpack.c.bf16 %v2362, %v2362
    %v2392 = vpack.c.bf16 %v2364, %v2364
    %v2393 = vpack.c.bf16 %v2367, %v2367
    %v2394 = vpack.c.bf16 %v2369, %v2369
    %v2399 = vunpack.c.l.b16 %v2371
    %v2400 = vunpack.c.l.b16 %v2372
    %v2401 = vunpack.c.l.b16 %v2373
    %v2402 = vunpack.c.l.b16 %v2374
    %v2403 = vpack.c.b16 %v2400, %v2399
    %v2404 = vpack.c.b16 %v2402, %v2401
    %v2409 = vunpack.c.l.b16 %v2379
    %v2410 = vunpack.c.l.b16 %v2380
    %v2411 = vunpack.c.l.b16 %v2381
    %v2412 = vunpack.c.l.b16 %v2382
    %v2413 = vpack.c.b16 %v2410, %v2409
    %v2414 = vpack.c.b16 %v2412, %v2411
    %v2416 = vsel %vm405, %v2403, 0
    %v2419 = vsel %vm405, %v2404, 0
    %v2422 = vsel %vm405, %v2413, 0
    %v2425 = vsel %vm405, %v2414, 0
    %2427 = vmatpush.bf16.xpose.msra.mxu0 0
    %2428 = vmatpush.bf16.xpose.msra.mxu0 0
    %2429 = vmatpush.bf16.xpose.msra.mxu0 0
    %2430 = vmatpush.bf16.xpose.msra.mxu0 0
    %2431 = vmatpush.bf16.xpose.msra.mxu0 0
    %2432 = vmatpush.bf16.xpose.msra.mxu0 0
    %2433 = vmatpush.bf16.xpose.msra.mxu0 %v2425
    %2434 = vmatpush.bf16.xpose.msra.mxu0 %v2422
    %2435 = vmatmul.bf16.gmra.mxu0 %v2416
    %v2436 = vpop.f32.mrf.mxu0
    %v2437 = vadd.f32 0.0, %v2436
    %v2438 = vpop.f32.mrf.mxu0
    %v2439 = vadd.f32 0.0, %v2438
    %2440 = vmatmul.bf16.gmra.mxu0 %v2419
    %v2441 = vpop.f32.mrf.mxu0
    %v2442 = vadd.f32 0.0, %v2441
    %v2443 = vpop.f32.mrf.mxu0
    %v2444 = vadd.f32 0.0, %v2443
    %2445 = vdwg.mxu0
    %v2450 = vunpack.c.l.b16 %v2375
    %v2451 = vunpack.c.l.b16 %v2376
    %v2452 = vunpack.c.l.b16 %v2377
    %v2453 = vunpack.c.l.b16 %v2378
    %v2454 = vpack.c.b16 %v2451, %v2450
    %v2455 = vpack.c.b16 %v2453, %v2452
    %v2460 = vunpack.c.l.b16 %v2383
    %v2461 = vunpack.c.l.b16 %v2384
    %v2462 = vunpack.c.l.b16 %v2385
    %v2463 = vunpack.c.l.b16 %v2386
    %v2464 = vpack.c.b16 %v2461, %v2460
    %v2465 = vpack.c.b16 %v2463, %v2462
    %v2467 = vsel %vm405, %v2454, 0
    %v2470 = vsel %vm405, %v2455, 0
    %v2473 = vsel %vm405, %v2464, 0
    %v2476 = vsel %vm405, %v2465, 0
    %2478 = vmatpush.bf16.xpose.msra.mxu0 0
    %2479 = vmatpush.bf16.xpose.msra.mxu0 0
    %2480 = vmatpush.bf16.xpose.msra.mxu0 0
    %2481 = vmatpush.bf16.xpose.msra.mxu0 0
    %2482 = vmatpush.bf16.xpose.msra.mxu0 0
    %2483 = vmatpush.bf16.xpose.msra.mxu0 0
    %2484 = vmatpush.bf16.xpose.msra.mxu0 %v2476
    %2485 = vmatpush.bf16.xpose.msra.mxu0 %v2473
    %2486 = vmatmul.bf16.gmra.mxu0 %v2467
    %v2487 = vpop.f32.mrf.mxu0
    %v2488 = vadd.f32 0.0, %v2487
    %v2489 = vpop.f32.mrf.mxu0
    %v2490 = vadd.f32 0.0, %v2489
    %2491 = vmatmul.bf16.gmra.mxu0 %v2470
    %v2492 = vpop.f32.mrf.mxu0
    %v2493 = vadd.f32 0.0, %v2492
    %v2494 = vpop.f32.mrf.mxu0
    %v2495 = vadd.f32 0.0, %v2494
    %2496 = vdwg.mxu0
    %v2497 = vsel %vm488, %v2437, -inf
    %2498 = vmax.xlane.f32.xlu0 %v2497
    %v2499 = vpop.xlane.xlu0 %2498
    %v2500 = vsel %vm488, %v2439, -inf
    %2501 = vmax.xlane.f32.xlu0 %v2500
    %v2502 = vpop.xlane.xlu0 %2501
    %v2503 = vsel %vm488, %v2442, -inf
    %2504 = vmax.xlane.f32.xlu0 %v2503
    %v2505 = vpop.xlane.xlu0 %2504
    %v2506 = vsel %vm488, %v2444, -inf
    %2507 = vmax.xlane.f32.xlu0 %v2506
    %v2508 = vpop.xlane.xlu0 %2507
    %v2509 = vsel %vm488, %v2488, -inf
    %2510 = vmax.xlane.f32.xlu0 %v2509
    %v2511 = vpop.xlane.xlu0 %2510
    %v2512 = vsel %vm488, %v2490, -inf
    %2513 = vmax.xlane.f32.xlu0 %v2512
    %v2514 = vpop.xlane.xlu0 %2513
    %v2515 = vsel %vm488, %v2493, -inf
    %2516 = vmax.xlane.f32.xlu0 %v2515
    %v2517 = vpop.xlane.xlu0 %2516
    %v2518 = vsel %vm488, %v2495, -inf
    %2519 = vmax.xlane.f32.xlu0 %v2518
    %v2520 = vpop.xlane.xlu0 %2519
    %v2521 = vsub.f32 %v2437, %v2499
    %v2522 = vsub.f32 %v2439, %v2502
    %v2523 = vsub.f32 %v2442, %v2505
    %v2524 = vsub.f32 %v2444, %v2508
    %v2525 = vsub.f32 %v2488, %v2511
    %v2526 = vsub.f32 %v2490, %v2514
    %v2527 = vsub.f32 %v2493, %v2517
    %v2528 = vsub.f32 %v2495, %v2520
    %v2529 = vmul.f32 %v2521, 1.442695
    %v2530 = vpow.pop %v2529
    %v2531 = vmul.f32 %v2522, 1.442695
    %v2532 = vpow.pop %v2531
    %v2533 = vmul.f32 %v2523, 1.442695
    %v2534 = vpow.pop %v2533
    %v2535 = vmul.f32 %v2524, 1.442695
    %v2536 = vpow.pop %v2535
    %v2537 = vmul.f32 %v2525, 1.442695
    %v2538 = vpow.pop %v2537
    %v2539 = vmul.f32 %v2526, 1.442695
    %v2540 = vpow.pop %v2539
    %v2541 = vmul.f32 %v2527, 1.442695
    %v2542 = vpow.pop %v2541
    %v2543 = vmul.f32 %v2528, 1.442695
    %v2544 = vpow.pop %v2543
    %v2545 = vsel %vm488, %v2530, 0.0
    %2546 = vadd.xlane.f32.xlu0 %v2545
    %v2547 = vpop.xlane.xlu0 %2546
    %v2548 = vsel %vm488, %v2532, 0.0
    %2549 = vadd.xlane.f32.xlu0 %v2548
    %v2550 = vpop.xlane.xlu0 %2549
    %v2551 = vsel %vm488, %v2534, 0.0
    %2552 = vadd.xlane.f32.xlu0 %v2551
    %v2553 = vpop.xlane.xlu0 %2552
    %v2554 = vsel %vm488, %v2536, 0.0
    %2555 = vadd.xlane.f32.xlu0 %v2554
    %v2556 = vpop.xlane.xlu0 %2555
    %v2557 = vsel %vm488, %v2538, 0.0
    %2558 = vadd.xlane.f32.xlu0 %v2557
    %v2559 = vpop.xlane.xlu0 %2558
    %v2560 = vsel %vm488, %v2540, 0.0
    %2561 = vadd.xlane.f32.xlu0 %v2560
    %v2562 = vpop.xlane.xlu0 %2561
    %v2563 = vsel %vm488, %v2542, 0.0
    %2564 = vadd.xlane.f32.xlu0 %v2563
    %v2565 = vpop.xlane.xlu0 %2564
    %v2566 = vsel %vm488, %v2544, 0.0
    %2567 = vadd.xlane.f32.xlu0 %v2566
    %v2568 = vpop.xlane.xlu0 %2567
    %v2569 = vrcp.pop %v2547
    %v2570 = vrcp.pop %v2550
    %v2571 = vrcp.pop %v2553
    %v2572 = vrcp.pop %v2556
    %v2573 = vrcp.pop %v2559
    %v2574 = vrcp.pop %v2562
    %v2575 = vrcp.pop %v2565
    %v2576 = vrcp.pop %v2568
    %v2577 = vmul.f32 %v2530, %v2569
    %v2578 = vmul.f32 %v2532, %v2570
    %v2579 = vmul.f32 %v2534, %v2571
    %v2580 = vmul.f32 %v2536, %v2572
    %v2581 = vmul.f32 %v2538, %v2573
    %v2582 = vmul.f32 %v2540, %v2574
    %v2583 = vmul.f32 %v2542, %v2575
    %v2584 = vmul.f32 %v2544, %v2576
    %v2585 = vpack.c.bf16 %v2577, %v2577
    %v2586 = vpack.c.bf16 %v2578, %v2578
    %v2587 = vpack.c.bf16 %v2579, %v2579
    %v2588 = vpack.c.bf16 %v2580, %v2580
    %v2589 = vpack.c.bf16 %v2581, %v2581
    %v2590 = vpack.c.bf16 %v2582, %v2582
    %v2591 = vpack.c.bf16 %v2583, %v2583
    %v2592 = vpack.c.bf16 %v2584, %v2584
    %v2597 = vunpack.c.l.b16 %v2585
    %v2598 = vunpack.c.l.b16 %v2586
    %v2599 = vunpack.c.l.b16 %v2587
    %v2600 = vunpack.c.l.b16 %v2588
    %v2601 = vpack.c.b16 %v2598, %v2597
    %v2602 = vpack.c.b16 %v2600, %v2599
    %v2607 = vunpack.c.l.b16 %v2387
    %v2608 = vunpack.c.l.b16 %v2388
    %v2609 = vunpack.c.l.b16 %v2389
    %v2610 = vunpack.c.l.b16 %v2390
    %v2611 = vpack.c.b16 %v2608, %v2607
    %v2612 = vpack.c.b16 %v2610, %v2609
    %v2616 = vsel %vm488, %v2601, 0
    %v2619 = vsel %vm488, %v2602, 0
    %2621 = vmatpush.bf16.msra.mxu0 0
    %2622 = vmatpush.bf16.msra.mxu0 0
    %2623 = vmatpush.bf16.msra.mxu0 0
    %2624 = vmatpush.bf16.msra.mxu0 0
    %2625 = vmatpush.bf16.msra.mxu0 0
    %2626 = vmatpush.bf16.msra.mxu0 0
    %2627 = vmatpush.bf16.msra.mxu0 %v2612
    %2628 = vmatpush.bf16.msra.mxu0 %v2611
    %2629 = vmatmul.bf16.gmra.mxu0 %v2616
    %v2630 = vpop.f32.mrf.mxu0
    %v2631 = vadd.f32 0.0, %v2630
    %v2632 = vpop.f32.mrf.mxu0
    %v2633 = vadd.f32 0.0, %v2632
    %2634 = vmatmul.bf16.gmra.mxu0 %v2619
    %v2635 = vpop.f32.mrf.mxu0
    %v2636 = vadd.f32 0.0, %v2635
    %v2637 = vpop.f32.mrf.mxu0
    %v2638 = vadd.f32 0.0, %v2637
    %2639 = vdwg.mxu0
    %v2644 = vunpack.c.l.b16 %v2589
    %v2645 = vunpack.c.l.b16 %v2590
    %v2646 = vunpack.c.l.b16 %v2591
    %v2647 = vunpack.c.l.b16 %v2592
    %v2648 = vpack.c.b16 %v2645, %v2644
    %v2649 = vpack.c.b16 %v2647, %v2646
    %v2654 = vunpack.c.l.b16 %v2391
    %v2655 = vunpack.c.l.b16 %v2392
    %v2656 = vunpack.c.l.b16 %v2393
    %v2657 = vunpack.c.l.b16 %v2394
    %v2658 = vpack.c.b16 %v2655, %v2654
    %v2659 = vpack.c.b16 %v2657, %v2656
    %v2663 = vsel %vm488, %v2648, 0
    %v2666 = vsel %vm488, %v2649, 0
    %2668 = vmatpush.bf16.msra.mxu0 0
    %2669 = vmatpush.bf16.msra.mxu0 0
    %2670 = vmatpush.bf16.msra.mxu0 0
    %2671 = vmatpush.bf16.msra.mxu0 0
    %2672 = vmatpush.bf16.msra.mxu0 0
    %2673 = vmatpush.bf16.msra.mxu0 0
    %2674 = vmatpush.bf16.msra.mxu0 %v2659
    %2675 = vmatpush.bf16.msra.mxu0 %v2658
    %2676 = vmatmul.bf16.gmra.mxu0 %v2663
    %v2677 = vpop.f32.mrf.mxu0
    %v2678 = vadd.f32 0.0, %v2677
    %v2679 = vpop.f32.mrf.mxu0
    %v2680 = vadd.f32 0.0, %v2679
    %2681 = vmatmul.bf16.gmra.mxu0 %v2666
    %v2682 = vpop.f32.mrf.mxu0
    %v2683 = vadd.f32 0.0, %v2682
    %v2684 = vpop.f32.mrf.mxu0
    %v2685 = vadd.f32 0.0, %v2684
    %2686 = vdwg.mxu0
    %v2687 = vpack.c.bf16 %v2633, %v2631
    %v2688 = vpack.c.bf16 %v2638, %v2636
    %v2689 = vpack.c.bf16 %v2680, %v2678
    %v2690 = vpack.c.bf16 %v2685, %v2683
    %s2691 = scalar_lea.vmem %s7, 24
    %v2692 = vld [vmem:[%s2691] sm:$0xf]
    %v2693 = vld [vmem:[%s2691 + $0x4] sm:$0xf]
    %v2696 = vunpack.c.l.b16 %v2692
    %v2697 = vunpack.c.l.b16 %v2693
    %v2698 = vpack.c.b16 %v2697, %v2696
    %v2701 = vsel %vm405, %v2687, 0
    %v2704 = vsel %vm405, %v2688, 0
    %v2707 = vsel %vm405, %v2689, 0
    %v2710 = vsel %vm405, %v2690, 0
    %2712 = vmatpush.bf16.msra.mxu0 0
    %2713 = vmatpush.bf16.msra.mxu0 0
    %2714 = vmatpush.bf16.msra.mxu0 0
    %2715 = vmatpush.bf16.msra.mxu0 0
    %2716 = vmatpush.bf16.msra.mxu0 0
    %2717 = vmatpush.bf16.msra.mxu0 0
    %2718 = vmatpush.bf16.msra.mxu0 0
    %2719 = vmatpush.bf16.msra.mxu0 %v2698
    %2720 = vmatmul.bf16.gmra.mxu0 %v2701
    %v2721 = vpop.f32.mrf.mxu0
    %v2722 = vadd.f32 0.0, %v2721
    %v2723 = vpop.f32.mrf.mxu0
    %v2724 = vadd.f32 0.0, %v2723
    %2725 = vmatmul.bf16.gmra.mxu0 %v2704
    %v2726 = vpop.f32.mrf.mxu0
    %v2727 = vadd.f32 0.0, %v2726
    %v2728 = vpop.f32.mrf.mxu0
    %v2729 = vadd.f32 0.0, %v2728
    %2730 = vmatmul.bf16.gmra.mxu0 %v2707
    %v2731 = vpop.f32.mrf.mxu0
    %v2732 = vadd.f32 0.0, %v2731
    %v2733 = vpop.f32.mrf.mxu0
    %v2734 = vadd.f32 0.0, %v2733
    %2735 = vmatmul.bf16.gmra.mxu0 %v2710
    %v2736 = vpop.f32.mrf.mxu0
    %v2737 = vadd.f32 0.0, %v2736
    %v2738 = vpop.f32.mrf.mxu0
    %v2739 = vadd.f32 0.0, %v2738
    %2740 = vdwg.mxu0
    %v2741 = vadd.f32 %v2066, %v2722
    %v2742 = vadd.f32 %v2067, %v2724
    %v2743 = vadd.f32 %v2068, %v2727
    %v2744 = vadd.f32 %v2069, %v2729
    %v2745 = vadd.f32 %v2070, %v2732
    %v2746 = vadd.f32 %v2071, %v2734
    %v2747 = vadd.f32 %v2072, %v2737
    %v2748 = vadd.f32 %v2073, %v2739
    %s2749 = scalar_lea.vmem %s1, 256
    %v2750 = vld [vmem:[%s2749] sm:$0xf]
    %v2751 = vld [vmem:[%s2749 + $0x4] sm:$0xf]
    %v2752 = vld [vmem:[%s2749 + $0x8] sm:$0xf]
    %v2753 = vld [vmem:[%s2749 + $0xc] sm:$0xf]
    %v2754 = vld [vmem:[%s2749 + $0x10] sm:$0xf]
    %v2755 = vld [vmem:[%s2749 + $0x14] sm:$0xf]
    %v2756 = vld [vmem:[%s2749 + $0x18] sm:$0xf]
    %v2757 = vld [vmem:[%s2749 + $0x1c] sm:$0xf]
    %v2758 = vld [vmem:[%s2749 + $0x20] sm:$0xf]
    %v2759 = vld [vmem:[%s2749 + $0x24] sm:$0xf]
    %v2760 = vld [vmem:[%s2749 + $0x28] sm:$0xf]
    %v2761 = vld [vmem:[%s2749 + $0x2c] sm:$0xf]
    %v2762 = vld [vmem:[%s2749 + $0x30] sm:$0xf]
    %v2763 = vld [vmem:[%s2749 + $0x34] sm:$0xf]
    %v2764 = vld [vmem:[%s2749 + $0x38] sm:$0xf]
    %v2765 = vld [vmem:[%s2749 + $0x3c] sm:$0xf]
    %s2766 = scalar_lea.vmem %s2, 4
    %v2767 = vld [vmem:[%s2766] sm:$0x1]
    %v2769 = vperm.slane %v2767, 0
    %v2787 = vunpack.c.l.b16 %v2750
    %v2788 = vunpack.c.l.b16 %v2751
    %v2789 = vunpack.c.l.b16 %v2752
    %v2790 = vunpack.c.l.b16 %v2753
    %v2791 = vunpack.c.l.b16 %v2754
    %v2792 = vunpack.c.l.b16 %v2755
    %v2793 = vunpack.c.l.b16 %v2756
    %v2794 = vunpack.c.l.b16 %v2757
    %v2795 = vunpack.c.l.b16 %v2758
    %v2796 = vunpack.c.l.b16 %v2759
    %v2797 = vunpack.c.l.b16 %v2760
    %v2798 = vunpack.c.l.b16 %v2761
    %v2799 = vunpack.c.l.b16 %v2762
    %v2800 = vunpack.c.l.b16 %v2763
    %v2801 = vunpack.c.l.b16 %v2764
    %v2802 = vunpack.c.l.b16 %v2765
    %v2803 = vpack.c.b16 %v2788, %v2787
    %v2804 = vpack.c.b16 %v2790, %v2789
    %v2805 = vpack.c.b16 %v2792, %v2791
    %v2806 = vpack.c.b16 %v2794, %v2793
    %v2807 = vpack.c.b16 %v2796, %v2795
    %v2808 = vpack.c.b16 %v2798, %v2797
    %v2809 = vpack.c.b16 %v2800, %v2799
    %v2810 = vpack.c.b16 %v2802, %v2801
    %2819 = vmatpush.bf16.msra.mxu0 %v2810
    %2820 = vmatpush.bf16.msra.mxu0 %v2809
    %2821 = vmatpush.bf16.msra.mxu0 %v2808
    %2822 = vmatpush.bf16.msra.mxu0 %v2807
    %2823 = vmatpush.bf16.msra.mxu0 %v2806
    %2824 = vmatpush.bf16.msra.mxu0 %v2805
    %2825 = vmatpush.bf16.msra.mxu0 %v2804
    %2826 = vmatpush.bf16.msra.mxu0 %v2803
    %2827 = vmatmul.bf16.gmra.mxu0 %v66
    %v2828 = vpop.f32.mrf.mxu0
    %v2829 = vadd.f32 %v2769, %v2828
    %v2830 = vpop.f32.mrf.mxu0
    %v2831 = vadd.f32 %v2769, %v2830
    %2832 = vmatmul.bf16.gmra.mxu0 %v67
    %v2833 = vpop.f32.mrf.mxu0
    %v2834 = vadd.f32 %v2769, %v2833
    %v2835 = vpop.f32.mrf.mxu0
    %v2836 = vadd.f32 %v2769, %v2835
    %2837 = vmatmul.bf16.gmra.mxu0 %v68
    %v2838 = vpop.f32.mrf.mxu0
    %v2839 = vadd.f32 %v2769, %v2838
    %v2840 = vpop.f32.mrf.mxu0
    %v2841 = vadd.f32 %v2769, %v2840
    %2842 = vmatmul.bf16.gmra.mxu0 %v69
    %v2843 = vpop.f32.mrf.mxu0
    %v2844 = vadd.f32 %v2769, %v2843
    %v2845 = vpop.f32.mrf.mxu0
    %v2846 = vadd.f32 %v2769, %v2845
    %2847 = vdwg.mxu0
    %s2848 = scalar_lea.vmem %s3, 256
    %v2849 = vld [vmem:[%s2848] sm:$0xf]
    %v2850 = vld [vmem:[%s2848 + $0x4] sm:$0xf]
    %v2851 = vld [vmem:[%s2848 + $0x8] sm:$0xf]
    %v2852 = vld [vmem:[%s2848 + $0xc] sm:$0xf]
    %v2853 = vld [vmem:[%s2848 + $0x10] sm:$0xf]
    %v2854 = vld [vmem:[%s2848 + $0x14] sm:$0xf]
    %v2855 = vld [vmem:[%s2848 + $0x18] sm:$0xf]
    %v2856 = vld [vmem:[%s2848 + $0x1c] sm:$0xf]
    %v2857 = vld [vmem:[%s2848 + $0x20] sm:$0xf]
    %v2858 = vld [vmem:[%s2848 + $0x24] sm:$0xf]
    %v2859 = vld [vmem:[%s2848 + $0x28] sm:$0xf]
    %v2860 = vld [vmem:[%s2848 + $0x2c] sm:$0xf]
    %v2861 = vld [vmem:[%s2848 + $0x30] sm:$0xf]
    %v2862 = vld [vmem:[%s2848 + $0x34] sm:$0xf]
    %v2863 = vld [vmem:[%s2848 + $0x38] sm:$0xf]
    %v2864 = vld [vmem:[%s2848 + $0x3c] sm:$0xf]
    %s2865 = scalar_lea.vmem %s4, 4
    %v2866 = vld [vmem:[%s2865] sm:$0x1]
    %v2868 = vperm.slane %v2866, 0
    %v2886 = vunpack.c.l.b16 %v2849
    %v2887 = vunpack.c.l.b16 %v2850
    %v2888 = vunpack.c.l.b16 %v2851
    %v2889 = vunpack.c.l.b16 %v2852
    %v2890 = vunpack.c.l.b16 %v2853
    %v2891 = vunpack.c.l.b16 %v2854
    %v2892 = vunpack.c.l.b16 %v2855
    %v2893 = vunpack.c.l.b16 %v2856
    %v2894 = vunpack.c.l.b16 %v2857
    %v2895 = vunpack.c.l.b16 %v2858
    %v2896 = vunpack.c.l.b16 %v2859
    %v2897 = vunpack.c.l.b16 %v2860
    %v2898 = vunpack.c.l.b16 %v2861
    %v2899 = vunpack.c.l.b16 %v2862
    %v2900 = vunpack.c.l.b16 %v2863
    %v2901 = vunpack.c.l.b16 %v2864
    %v2902 = vpack.c.b16 %v2887, %v2886
    %v2903 = vpack.c.b16 %v2889, %v2888
    %v2904 = vpack.c.b16 %v2891, %v2890
    %v2905 = vpack.c.b16 %v2893, %v2892
    %v2906 = vpack.c.b16 %v2895, %v2894
    %v2907 = vpack.c.b16 %v2897, %v2896
    %v2908 = vpack.c.b16 %v2899, %v2898
    %v2909 = vpack.c.b16 %v2901, %v2900
    %2918 = vmatpush.bf16.msra.mxu0 %v2909
    %2919 = vmatpush.bf16.msra.mxu0 %v2908
    %2920 = vmatpush.bf16.msra.mxu0 %v2907
    %2921 = vmatpush.bf16.msra.mxu0 %v2906
    %2922 = vmatpush.bf16.msra.mxu0 %v2905
    %2923 = vmatpush.bf16.msra.mxu0 %v2904
    %2924 = vmatpush.bf16.msra.mxu0 %v2903
    %2925 = vmatpush.bf16.msra.mxu0 %v2902
    %2926 = vmatmul.bf16.gmra.mxu0 %v66
    %v2927 = vpop.f32.mrf.mxu0
    %v2928 = vadd.f32 %v2868, %v2927
    %v2929 = vpop.f32.mrf.mxu0
    %v2930 = vadd.f32 %v2868, %v2929
    %2931 = vmatmul.bf16.gmra.mxu0 %v67
    %v2932 = vpop.f32.mrf.mxu0
    %v2933 = vadd.f32 %v2868, %v2932
    %v2934 = vpop.f32.mrf.mxu0
    %v2935 = vadd.f32 %v2868, %v2934
    %2936 = vmatmul.bf16.gmra.mxu0 %v68
    %v2937 = vpop.f32.mrf.mxu0
    %v2938 = vadd.f32 %v2868, %v2937
    %v2939 = vpop.f32.mrf.mxu0
    %v2940 = vadd.f32 %v2868, %v2939
    %2941 = vmatmul.bf16.gmra.mxu0 %v69
    %v2942 = vpop.f32.mrf.mxu0
    %v2943 = vadd.f32 %v2868, %v2942
    %v2944 = vpop.f32.mrf.mxu0
    %v2945 = vadd.f32 %v2868, %v2944
    %2946 = vdwg.mxu0
    %s2947 = scalar_lea.vmem %s5, 256
    %v2948 = vld [vmem:[%s2947] sm:$0xf]
    %v2949 = vld [vmem:[%s2947 + $0x4] sm:$0xf]
    %v2950 = vld [vmem:[%s2947 + $0x8] sm:$0xf]
    %v2951 = vld [vmem:[%s2947 + $0xc] sm:$0xf]
    %v2952 = vld [vmem:[%s2947 + $0x10] sm:$0xf]
    %v2953 = vld [vmem:[%s2947 + $0x14] sm:$0xf]
    %v2954 = vld [vmem:[%s2947 + $0x18] sm:$0xf]
    %v2955 = vld [vmem:[%s2947 + $0x1c] sm:$0xf]
    %v2956 = vld [vmem:[%s2947 + $0x20] sm:$0xf]
    %v2957 = vld [vmem:[%s2947 + $0x24] sm:$0xf]
    %v2958 = vld [vmem:[%s2947 + $0x28] sm:$0xf]
    %v2959 = vld [vmem:[%s2947 + $0x2c] sm:$0xf]
    %v2960 = vld [vmem:[%s2947 + $0x30] sm:$0xf]
    %v2961 = vld [vmem:[%s2947 + $0x34] sm:$0xf]
    %v2962 = vld [vmem:[%s2947 + $0x38] sm:$0xf]
    %v2963 = vld [vmem:[%s2947 + $0x3c] sm:$0xf]
    %s2964 = scalar_lea.vmem %s6, 4
    %v2965 = vld [vmem:[%s2964] sm:$0x1]
    %v2967 = vperm.slane %v2965, 0
    %v2985 = vunpack.c.l.b16 %v2948
    %v2986 = vunpack.c.l.b16 %v2949
    %v2987 = vunpack.c.l.b16 %v2950
    %v2988 = vunpack.c.l.b16 %v2951
    %v2989 = vunpack.c.l.b16 %v2952
    %v2990 = vunpack.c.l.b16 %v2953
    %v2991 = vunpack.c.l.b16 %v2954
    %v2992 = vunpack.c.l.b16 %v2955
    %v2993 = vunpack.c.l.b16 %v2956
    %v2994 = vunpack.c.l.b16 %v2957
    %v2995 = vunpack.c.l.b16 %v2958
    %v2996 = vunpack.c.l.b16 %v2959
    %v2997 = vunpack.c.l.b16 %v2960
    %v2998 = vunpack.c.l.b16 %v2961
    %v2999 = vunpack.c.l.b16 %v2962
    %v3000 = vunpack.c.l.b16 %v2963
    %v3001 = vpack.c.b16 %v2986, %v2985
    %v3002 = vpack.c.b16 %v2988, %v2987
    %v3003 = vpack.c.b16 %v2990, %v2989
    %v3004 = vpack.c.b16 %v2992, %v2991
    %v3005 = vpack.c.b16 %v2994, %v2993
    %v3006 = vpack.c.b16 %v2996, %v2995
    %v3007 = vpack.c.b16 %v2998, %v2997
    %v3008 = vpack.c.b16 %v3000, %v2999
    %3017 = vmatpush.bf16.msra.mxu0 %v3008
    %3018 = vmatpush.bf16.msra.mxu0 %v3007
    %3019 = vmatpush.bf16.msra.mxu0 %v3006
    %3020 = vmatpush.bf16.msra.mxu0 %v3005
    %3021 = vmatpush.bf16.msra.mxu0 %v3004
    %3022 = vmatpush.bf16.msra.mxu0 %v3003
    %3023 = vmatpush.bf16.msra.mxu0 %v3002
    %3024 = vmatpush.bf16.msra.mxu0 %v3001
    %3025 = vmatmul.bf16.gmra.mxu0 %v66
    %v3026 = vpop.f32.mrf.mxu0
    %v3027 = vadd.f32 %v2967, %v3026
    %v3028 = vpop.f32.mrf.mxu0
    %v3029 = vadd.f32 %v2967, %v3028
    %3030 = vmatmul.bf16.gmra.mxu0 %v67
    %v3031 = vpop.f32.mrf.mxu0
    %v3032 = vadd.f32 %v2967, %v3031
    %v3033 = vpop.f32.mrf.mxu0
    %v3034 = vadd.f32 %v2967, %v3033
    %3035 = vmatmul.bf16.gmra.mxu0 %v68
    %v3036 = vpop.f32.mrf.mxu0
    %v3037 = vadd.f32 %v2967, %v3036
    %v3038 = vpop.f32.mrf.mxu0
    %v3039 = vadd.f32 %v2967, %v3038
    %3040 = vmatmul.bf16.gmra.mxu0 %v69
    %v3041 = vpop.f32.mrf.mxu0
    %v3042 = vadd.f32 %v2967, %v3041
    %v3043 = vpop.f32.mrf.mxu0
    %v3044 = vadd.f32 %v2967, %v3043
    %3045 = vdwg.mxu0
    %v3046 = vpack.c.bf16 %v2829, %v2829
    %v3047 = vpack.c.bf16 %v2831, %v2831
    %v3048 = vpack.c.bf16 %v2834, %v2834
    %v3049 = vpack.c.bf16 %v2836, %v2836
    %v3050 = vpack.c.bf16 %v2839, %v2839
    %v3051 = vpack.c.bf16 %v2841, %v2841
    %v3052 = vpack.c.bf16 %v2844, %v2844
    %v3053 = vpack.c.bf16 %v2846, %v2846
    %v3054 = vpack.c.bf16 %v2928, %v2928
    %v3055 = vpack.c.bf16 %v2930, %v2930
    %v3056 = vpack.c.bf16 %v2933, %v2933
    %v3057 = vpack.c.bf16 %v2935, %v2935
    %v3058 = vpack.c.bf16 %v2938, %v2938
    %v3059 = vpack.c.bf16 %v2940, %v2940
    %v3060 = vpack.c.bf16 %v2943, %v2943
    %v3061 = vpack.c.bf16 %v2945, %v2945
    %v3062 = vpack.c.bf16 %v3027, %v3027
    %v3063 = vpack.c.bf16 %v3029, %v3029
    %v3064 = vpack.c.bf16 %v3032, %v3032
    %v3065 = vpack.c.bf16 %v3034, %v3034
    %v3066 = vpack.c.bf16 %v3037, %v3037
    %v3067 = vpack.c.bf16 %v3039, %v3039
    %v3068 = vpack.c.bf16 %v3042, %v3042
    %v3069 = vpack.c.bf16 %v3044, %v3044
    %v3074 = vunpack.c.l.b16 %v3046
    %v3075 = vunpack.c.l.b16 %v3047
    %v3076 = vunpack.c.l.b16 %v3048
    %v3077 = vunpack.c.l.b16 %v3049
    %v3078 = vpack.c.b16 %v3075, %v3074
    %v3079 = vpack.c.b16 %v3077, %v3076
    %v3084 = vunpack.c.l.b16 %v3054
    %v3085 = vunpack.c.l.b16 %v3055
    %v3086 = vunpack.c.l.b16 %v3056
    %v3087 = vunpack.c.l.b16 %v3057
    %v3088 = vpack.c.b16 %v3085, %v3084
    %v3089 = vpack.c.b16 %v3087, %v3086
    %v3091 = vsel %vm405, %v3078, 0
    %v3094 = vsel %vm405, %v3079, 0
    %v3097 = vsel %vm405, %v3088, 0
    %v3100 = vsel %vm405, %v3089, 0
    %3102 = vmatpush.bf16.xpose.msra.mxu0 0
    %3103 = vmatpush.bf16.xpose.msra.mxu0 0
    %3104 = vmatpush.bf16.xpose.msra.mxu0 0
    %3105 = vmatpush.bf16.xpose.msra.mxu0 0
    %3106 = vmatpush.bf16.xpose.msra.mxu0 0
    %3107 = vmatpush.bf16.xpose.msra.mxu0 0
    %3108 = vmatpush.bf16.xpose.msra.mxu0 %v3100
    %3109 = vmatpush.bf16.xpose.msra.mxu0 %v3097
    %3110 = vmatmul.bf16.gmra.mxu0 %v3091
    %v3111 = vpop.f32.mrf.mxu0
    %v3112 = vadd.f32 0.0, %v3111
    %v3113 = vpop.f32.mrf.mxu0
    %v3114 = vadd.f32 0.0, %v3113
    %3115 = vmatmul.bf16.gmra.mxu0 %v3094
    %v3116 = vpop.f32.mrf.mxu0
    %v3117 = vadd.f32 0.0, %v3116
    %v3118 = vpop.f32.mrf.mxu0
    %v3119 = vadd.f32 0.0, %v3118
    %3120 = vdwg.mxu0
    %v3125 = vunpack.c.l.b16 %v3050
    %v3126 = vunpack.c.l.b16 %v3051
    %v3127 = vunpack.c.l.b16 %v3052
    %v3128 = vunpack.c.l.b16 %v3053
    %v3129 = vpack.c.b16 %v3126, %v3125
    %v3130 = vpack.c.b16 %v3128, %v3127
    %v3135 = vunpack.c.l.b16 %v3058
    %v3136 = vunpack.c.l.b16 %v3059
    %v3137 = vunpack.c.l.b16 %v3060
    %v3138 = vunpack.c.l.b16 %v3061
    %v3139 = vpack.c.b16 %v3136, %v3135
    %v3140 = vpack.c.b16 %v3138, %v3137
    %v3142 = vsel %vm405, %v3129, 0
    %v3145 = vsel %vm405, %v3130, 0
    %v3148 = vsel %vm405, %v3139, 0
    %v3151 = vsel %vm405, %v3140, 0
    %3153 = vmatpush.bf16.xpose.msra.mxu0 0
    %3154 = vmatpush.bf16.xpose.msra.mxu0 0
    %3155 = vmatpush.bf16.xpose.msra.mxu0 0
    %3156 = vmatpush.bf16.xpose.msra.mxu0 0
    %3157 = vmatpush.bf16.xpose.msra.mxu0 0
    %3158 = vmatpush.bf16.xpose.msra.mxu0 0
    %3159 = vmatpush.bf16.xpose.msra.mxu0 %v3151
    %3160 = vmatpush.bf16.xpose.msra.mxu0 %v3148
    %3161 = vmatmul.bf16.gmra.mxu0 %v3142
    %v3162 = vpop.f32.mrf.mxu0
    %v3163 = vadd.f32 0.0, %v3162
    %v3164 = vpop.f32.mrf.mxu0
    %v3165 = vadd.f32 0.0, %v3164
    %3166 = vmatmul.bf16.gmra.mxu0 %v3145
    %v3167 = vpop.f32.mrf.mxu0
    %v3168 = vadd.f32 0.0, %v3167
    %v3169 = vpop.f32.mrf.mxu0
    %v3170 = vadd.f32 0.0, %v3169
    %3171 = vdwg.mxu0
    %v3172 = vsel %vm488, %v3112, -inf
    %3173 = vmax.xlane.f32.xlu0 %v3172
    %v3174 = vpop.xlane.xlu0 %3173
    %v3175 = vsel %vm488, %v3114, -inf
    %3176 = vmax.xlane.f32.xlu0 %v3175
    %v3177 = vpop.xlane.xlu0 %3176
    %v3178 = vsel %vm488, %v3117, -inf
    %3179 = vmax.xlane.f32.xlu0 %v3178
    %v3180 = vpop.xlane.xlu0 %3179
    %v3181 = vsel %vm488, %v3119, -inf
    %3182 = vmax.xlane.f32.xlu0 %v3181
    %v3183 = vpop.xlane.xlu0 %3182
    %v3184 = vsel %vm488, %v3163, -inf
    %3185 = vmax.xlane.f32.xlu0 %v3184
    %v3186 = vpop.xlane.xlu0 %3185
    %v3187 = vsel %vm488, %v3165, -inf
    %3188 = vmax.xlane.f32.xlu0 %v3187
    %v3189 = vpop.xlane.xlu0 %3188
    %v3190 = vsel %vm488, %v3168, -inf
    %3191 = vmax.xlane.f32.xlu0 %v3190
    %v3192 = vpop.xlane.xlu0 %3191
    %v3193 = vsel %vm488, %v3170, -inf
    %3194 = vmax.xlane.f32.xlu0 %v3193
    %v3195 = vpop.xlane.xlu0 %3194
    %v3196 = vsub.f32 %v3112, %v3174
    %v3197 = vsub.f32 %v3114, %v3177
    %v3198 = vsub.f32 %v3117, %v3180
    %v3199 = vsub.f32 %v3119, %v3183
    %v3200 = vsub.f32 %v3163, %v3186
    %v3201 = vsub.f32 %v3165, %v3189
    %v3202 = vsub.f32 %v3168, %v3192
    %v3203 = vsub.f32 %v3170, %v3195
    %v3204 = vmul.f32 %v3196, 1.442695
    %v3205 = vpow.pop %v3204
    %v3206 = vmul.f32 %v3197, 1.442695
    %v3207 = vpow.pop %v3206
    %v3208 = vmul.f32 %v3198, 1.442695
    %v3209 = vpow.pop %v3208
    %v3210 = vmul.f32 %v3199, 1.442695
    %v3211 = vpow.pop %v3210
    %v3212 = vmul.f32 %v3200, 1.442695
    %v3213 = vpow.pop %v3212
    %v3214 = vmul.f32 %v3201, 1.442695
    %v3215 = vpow.pop %v3214
    %v3216 = vmul.f32 %v3202, 1.442695
    %v3217 = vpow.pop %v3216
    %v3218 = vmul.f32 %v3203, 1.442695
    %v3219 = vpow.pop %v3218
    %v3220 = vsel %vm488, %v3205, 0.0
    %3221 = vadd.xlane.f32.xlu0 %v3220
    %v3222 = vpop.xlane.xlu0 %3221
    %v3223 = vsel %vm488, %v3207, 0.0
    %3224 = vadd.xlane.f32.xlu0 %v3223
    %v3225 = vpop.xlane.xlu0 %3224
    %v3226 = vsel %vm488, %v3209, 0.0
    %3227 = vadd.xlane.f32.xlu0 %v3226
    %v3228 = vpop.xlane.xlu0 %3227
    %v3229 = vsel %vm488, %v3211, 0.0
    %3230 = vadd.xlane.f32.xlu0 %v3229
    %v3231 = vpop.xlane.xlu0 %3230
    %v3232 = vsel %vm488, %v3213, 0.0
    %3233 = vadd.xlane.f32.xlu0 %v3232
    %v3234 = vpop.xlane.xlu0 %3233
    %v3235 = vsel %vm488, %v3215, 0.0
    %3236 = vadd.xlane.f32.xlu0 %v3235
    %v3237 = vpop.xlane.xlu0 %3236
    %v3238 = vsel %vm488, %v3217, 0.0
    %3239 = vadd.xlane.f32.xlu0 %v3238
    %v3240 = vpop.xlane.xlu0 %3239
    %v3241 = vsel %vm488, %v3219, 0.0
    %3242 = vadd.xlane.f32.xlu0 %v3241
    %v3243 = vpop.xlane.xlu0 %3242
    %v3244 = vrcp.pop %v3222
    %v3245 = vrcp.pop %v3225
    %v3246 = vrcp.pop %v3228
    %v3247 = vrcp.pop %v3231
    %v3248 = vrcp.pop %v3234
    %v3249 = vrcp.pop %v3237
    %v3250 = vrcp.pop %v3240
    %v3251 = vrcp.pop %v3243
    %v3252 = vmul.f32 %v3205, %v3244
    %v3253 = vmul.f32 %v3207, %v3245
    %v3254 = vmul.f32 %v3209, %v3246
    %v3255 = vmul.f32 %v3211, %v3247
    %v3256 = vmul.f32 %v3213, %v3248
    %v3257 = vmul.f32 %v3215, %v3249
    %v3258 = vmul.f32 %v3217, %v3250
    %v3259 = vmul.f32 %v3219, %v3251
    %v3260 = vpack.c.bf16 %v3252, %v3252
    %v3261 = vpack.c.bf16 %v3253, %v3253
    %v3262 = vpack.c.bf16 %v3254, %v3254
    %v3263 = vpack.c.bf16 %v3255, %v3255
    %v3264 = vpack.c.bf16 %v3256, %v3256
    %v3265 = vpack.c.bf16 %v3257, %v3257
    %v3266 = vpack.c.bf16 %v3258, %v3258
    %v3267 = vpack.c.bf16 %v3259, %v3259
    %v3272 = vunpack.c.l.b16 %v3260
    %v3273 = vunpack.c.l.b16 %v3261
    %v3274 = vunpack.c.l.b16 %v3262
    %v3275 = vunpack.c.l.b16 %v3263
    %v3276 = vpack.c.b16 %v3273, %v3272
    %v3277 = vpack.c.b16 %v3275, %v3274
    %v3282 = vunpack.c.l.b16 %v3062
    %v3283 = vunpack.c.l.b16 %v3063
    %v3284 = vunpack.c.l.b16 %v3064
    %v3285 = vunpack.c.l.b16 %v3065
    %v3286 = vpack.c.b16 %v3283, %v3282
    %v3287 = vpack.c.b16 %v3285, %v3284
    %v3291 = vsel %vm488, %v3276, 0
    %v3294 = vsel %vm488, %v3277, 0
    %3296 = vmatpush.bf16.msra.mxu0 0
    %3297 = vmatpush.bf16.msra.mxu0 0
    %3298 = vmatpush.bf16.msra.mxu0 0
    %3299 = vmatpush.bf16.msra.mxu0 0
    %3300 = vmatpush.bf16.msra.mxu0 0
    %3301 = vmatpush.bf16.msra.mxu0 0
    %3302 = vmatpush.bf16.msra.mxu0 %v3287
    %3303 = vmatpush.bf16.msra.mxu0 %v3286
    %3304 = vmatmul.bf16.gmra.mxu0 %v3291
    %v3305 = vpop.f32.mrf.mxu0
    %v3306 = vadd.f32 0.0, %v3305
    %v3307 = vpop.f32.mrf.mxu0
    %v3308 = vadd.f32 0.0, %v3307
    %3309 = vmatmul.bf16.gmra.mxu0 %v3294
    %v3310 = vpop.f32.mrf.mxu0
    %v3311 = vadd.f32 0.0, %v3310
    %v3312 = vpop.f32.mrf.mxu0
    %v3313 = vadd.f32 0.0, %v3312
    %3314 = vdwg.mxu0
    %v3319 = vunpack.c.l.b16 %v3264
    %v3320 = vunpack.c.l.b16 %v3265
    %v3321 = vunpack.c.l.b16 %v3266
    %v3322 = vunpack.c.l.b16 %v3267
    %v3323 = vpack.c.b16 %v3320, %v3319
    %v3324 = vpack.c.b16 %v3322, %v3321
    %v3329 = vunpack.c.l.b16 %v3066
    %v3330 = vunpack.c.l.b16 %v3067
    %v3331 = vunpack.c.l.b16 %v3068
    %v3332 = vunpack.c.l.b16 %v3069
    %v3333 = vpack.c.b16 %v3330, %v3329
    %v3334 = vpack.c.b16 %v3332, %v3331
    %v3338 = vsel %vm488, %v3323, 0
    %v3341 = vsel %vm488, %v3324, 0
    %3343 = vmatpush.bf16.msra.mxu0 0
    %3344 = vmatpush.bf16.msra.mxu0 0
    %3345 = vmatpush.bf16.msra.mxu0 0
    %3346 = vmatpush.bf16.msra.mxu0 0
    %3347 = vmatpush.bf16.msra.mxu0 0
    %3348 = vmatpush.bf16.msra.mxu0 0
    %3349 = vmatpush.bf16.msra.mxu0 %v3334
    %3350 = vmatpush.bf16.msra.mxu0 %v3333
    %3351 = vmatmul.bf16.gmra.mxu0 %v3338
    %v3352 = vpop.f32.mrf.mxu0
    %v3353 = vadd.f32 0.0, %v3352
    %v3354 = vpop.f32.mrf.mxu0
    %v3355 = vadd.f32 0.0, %v3354
    %3356 = vmatmul.bf16.gmra.mxu0 %v3341
    %v3357 = vpop.f32.mrf.mxu0
    %v3358 = vadd.f32 0.0, %v3357
    %v3359 = vpop.f32.mrf.mxu0
    %v3360 = vadd.f32 0.0, %v3359
    %3361 = vdwg.mxu0
    %v3362 = vpack.c.bf16 %v3308, %v3306
    %v3363 = vpack.c.bf16 %v3313, %v3311
    %v3364 = vpack.c.bf16 %v3355, %v3353
    %v3365 = vpack.c.bf16 %v3360, %v3358
    %s3366 = scalar_lea.vmem %s7, 32
    %v3367 = vld [vmem:[%s3366] sm:$0xf]
    %v3368 = vld [vmem:[%s3366 + $0x4] sm:$0xf]
    %v3371 = vunpack.c.l.b16 %v3367
    %v3372 = vunpack.c.l.b16 %v3368
    %v3373 = vpack.c.b16 %v3372, %v3371
    %v3376 = vsel %vm405, %v3362, 0
    %v3379 = vsel %vm405, %v3363, 0
    %v3382 = vsel %vm405, %v3364, 0
    %v3385 = vsel %vm405, %v3365, 0
    %3387 = vmatpush.bf16.msra.mxu0 0
    %3388 = vmatpush.bf16.msra.mxu0 0
    %3389 = vmatpush.bf16.msra.mxu0 0
    %3390 = vmatpush.bf16.msra.mxu0 0
    %3391 = vmatpush.bf16.msra.mxu0 0
    %3392 = vmatpush.bf16.msra.mxu0 0
    %3393 = vmatpush.bf16.msra.mxu0 0
    %3394 = vmatpush.bf16.msra.mxu0 %v3373
    %3395 = vmatmul.bf16.gmra.mxu0 %v3376
    %v3396 = vpop.f32.mrf.mxu0
    %v3397 = vadd.f32 0.0, %v3396
    %v3398 = vpop.f32.mrf.mxu0
    %v3399 = vadd.f32 0.0, %v3398
    %3400 = vmatmul.bf16.gmra.mxu0 %v3379
    %v3401 = vpop.f32.mrf.mxu0
    %v3402 = vadd.f32 0.0, %v3401
    %v3403 = vpop.f32.mrf.mxu0
    %v3404 = vadd.f32 0.0, %v3403
    %3405 = vmatmul.bf16.gmra.mxu0 %v3382
    %v3406 = vpop.f32.mrf.mxu0
    %v3407 = vadd.f32 0.0, %v3406
    %v3408 = vpop.f32.mrf.mxu0
    %v3409 = vadd.f32 0.0, %v3408
    %3410 = vmatmul.bf16.gmra.mxu0 %v3385
    %v3411 = vpop.f32.mrf.mxu0
    %v3412 = vadd.f32 0.0, %v3411
    %v3413 = vpop.f32.mrf.mxu0
    %v3414 = vadd.f32 0.0, %v3413
    %3415 = vdwg.mxu0
    %v3416 = vadd.f32 %v2741, %v3397
    %v3417 = vadd.f32 %v2742, %v3399
    %v3418 = vadd.f32 %v2743, %v3402
    %v3419 = vadd.f32 %v2744, %v3404
    %v3420 = vadd.f32 %v2745, %v3407
    %v3421 = vadd.f32 %v2746, %v3409
    %v3422 = vadd.f32 %v2747, %v3412
    %v3423 = vadd.f32 %v2748, %v3414
    %s3424 = scalar_lea.vmem %s1, 320
    %v3425 = vld [vmem:[%s3424] sm:$0xf]
    %v3426 = vld [vmem:[%s3424 + $0x4] sm:$0xf]
    %v3427 = vld [vmem:[%s3424 + $0x8] sm:$0xf]
    %v3428 = vld [vmem:[%s3424 + $0xc] sm:$0xf]
    %v3429 = vld [vmem:[%s3424 + $0x10] sm:$0xf]
    %v3430 = vld [vmem:[%s3424 + $0x14] sm:$0xf]
    %v3431 = vld [vmem:[%s3424 + $0x18] sm:$0xf]
    %v3432 = vld [vmem:[%s3424 + $0x1c] sm:$0xf]
    %v3433 = vld [vmem:[%s3424 + $0x20] sm:$0xf]
    %v3434 = vld [vmem:[%s3424 + $0x24] sm:$0xf]
    %v3435 = vld [vmem:[%s3424 + $0x28] sm:$0xf]
    %v3436 = vld [vmem:[%s3424 + $0x2c] sm:$0xf]
    %v3437 = vld [vmem:[%s3424 + $0x30] sm:$0xf]
    %v3438 = vld [vmem:[%s3424 + $0x34] sm:$0xf]
    %v3439 = vld [vmem:[%s3424 + $0x38] sm:$0xf]
    %v3440 = vld [vmem:[%s3424 + $0x3c] sm:$0xf]
    %s3441 = scalar_lea.vmem %s2, 5
    %v3442 = vld [vmem:[%s3441] sm:$0x1]
    %v3444 = vperm.slane %v3442, 0
    %v3462 = vunpack.c.l.b16 %v3425
    %v3463 = vunpack.c.l.b16 %v3426
    %v3464 = vunpack.c.l.b16 %v3427
    %v3465 = vunpack.c.l.b16 %v3428
    %v3466 = vunpack.c.l.b16 %v3429
    %v3467 = vunpack.c.l.b16 %v3430
    %v3468 = vunpack.c.l.b16 %v3431
    %v3469 = vunpack.c.l.b16 %v3432
    %v3470 = vunpack.c.l.b16 %v3433
    %v3471 = vunpack.c.l.b16 %v3434
    %v3472 = vunpack.c.l.b16 %v3435
    %v3473 = vunpack.c.l.b16 %v3436
    %v3474 = vunpack.c.l.b16 %v3437
    %v3475 = vunpack.c.l.b16 %v3438
    %v3476 = vunpack.c.l.b16 %v3439
    %v3477 = vunpack.c.l.b16 %v3440
    %v3478 = vpack.c.b16 %v3463, %v3462
    %v3479 = vpack.c.b16 %v3465, %v3464
    %v3480 = vpack.c.b16 %v3467, %v3466
    %v3481 = vpack.c.b16 %v3469, %v3468
    %v3482 = vpack.c.b16 %v3471, %v3470
    %v3483 = vpack.c.b16 %v3473, %v3472
    %v3484 = vpack.c.b16 %v3475, %v3474
    %v3485 = vpack.c.b16 %v3477, %v3476
    %3494 = vmatpush.bf16.msra.mxu0 %v3485
    %3495 = vmatpush.bf16.msra.mxu0 %v3484
    %3496 = vmatpush.bf16.msra.mxu0 %v3483
    %3497 = vmatpush.bf16.msra.mxu0 %v3482
    %3498 = vmatpush.bf16.msra.mxu0 %v3481
    %3499 = vmatpush.bf16.msra.mxu0 %v3480
    %3500 = vmatpush.bf16.msra.mxu0 %v3479
    %3501 = vmatpush.bf16.msra.mxu0 %v3478
    %3502 = vmatmul.bf16.gmra.mxu0 %v66
    %v3503 = vpop.f32.mrf.mxu0
    %v3504 = vadd.f32 %v3444, %v3503
    %v3505 = vpop.f32.mrf.mxu0
    %v3506 = vadd.f32 %v3444, %v3505
    %3507 = vmatmul.bf16.gmra.mxu0 %v67
    %v3508 = vpop.f32.mrf.mxu0
    %v3509 = vadd.f32 %v3444, %v3508
    %v3510 = vpop.f32.mrf.mxu0
    %v3511 = vadd.f32 %v3444, %v3510
    %3512 = vmatmul.bf16.gmra.mxu0 %v68
    %v3513 = vpop.f32.mrf.mxu0
    %v3514 = vadd.f32 %v3444, %v3513
    %v3515 = vpop.f32.mrf.mxu0
    %v3516 = vadd.f32 %v3444, %v3515
    %3517 = vmatmul.bf16.gmra.mxu0 %v69
    %v3518 = vpop.f32.mrf.mxu0
    %v3519 = vadd.f32 %v3444, %v3518
    %v3520 = vpop.f32.mrf.mxu0
    %v3521 = vadd.f32 %v3444, %v3520
    %3522 = vdwg.mxu0
    %s3523 = scalar_lea.vmem %s3, 320
    %v3524 = vld [vmem:[%s3523] sm:$0xf]
    %v3525 = vld [vmem:[%s3523 + $0x4] sm:$0xf]
    %v3526 = vld [vmem:[%s3523 + $0x8] sm:$0xf]
    %v3527 = vld [vmem:[%s3523 + $0xc] sm:$0xf]
    %v3528 = vld [vmem:[%s3523 + $0x10] sm:$0xf]
    %v3529 = vld [vmem:[%s3523 + $0x14] sm:$0xf]
    %v3530 = vld [vmem:[%s3523 + $0x18] sm:$0xf]
    %v3531 = vld [vmem:[%s3523 + $0x1c] sm:$0xf]
    %v3532 = vld [vmem:[%s3523 + $0x20] sm:$0xf]
    %v3533 = vld [vmem:[%s3523 + $0x24] sm:$0xf]
    %v3534 = vld [vmem:[%s3523 + $0x28] sm:$0xf]
    %v3535 = vld [vmem:[%s3523 + $0x2c] sm:$0xf]
    %v3536 = vld [vmem:[%s3523 + $0x30] sm:$0xf]
    %v3537 = vld [vmem:[%s3523 + $0x34] sm:$0xf]
    %v3538 = vld [vmem:[%s3523 + $0x38] sm:$0xf]
    %v3539 = vld [vmem:[%s3523 + $0x3c] sm:$0xf]
    %s3540 = scalar_lea.vmem %s4, 5
    %v3541 = vld [vmem:[%s3540] sm:$0x1]
    %v3543 = vperm.slane %v3541, 0
    %v3561 = vunpack.c.l.b16 %v3524
    %v3562 = vunpack.c.l.b16 %v3525
    %v3563 = vunpack.c.l.b16 %v3526
    %v3564 = vunpack.c.l.b16 %v3527
    %v3565 = vunpack.c.l.b16 %v3528
    %v3566 = vunpack.c.l.b16 %v3529
    %v3567 = vunpack.c.l.b16 %v3530
    %v3568 = vunpack.c.l.b16 %v3531
    %v3569 = vunpack.c.l.b16 %v3532
    %v3570 = vunpack.c.l.b16 %v3533
    %v3571 = vunpack.c.l.b16 %v3534
    %v3572 = vunpack.c.l.b16 %v3535
    %v3573 = vunpack.c.l.b16 %v3536
    %v3574 = vunpack.c.l.b16 %v3537
    %v3575 = vunpack.c.l.b16 %v3538
    %v3576 = vunpack.c.l.b16 %v3539
    %v3577 = vpack.c.b16 %v3562, %v3561
    %v3578 = vpack.c.b16 %v3564, %v3563
    %v3579 = vpack.c.b16 %v3566, %v3565
    %v3580 = vpack.c.b16 %v3568, %v3567
    %v3581 = vpack.c.b16 %v3570, %v3569
    %v3582 = vpack.c.b16 %v3572, %v3571
    %v3583 = vpack.c.b16 %v3574, %v3573
    %v3584 = vpack.c.b16 %v3576, %v3575
    %3593 = vmatpush.bf16.msra.mxu0 %v3584
    %3594 = vmatpush.bf16.msra.mxu0 %v3583
    %3595 = vmatpush.bf16.msra.mxu0 %v3582
    %3596 = vmatpush.bf16.msra.mxu0 %v3581
    %3597 = vmatpush.bf16.msra.mxu0 %v3580
    %3598 = vmatpush.bf16.msra.mxu0 %v3579
    %3599 = vmatpush.bf16.msra.mxu0 %v3578
    %3600 = vmatpush.bf16.msra.mxu0 %v3577
    %3601 = vmatmul.bf16.gmra.mxu0 %v66
    %v3602 = vpop.f32.mrf.mxu0
    %v3603 = vadd.f32 %v3543, %v3602
    %v3604 = vpop.f32.mrf.mxu0
    %v3605 = vadd.f32 %v3543, %v3604
    %3606 = vmatmul.bf16.gmra.mxu0 %v67
    %v3607 = vpop.f32.mrf.mxu0
    %v3608 = vadd.f32 %v3543, %v3607
    %v3609 = vpop.f32.mrf.mxu0
    %v3610 = vadd.f32 %v3543, %v3609
    %3611 = vmatmul.bf16.gmra.mxu0 %v68
    %v3612 = vpop.f32.mrf.mxu0
    %v3613 = vadd.f32 %v3543, %v3612
    %v3614 = vpop.f32.mrf.mxu0
    %v3615 = vadd.f32 %v3543, %v3614
    %3616 = vmatmul.bf16.gmra.mxu0 %v69
    %v3617 = vpop.f32.mrf.mxu0
    %v3618 = vadd.f32 %v3543, %v3617
    %v3619 = vpop.f32.mrf.mxu0
    %v3620 = vadd.f32 %v3543, %v3619
    %3621 = vdwg.mxu0
    %s3622 = scalar_lea.vmem %s5, 320
    %v3623 = vld [vmem:[%s3622] sm:$0xf]
    %v3624 = vld [vmem:[%s3622 + $0x4] sm:$0xf]
    %v3625 = vld [vmem:[%s3622 + $0x8] sm:$0xf]
    %v3626 = vld [vmem:[%s3622 + $0xc] sm:$0xf]
    %v3627 = vld [vmem:[%s3622 + $0x10] sm:$0xf]
    %v3628 = vld [vmem:[%s3622 + $0x14] sm:$0xf]
    %v3629 = vld [vmem:[%s3622 + $0x18] sm:$0xf]
    %v3630 = vld [vmem:[%s3622 + $0x1c] sm:$0xf]
    %v3631 = vld [vmem:[%s3622 + $0x20] sm:$0xf]
    %v3632 = vld [vmem:[%s3622 + $0x24] sm:$0xf]
    %v3633 = vld [vmem:[%s3622 + $0x28] sm:$0xf]
    %v3634 = vld [vmem:[%s3622 + $0x2c] sm:$0xf]
    %v3635 = vld [vmem:[%s3622 + $0x30] sm:$0xf]
    %v3636 = vld [vmem:[%s3622 + $0x34] sm:$0xf]
    %v3637 = vld [vmem:[%s3622 + $0x38] sm:$0xf]
    %v3638 = vld [vmem:[%s3622 + $0x3c] sm:$0xf]
    %s3639 = scalar_lea.vmem %s6, 5
    %v3640 = vld [vmem:[%s3639] sm:$0x1]
    %v3642 = vperm.slane %v3640, 0
    %v3660 = vunpack.c.l.b16 %v3623
    %v3661 = vunpack.c.l.b16 %v3624
    %v3662 = vunpack.c.l.b16 %v3625
    %v3663 = vunpack.c.l.b16 %v3626
    %v3664 = vunpack.c.l.b16 %v3627
    %v3665 = vunpack.c.l.b16 %v3628
    %v3666 = vunpack.c.l.b16 %v3629
    %v3667 = vunpack.c.l.b16 %v3630
    %v3668 = vunpack.c.l.b16 %v3631
    %v3669 = vunpack.c.l.b16 %v3632
    %v3670 = vunpack.c.l.b16 %v3633
    %v3671 = vunpack.c.l.b16 %v3634
    %v3672 = vunpack.c.l.b16 %v3635
    %v3673 = vunpack.c.l.b16 %v3636
    %v3674 = vunpack.c.l.b16 %v3637
    %v3675 = vunpack.c.l.b16 %v3638
    %v3676 = vpack.c.b16 %v3661, %v3660
    %v3677 = vpack.c.b16 %v3663, %v3662
    %v3678 = vpack.c.b16 %v3665, %v3664
    %v3679 = vpack.c.b16 %v3667, %v3666
    %v3680 = vpack.c.b16 %v3669, %v3668
    %v3681 = vpack.c.b16 %v3671, %v3670
    %v3682 = vpack.c.b16 %v3673, %v3672
    %v3683 = vpack.c.b16 %v3675, %v3674
    %3692 = vmatpush.bf16.msra.mxu0 %v3683
    %3693 = vmatpush.bf16.msra.mxu0 %v3682
    %3694 = vmatpush.bf16.msra.mxu0 %v3681
    %3695 = vmatpush.bf16.msra.mxu0 %v3680
    %3696 = vmatpush.bf16.msra.mxu0 %v3679
    %3697 = vmatpush.bf16.msra.mxu0 %v3678
    %3698 = vmatpush.bf16.msra.mxu0 %v3677
    %3699 = vmatpush.bf16.msra.mxu0 %v3676
    %3700 = vmatmul.bf16.gmra.mxu0 %v66
    %v3701 = vpop.f32.mrf.mxu0
    %v3702 = vadd.f32 %v3642, %v3701
    %v3703 = vpop.f32.mrf.mxu0
    %v3704 = vadd.f32 %v3642, %v3703
    %3705 = vmatmul.bf16.gmra.mxu0 %v67
    %v3706 = vpop.f32.mrf.mxu0
    %v3707 = vadd.f32 %v3642, %v3706
    %v3708 = vpop.f32.mrf.mxu0
    %v3709 = vadd.f32 %v3642, %v3708
    %3710 = vmatmul.bf16.gmra.mxu0 %v68
    %v3711 = vpop.f32.mrf.mxu0
    %v3712 = vadd.f32 %v3642, %v3711
    %v3713 = vpop.f32.mrf.mxu0
    %v3714 = vadd.f32 %v3642, %v3713
    %3715 = vmatmul.bf16.gmra.mxu0 %v69
    %v3716 = vpop.f32.mrf.mxu0
    %v3717 = vadd.f32 %v3642, %v3716
    %v3718 = vpop.f32.mrf.mxu0
    %v3719 = vadd.f32 %v3642, %v3718
    %3720 = vdwg.mxu0
    %v3721 = vpack.c.bf16 %v3504, %v3504
    %v3722 = vpack.c.bf16 %v3506, %v3506
    %v3723 = vpack.c.bf16 %v3509, %v3509
    %v3724 = vpack.c.bf16 %v3511, %v3511
    %v3725 = vpack.c.bf16 %v3514, %v3514
    %v3726 = vpack.c.bf16 %v3516, %v3516
    %v3727 = vpack.c.bf16 %v3519, %v3519
    %v3728 = vpack.c.bf16 %v3521, %v3521
    %v3729 = vpack.c.bf16 %v3603, %v3603
    %v3730 = vpack.c.bf16 %v3605, %v3605
    %v3731 = vpack.c.bf16 %v3608, %v3608
    %v3732 = vpack.c.bf16 %v3610, %v3610
    %v3733 = vpack.c.bf16 %v3613, %v3613
    %v3734 = vpack.c.bf16 %v3615, %v3615
    %v3735 = vpack.c.bf16 %v3618, %v3618
    %v3736 = vpack.c.bf16 %v3620, %v3620
    %v3737 = vpack.c.bf16 %v3702, %v3702
    %v3738 = vpack.c.bf16 %v3704, %v3704
    %v3739 = vpack.c.bf16 %v3707, %v3707
    %v3740 = vpack.c.bf16 %v3709, %v3709
    %v3741 = vpack.c.bf16 %v3712, %v3712
    %v3742 = vpack.c.bf16 %v3714, %v3714
    %v3743 = vpack.c.bf16 %v3717, %v3717
    %v3744 = vpack.c.bf16 %v3719, %v3719
    %v3749 = vunpack.c.l.b16 %v3721
    %v3750 = vunpack.c.l.b16 %v3722
    %v3751 = vunpack.c.l.b16 %v3723
    %v3752 = vunpack.c.l.b16 %v3724
    %v3753 = vpack.c.b16 %v3750, %v3749
    %v3754 = vpack.c.b16 %v3752, %v3751
    %v3759 = vunpack.c.l.b16 %v3729
    %v3760 = vunpack.c.l.b16 %v3730
    %v3761 = vunpack.c.l.b16 %v3731
    %v3762 = vunpack.c.l.b16 %v3732
    %v3763 = vpack.c.b16 %v3760, %v3759
    %v3764 = vpack.c.b16 %v3762, %v3761
    %v3766 = vsel %vm405, %v3753, 0
    %v3769 = vsel %vm405, %v3754, 0
    %v3772 = vsel %vm405, %v3763, 0
    %v3775 = vsel %vm405, %v3764, 0
    %3777 = vmatpush.bf16.xpose.msra.mxu0 0
    %3778 = vmatpush.bf16.xpose.msra.mxu0 0
    %3779 = vmatpush.bf16.xpose.msra.mxu0 0
    %3780 = vmatpush.bf16.xpose.msra.mxu0 0
    %3781 = vmatpush.bf16.xpose.msra.mxu0 0
    %3782 = vmatpush.bf16.xpose.msra.mxu0 0
    %3783 = vmatpush.bf16.xpose.msra.mxu0 %v3775
    %3784 = vmatpush.bf16.xpose.msra.mxu0 %v3772
    %3785 = vmatmul.bf16.gmra.mxu0 %v3766
    %v3786 = vpop.f32.mrf.mxu0
    %v3787 = vadd.f32 0.0, %v3786
    %v3788 = vpop.f32.mrf.mxu0
    %v3789 = vadd.f32 0.0, %v3788
    %3790 = vmatmul.bf16.gmra.mxu0 %v3769
    %v3791 = vpop.f32.mrf.mxu0
    %v3792 = vadd.f32 0.0, %v3791
    %v3793 = vpop.f32.mrf.mxu0
    %v3794 = vadd.f32 0.0, %v3793
    %3795 = vdwg.mxu0
    %v3800 = vunpack.c.l.b16 %v3725
    %v3801 = vunpack.c.l.b16 %v3726
    %v3802 = vunpack.c.l.b16 %v3727
    %v3803 = vunpack.c.l.b16 %v3728
    %v3804 = vpack.c.b16 %v3801, %v3800
    %v3805 = vpack.c.b16 %v3803, %v3802
    %v3810 = vunpack.c.l.b16 %v3733
    %v3811 = vunpack.c.l.b16 %v3734
    %v3812 = vunpack.c.l.b16 %v3735
    %v3813 = vunpack.c.l.b16 %v3736
    %v3814 = vpack.c.b16 %v3811, %v3810
    %v3815 = vpack.c.b16 %v3813, %v3812
    %v3817 = vsel %vm405, %v3804, 0
    %v3820 = vsel %vm405, %v3805, 0
    %v3823 = vsel %vm405, %v3814, 0
    %v3826 = vsel %vm405, %v3815, 0
    %3828 = vmatpush.bf16.xpose.msra.mxu0 0
    %3829 = vmatpush.bf16.xpose.msra.mxu0 0
    %3830 = vmatpush.bf16.xpose.msra.mxu0 0
    %3831 = vmatpush.bf16.xpose.msra.mxu0 0
    %3832 = vmatpush.bf16.xpose.msra.mxu0 0
    %3833 = vmatpush.bf16.xpose.msra.mxu0 0
    %3834 = vmatpush.bf16.xpose.msra.mxu0 %v3826
    %3835 = vmatpush.bf16.xpose.msra.mxu0 %v3823
    %3836 = vmatmul.bf16.gmra.mxu0 %v3817
    %v3837 = vpop.f32.mrf.mxu0
    %v3838 = vadd.f32 0.0, %v3837
    %v3839 = vpop.f32.mrf.mxu0
    %v3840 = vadd.f32 0.0, %v3839
    %3841 = vmatmul.bf16.gmra.mxu0 %v3820
    %v3842 = vpop.f32.mrf.mxu0
    %v3843 = vadd.f32 0.0, %v3842
    %v3844 = vpop.f32.mrf.mxu0
    %v3845 = vadd.f32 0.0, %v3844
    %3846 = vdwg.mxu0
    %v3847 = vsel %vm488, %v3787, -inf
    %3848 = vmax.xlane.f32.xlu0 %v3847
    %v3849 = vpop.xlane.xlu0 %3848
    %v3850 = vsel %vm488, %v3789, -inf
    %3851 = vmax.xlane.f32.xlu0 %v3850
    %v3852 = vpop.xlane.xlu0 %3851
    %v3853 = vsel %vm488, %v3792, -inf
    %3854 = vmax.xlane.f32.xlu0 %v3853
    %v3855 = vpop.xlane.xlu0 %3854
    %v3856 = vsel %vm488, %v3794, -inf
    %3857 = vmax.xlane.f32.xlu0 %v3856
    %v3858 = vpop.xlane.xlu0 %3857
    %v3859 = vsel %vm488, %v3838, -inf
    %3860 = vmax.xlane.f32.xlu0 %v3859
    %v3861 = vpop.xlane.xlu0 %3860
    %v3862 = vsel %vm488, %v3840, -inf
    %3863 = vmax.xlane.f32.xlu0 %v3862
    %v3864 = vpop.xlane.xlu0 %3863
    %v3865 = vsel %vm488, %v3843, -inf
    %3866 = vmax.xlane.f32.xlu0 %v3865
    %v3867 = vpop.xlane.xlu0 %3866
    %v3868 = vsel %vm488, %v3845, -inf
    %3869 = vmax.xlane.f32.xlu0 %v3868
    %v3870 = vpop.xlane.xlu0 %3869
    %v3871 = vsub.f32 %v3787, %v3849
    %v3872 = vsub.f32 %v3789, %v3852
    %v3873 = vsub.f32 %v3792, %v3855
    %v3874 = vsub.f32 %v3794, %v3858
    %v3875 = vsub.f32 %v3838, %v3861
    %v3876 = vsub.f32 %v3840, %v3864
    %v3877 = vsub.f32 %v3843, %v3867
    %v3878 = vsub.f32 %v3845, %v3870
    %v3879 = vmul.f32 %v3871, 1.442695
    %v3880 = vpow.pop %v3879
    %v3881 = vmul.f32 %v3872, 1.442695
    %v3882 = vpow.pop %v3881
    %v3883 = vmul.f32 %v3873, 1.442695
    %v3884 = vpow.pop %v3883
    %v3885 = vmul.f32 %v3874, 1.442695
    %v3886 = vpow.pop %v3885
    %v3887 = vmul.f32 %v3875, 1.442695
    %v3888 = vpow.pop %v3887
    %v3889 = vmul.f32 %v3876, 1.442695
    %v3890 = vpow.pop %v3889
    %v3891 = vmul.f32 %v3877, 1.442695
    %v3892 = vpow.pop %v3891
    %v3893 = vmul.f32 %v3878, 1.442695
    %v3894 = vpow.pop %v3893
    %v3895 = vsel %vm488, %v3880, 0.0
    %3896 = vadd.xlane.f32.xlu0 %v3895
    %v3897 = vpop.xlane.xlu0 %3896
    %v3898 = vsel %vm488, %v3882, 0.0
    %3899 = vadd.xlane.f32.xlu0 %v3898
    %v3900 = vpop.xlane.xlu0 %3899
    %v3901 = vsel %vm488, %v3884, 0.0
    %3902 = vadd.xlane.f32.xlu0 %v3901
    %v3903 = vpop.xlane.xlu0 %3902
    %v3904 = vsel %vm488, %v3886, 0.0
    %3905 = vadd.xlane.f32.xlu0 %v3904
    %v3906 = vpop.xlane.xlu0 %3905
    %v3907 = vsel %vm488, %v3888, 0.0
    %3908 = vadd.xlane.f32.xlu0 %v3907
    %v3909 = vpop.xlane.xlu0 %3908
    %v3910 = vsel %vm488, %v3890, 0.0
    %3911 = vadd.xlane.f32.xlu0 %v3910
    %v3912 = vpop.xlane.xlu0 %3911
    %v3913 = vsel %vm488, %v3892, 0.0
    %3914 = vadd.xlane.f32.xlu0 %v3913
    %v3915 = vpop.xlane.xlu0 %3914
    %v3916 = vsel %vm488, %v3894, 0.0
    %3917 = vadd.xlane.f32.xlu0 %v3916
    %v3918 = vpop.xlane.xlu0 %3917
    %v3919 = vrcp.pop %v3897
    %v3920 = vrcp.pop %v3900
    %v3921 = vrcp.pop %v3903
    %v3922 = vrcp.pop %v3906
    %v3923 = vrcp.pop %v3909
    %v3924 = vrcp.pop %v3912
    %v3925 = vrcp.pop %v3915
    %v3926 = vrcp.pop %v3918
    %v3927 = vmul.f32 %v3880, %v3919
    %v3928 = vmul.f32 %v3882, %v3920
    %v3929 = vmul.f32 %v3884, %v3921
    %v3930 = vmul.f32 %v3886, %v3922
    %v3931 = vmul.f32 %v3888, %v3923
    %v3932 = vmul.f32 %v3890, %v3924
    %v3933 = vmul.f32 %v3892, %v3925
    %v3934 = vmul.f32 %v3894, %v3926
    %v3935 = vpack.c.bf16 %v3927, %v3927
    %v3936 = vpack.c.bf16 %v3928, %v3928
    %v3937 = vpack.c.bf16 %v3929, %v3929
    %v3938 = vpack.c.bf16 %v3930, %v3930
    %v3939 = vpack.c.bf16 %v3931, %v3931
    %v3940 = vpack.c.bf16 %v3932, %v3932
    %v3941 = vpack.c.bf16 %v3933, %v3933
    %v3942 = vpack.c.bf16 %v3934, %v3934
    %v3947 = vunpack.c.l.b16 %v3935
    %v3948 = vunpack.c.l.b16 %v3936
    %v3949 = vunpack.c.l.b16 %v3937
    %v3950 = vunpack.c.l.b16 %v3938
    %v3951 = vpack.c.b16 %v3948, %v3947
    %v3952 = vpack.c.b16 %v3950, %v3949
    %v3957 = vunpack.c.l.b16 %v3737
    %v3958 = vunpack.c.l.b16 %v3738
    %v3959 = vunpack.c.l.b16 %v3739
    %v3960 = vunpack.c.l.b16 %v3740
    %v3961 = vpack.c.b16 %v3958, %v3957
    %v3962 = vpack.c.b16 %v3960, %v3959
    %v3966 = vsel %vm488, %v3951, 0
    %v3969 = vsel %vm488, %v3952, 0
    %3971 = vmatpush.bf16.msra.mxu0 0
    %3972 = vmatpush.bf16.msra.mxu0 0
    %3973 = vmatpush.bf16.msra.mxu0 0
    %3974 = vmatpush.bf16.msra.mxu0 0
    %3975 = vmatpush.bf16.msra.mxu0 0
    %3976 = vmatpush.bf16.msra.mxu0 0
    %3977 = vmatpush.bf16.msra.mxu0 %v3962
    %3978 = vmatpush.bf16.msra.mxu0 %v3961
    %3979 = vmatmul.bf16.gmra.mxu0 %v3966
    %v3980 = vpop.f32.mrf.mxu0
    %v3981 = vadd.f32 0.0, %v3980
    %v3982 = vpop.f32.mrf.mxu0
    %v3983 = vadd.f32 0.0, %v3982
    %3984 = vmatmul.bf16.gmra.mxu0 %v3969
    %v3985 = vpop.f32.mrf.mxu0
    %v3986 = vadd.f32 0.0, %v3985
    %v3987 = vpop.f32.mrf.mxu0
    %v3988 = vadd.f32 0.0, %v3987
    %3989 = vdwg.mxu0
    %v3994 = vunpack.c.l.b16 %v3939
    %v3995 = vunpack.c.l.b16 %v3940
    %v3996 = vunpack.c.l.b16 %v3941
    %v3997 = vunpack.c.l.b16 %v3942
    %v3998 = vpack.c.b16 %v3995, %v3994
    %v3999 = vpack.c.b16 %v3997, %v3996
    %v4004 = vunpack.c.l.b16 %v3741
    %v4005 = vunpack.c.l.b16 %v3742
    %v4006 = vunpack.c.l.b16 %v3743
    %v4007 = vunpack.c.l.b16 %v3744
    %v4008 = vpack.c.b16 %v4005, %v4004
    %v4009 = vpack.c.b16 %v4007, %v4006
    %v4013 = vsel %vm488, %v3998, 0
    %v4016 = vsel %vm488, %v3999, 0
    %4018 = vmatpush.bf16.msra.mxu0 0
    %4019 = vmatpush.bf16.msra.mxu0 0
    %4020 = vmatpush.bf16.msra.mxu0 0
    %4021 = vmatpush.bf16.msra.mxu0 0
    %4022 = vmatpush.bf16.msra.mxu0 0
    %4023 = vmatpush.bf16.msra.mxu0 0
    %4024 = vmatpush.bf16.msra.mxu0 %v4009
    %4025 = vmatpush.bf16.msra.mxu0 %v4008
    %4026 = vmatmul.bf16.gmra.mxu0 %v4013
    %v4027 = vpop.f32.mrf.mxu0
    %v4028 = vadd.f32 0.0, %v4027
    %v4029 = vpop.f32.mrf.mxu0
    %v4030 = vadd.f32 0.0, %v4029
    %4031 = vmatmul.bf16.gmra.mxu0 %v4016
    %v4032 = vpop.f32.mrf.mxu0
    %v4033 = vadd.f32 0.0, %v4032
    %v4034 = vpop.f32.mrf.mxu0
    %v4035 = vadd.f32 0.0, %v4034
    %4036 = vdwg.mxu0
    %v4037 = vpack.c.bf16 %v3983, %v3981
    %v4038 = vpack.c.bf16 %v3988, %v3986
    %v4039 = vpack.c.bf16 %v4030, %v4028
    %v4040 = vpack.c.bf16 %v4035, %v4033
    %s4041 = scalar_lea.vmem %s7, 40
    %v4042 = vld [vmem:[%s4041] sm:$0xf]
    %v4043 = vld [vmem:[%s4041 + $0x4] sm:$0xf]
    %v4046 = vunpack.c.l.b16 %v4042
    %v4047 = vunpack.c.l.b16 %v4043
    %v4048 = vpack.c.b16 %v4047, %v4046
    %v4051 = vsel %vm405, %v4037, 0
    %v4054 = vsel %vm405, %v4038, 0
    %v4057 = vsel %vm405, %v4039, 0
    %v4060 = vsel %vm405, %v4040, 0
    %4062 = vmatpush.bf16.msra.mxu0 0
    %4063 = vmatpush.bf16.msra.mxu0 0
    %4064 = vmatpush.bf16.msra.mxu0 0
    %4065 = vmatpush.bf16.msra.mxu0 0
    %4066 = vmatpush.bf16.msra.mxu0 0
    %4067 = vmatpush.bf16.msra.mxu0 0
    %4068 = vmatpush.bf16.msra.mxu0 0
    %4069 = vmatpush.bf16.msra.mxu0 %v4048
    %4070 = vmatmul.bf16.gmra.mxu0 %v4051
    %v4071 = vpop.f32.mrf.mxu0
    %v4072 = vadd.f32 0.0, %v4071
    %v4073 = vpop.f32.mrf.mxu0
    %v4074 = vadd.f32 0.0, %v4073
    %4075 = vmatmul.bf16.gmra.mxu0 %v4054
    %v4076 = vpop.f32.mrf.mxu0
    %v4077 = vadd.f32 0.0, %v4076
    %v4078 = vpop.f32.mrf.mxu0
    %v4079 = vadd.f32 0.0, %v4078
    %4080 = vmatmul.bf16.gmra.mxu0 %v4057
    %v4081 = vpop.f32.mrf.mxu0
    %v4082 = vadd.f32 0.0, %v4081
    %v4083 = vpop.f32.mrf.mxu0
    %v4084 = vadd.f32 0.0, %v4083
    %4085 = vmatmul.bf16.gmra.mxu0 %v4060
    %v4086 = vpop.f32.mrf.mxu0
    %v4087 = vadd.f32 0.0, %v4086
    %v4088 = vpop.f32.mrf.mxu0
    %v4089 = vadd.f32 0.0, %v4088
    %4090 = vdwg.mxu0
    %v4091 = vadd.f32 %v3416, %v4072
    %v4092 = vadd.f32 %v3417, %v4074
    %v4093 = vadd.f32 %v3418, %v4077
    %v4094 = vadd.f32 %v3419, %v4079
    %v4095 = vadd.f32 %v3420, %v4082
    %v4096 = vadd.f32 %v3421, %v4084
    %v4097 = vadd.f32 %v3422, %v4087
    %v4098 = vadd.f32 %v3423, %v4089
    %s4099 = scalar_lea.vmem %s1, 384
    %v4100 = vld [vmem:[%s4099] sm:$0xf]
    %v4101 = vld [vmem:[%s4099 + $0x4] sm:$0xf]
    %v4102 = vld [vmem:[%s4099 + $0x8] sm:$0xf]
    %v4103 = vld [vmem:[%s4099 + $0xc] sm:$0xf]
    %v4104 = vld [vmem:[%s4099 + $0x10] sm:$0xf]
    %v4105 = vld [vmem:[%s4099 + $0x14] sm:$0xf]
    %v4106 = vld [vmem:[%s4099 + $0x18] sm:$0xf]
    %v4107 = vld [vmem:[%s4099 + $0x1c] sm:$0xf]
    %v4108 = vld [vmem:[%s4099 + $0x20] sm:$0xf]
    %v4109 = vld [vmem:[%s4099 + $0x24] sm:$0xf]
    %v4110 = vld [vmem:[%s4099 + $0x28] sm:$0xf]
    %v4111 = vld [vmem:[%s4099 + $0x2c] sm:$0xf]
    %v4112 = vld [vmem:[%s4099 + $0x30] sm:$0xf]
    %v4113 = vld [vmem:[%s4099 + $0x34] sm:$0xf]
    %v4114 = vld [vmem:[%s4099 + $0x38] sm:$0xf]
    %v4115 = vld [vmem:[%s4099 + $0x3c] sm:$0xf]
    %s4116 = scalar_lea.vmem %s2, 6
    %v4117 = vld [vmem:[%s4116] sm:$0x1]
    %v4119 = vperm.slane %v4117, 0
    %v4137 = vunpack.c.l.b16 %v4100
    %v4138 = vunpack.c.l.b16 %v4101
    %v4139 = vunpack.c.l.b16 %v4102
    %v4140 = vunpack.c.l.b16 %v4103
    %v4141 = vunpack.c.l.b16 %v4104
    %v4142 = vunpack.c.l.b16 %v4105
    %v4143 = vunpack.c.l.b16 %v4106
    %v4144 = vunpack.c.l.b16 %v4107
    %v4145 = vunpack.c.l.b16 %v4108
    %v4146 = vunpack.c.l.b16 %v4109
    %v4147 = vunpack.c.l.b16 %v4110
    %v4148 = vunpack.c.l.b16 %v4111
    %v4149 = vunpack.c.l.b16 %v4112
    %v4150 = vunpack.c.l.b16 %v4113
    %v4151 = vunpack.c.l.b16 %v4114
    %v4152 = vunpack.c.l.b16 %v4115
    %v4153 = vpack.c.b16 %v4138, %v4137
    %v4154 = vpack.c.b16 %v4140, %v4139
    %v4155 = vpack.c.b16 %v4142, %v4141
    %v4156 = vpack.c.b16 %v4144, %v4143
    %v4157 = vpack.c.b16 %v4146, %v4145
    %v4158 = vpack.c.b16 %v4148, %v4147
    %v4159 = vpack.c.b16 %v4150, %v4149
    %v4160 = vpack.c.b16 %v4152, %v4151
    %4169 = vmatpush.bf16.msra.mxu0 %v4160
    %4170 = vmatpush.bf16.msra.mxu0 %v4159
    %4171 = vmatpush.bf16.msra.mxu0 %v4158
    %4172 = vmatpush.bf16.msra.mxu0 %v4157
    %4173 = vmatpush.bf16.msra.mxu0 %v4156
    %4174 = vmatpush.bf16.msra.mxu0 %v4155
    %4175 = vmatpush.bf16.msra.mxu0 %v4154
    %4176 = vmatpush.bf16.msra.mxu0 %v4153
    %4177 = vmatmul.bf16.gmra.mxu0 %v66
    %v4178 = vpop.f32.mrf.mxu0
    %v4179 = vadd.f32 %v4119, %v4178
    %v4180 = vpop.f32.mrf.mxu0
    %v4181 = vadd.f32 %v4119, %v4180
    %4182 = vmatmul.bf16.gmra.mxu0 %v67
    %v4183 = vpop.f32.mrf.mxu0
    %v4184 = vadd.f32 %v4119, %v4183
    %v4185 = vpop.f32.mrf.mxu0
    %v4186 = vadd.f32 %v4119, %v4185
    %4187 = vmatmul.bf16.gmra.mxu0 %v68
    %v4188 = vpop.f32.mrf.mxu0
    %v4189 = vadd.f32 %v4119, %v4188
    %v4190 = vpop.f32.mrf.mxu0
    %v4191 = vadd.f32 %v4119, %v4190
    %4192 = vmatmul.bf16.gmra.mxu0 %v69
    %v4193 = vpop.f32.mrf.mxu0
    %v4194 = vadd.f32 %v4119, %v4193
    %v4195 = vpop.f32.mrf.mxu0
    %v4196 = vadd.f32 %v4119, %v4195
    %4197 = vdwg.mxu0
    %s4198 = scalar_lea.vmem %s3, 384
    %v4199 = vld [vmem:[%s4198] sm:$0xf]
    %v4200 = vld [vmem:[%s4198 + $0x4] sm:$0xf]
    %v4201 = vld [vmem:[%s4198 + $0x8] sm:$0xf]
    %v4202 = vld [vmem:[%s4198 + $0xc] sm:$0xf]
    %v4203 = vld [vmem:[%s4198 + $0x10] sm:$0xf]
    %v4204 = vld [vmem:[%s4198 + $0x14] sm:$0xf]
    %v4205 = vld [vmem:[%s4198 + $0x18] sm:$0xf]
    %v4206 = vld [vmem:[%s4198 + $0x1c] sm:$0xf]
    %v4207 = vld [vmem:[%s4198 + $0x20] sm:$0xf]
    %v4208 = vld [vmem:[%s4198 + $0x24] sm:$0xf]
    %v4209 = vld [vmem:[%s4198 + $0x28] sm:$0xf]
    %v4210 = vld [vmem:[%s4198 + $0x2c] sm:$0xf]
    %v4211 = vld [vmem:[%s4198 + $0x30] sm:$0xf]
    %v4212 = vld [vmem:[%s4198 + $0x34] sm:$0xf]
    %v4213 = vld [vmem:[%s4198 + $0x38] sm:$0xf]
    %v4214 = vld [vmem:[%s4198 + $0x3c] sm:$0xf]
    %s4215 = scalar_lea.vmem %s4, 6
    %v4216 = vld [vmem:[%s4215] sm:$0x1]
    %v4218 = vperm.slane %v4216, 0
    %v4236 = vunpack.c.l.b16 %v4199
    %v4237 = vunpack.c.l.b16 %v4200
    %v4238 = vunpack.c.l.b16 %v4201
    %v4239 = vunpack.c.l.b16 %v4202
    %v4240 = vunpack.c.l.b16 %v4203
    %v4241 = vunpack.c.l.b16 %v4204
    %v4242 = vunpack.c.l.b16 %v4205
    %v4243 = vunpack.c.l.b16 %v4206
    %v4244 = vunpack.c.l.b16 %v4207
    %v4245 = vunpack.c.l.b16 %v4208
    %v4246 = vunpack.c.l.b16 %v4209
    %v4247 = vunpack.c.l.b16 %v4210
    %v4248 = vunpack.c.l.b16 %v4211
    %v4249 = vunpack.c.l.b16 %v4212
    %v4250 = vunpack.c.l.b16 %v4213
    %v4251 = vunpack.c.l.b16 %v4214
    %v4252 = vpack.c.b16 %v4237, %v4236
    %v4253 = vpack.c.b16 %v4239, %v4238
    %v4254 = vpack.c.b16 %v4241, %v4240
    %v4255 = vpack.c.b16 %v4243, %v4242
    %v4256 = vpack.c.b16 %v4245, %v4244
    %v4257 = vpack.c.b16 %v4247, %v4246
    %v4258 = vpack.c.b16 %v4249, %v4248
    %v4259 = vpack.c.b16 %v4251, %v4250
    %4268 = vmatpush.bf16.msra.mxu0 %v4259
    %4269 = vmatpush.bf16.msra.mxu0 %v4258
    %4270 = vmatpush.bf16.msra.mxu0 %v4257
    %4271 = vmatpush.bf16.msra.mxu0 %v4256
    %4272 = vmatpush.bf16.msra.mxu0 %v4255
    %4273 = vmatpush.bf16.msra.mxu0 %v4254
    %4274 = vmatpush.bf16.msra.mxu0 %v4253
    %4275 = vmatpush.bf16.msra.mxu0 %v4252
    %4276 = vmatmul.bf16.gmra.mxu0 %v66
    %v4277 = vpop.f32.mrf.mxu0
    %v4278 = vadd.f32 %v4218, %v4277
    %v4279 = vpop.f32.mrf.mxu0
    %v4280 = vadd.f32 %v4218, %v4279
    %4281 = vmatmul.bf16.gmra.mxu0 %v67
    %v4282 = vpop.f32.mrf.mxu0
    %v4283 = vadd.f32 %v4218, %v4282
    %v4284 = vpop.f32.mrf.mxu0
    %v4285 = vadd.f32 %v4218, %v4284
    %4286 = vmatmul.bf16.gmra.mxu0 %v68
    %v4287 = vpop.f32.mrf.mxu0
    %v4288 = vadd.f32 %v4218, %v4287
    %v4289 = vpop.f32.mrf.mxu0
    %v4290 = vadd.f32 %v4218, %v4289
    %4291 = vmatmul.bf16.gmra.mxu0 %v69
    %v4292 = vpop.f32.mrf.mxu0
    %v4293 = vadd.f32 %v4218, %v4292
    %v4294 = vpop.f32.mrf.mxu0
    %v4295 = vadd.f32 %v4218, %v4294
    %4296 = vdwg.mxu0
    %s4297 = scalar_lea.vmem %s5, 384
    %v4298 = vld [vmem:[%s4297] sm:$0xf]
    %v4299 = vld [vmem:[%s4297 + $0x4] sm:$0xf]
    %v4300 = vld [vmem:[%s4297 + $0x8] sm:$0xf]
    %v4301 = vld [vmem:[%s4297 + $0xc] sm:$0xf]
    %v4302 = vld [vmem:[%s4297 + $0x10] sm:$0xf]
    %v4303 = vld [vmem:[%s4297 + $0x14] sm:$0xf]
    %v4304 = vld [vmem:[%s4297 + $0x18] sm:$0xf]
    %v4305 = vld [vmem:[%s4297 + $0x1c] sm:$0xf]
    %v4306 = vld [vmem:[%s4297 + $0x20] sm:$0xf]
    %v4307 = vld [vmem:[%s4297 + $0x24] sm:$0xf]
    %v4308 = vld [vmem:[%s4297 + $0x28] sm:$0xf]
    %v4309 = vld [vmem:[%s4297 + $0x2c] sm:$0xf]
    %v4310 = vld [vmem:[%s4297 + $0x30] sm:$0xf]
    %v4311 = vld [vmem:[%s4297 + $0x34] sm:$0xf]
    %v4312 = vld [vmem:[%s4297 + $0x38] sm:$0xf]
    %v4313 = vld [vmem:[%s4297 + $0x3c] sm:$0xf]
    %s4314 = scalar_lea.vmem %s6, 6
    %v4315 = vld [vmem:[%s4314] sm:$0x1]
    %v4317 = vperm.slane %v4315, 0
    %v4335 = vunpack.c.l.b16 %v4298
    %v4336 = vunpack.c.l.b16 %v4299
    %v4337 = vunpack.c.l.b16 %v4300
    %v4338 = vunpack.c.l.b16 %v4301
    %v4339 = vunpack.c.l.b16 %v4302
    %v4340 = vunpack.c.l.b16 %v4303
    %v4341 = vunpack.c.l.b16 %v4304
    %v4342 = vunpack.c.l.b16 %v4305
    %v4343 = vunpack.c.l.b16 %v4306
    %v4344 = vunpack.c.l.b16 %v4307
    %v4345 = vunpack.c.l.b16 %v4308
    %v4346 = vunpack.c.l.b16 %v4309
    %v4347 = vunpack.c.l.b16 %v4310
    %v4348 = vunpack.c.l.b16 %v4311
    %v4349 = vunpack.c.l.b16 %v4312
    %v4350 = vunpack.c.l.b16 %v4313
    %v4351 = vpack.c.b16 %v4336, %v4335
    %v4352 = vpack.c.b16 %v4338, %v4337
    %v4353 = vpack.c.b16 %v4340, %v4339
    %v4354 = vpack.c.b16 %v4342, %v4341
    %v4355 = vpack.c.b16 %v4344, %v4343
    %v4356 = vpack.c.b16 %v4346, %v4345
    %v4357 = vpack.c.b16 %v4348, %v4347
    %v4358 = vpack.c.b16 %v4350, %v4349
    %4367 = vmatpush.bf16.msra.mxu0 %v4358
    %4368 = vmatpush.bf16.msra.mxu0 %v4357
    %4369 = vmatpush.bf16.msra.mxu0 %v4356
    %4370 = vmatpush.bf16.msra.mxu0 %v4355
    %4371 = vmatpush.bf16.msra.mxu0 %v4354
    %4372 = vmatpush.bf16.msra.mxu0 %v4353
    %4373 = vmatpush.bf16.msra.mxu0 %v4352
    %4374 = vmatpush.bf16.msra.mxu0 %v4351
    %4375 = vmatmul.bf16.gmra.mxu0 %v66
    %v4376 = vpop.f32.mrf.mxu0
    %v4377 = vadd.f32 %v4317, %v4376
    %v4378 = vpop.f32.mrf.mxu0
    %v4379 = vadd.f32 %v4317, %v4378
    %4380 = vmatmul.bf16.gmra.mxu0 %v67
    %v4381 = vpop.f32.mrf.mxu0
    %v4382 = vadd.f32 %v4317, %v4381
    %v4383 = vpop.f32.mrf.mxu0
    %v4384 = vadd.f32 %v4317, %v4383
    %4385 = vmatmul.bf16.gmra.mxu0 %v68
    %v4386 = vpop.f32.mrf.mxu0
    %v4387 = vadd.f32 %v4317, %v4386
    %v4388 = vpop.f32.mrf.mxu0
    %v4389 = vadd.f32 %v4317, %v4388
    %4390 = vmatmul.bf16.gmra.mxu0 %v69
    %v4391 = vpop.f32.mrf.mxu0
    %v4392 = vadd.f32 %v4317, %v4391
    %v4393 = vpop.f32.mrf.mxu0
    %v4394 = vadd.f32 %v4317, %v4393
    %4395 = vdwg.mxu0
    %v4396 = vpack.c.bf16 %v4179, %v4179
    %v4397 = vpack.c.bf16 %v4181, %v4181
    %v4398 = vpack.c.bf16 %v4184, %v4184
    %v4399 = vpack.c.bf16 %v4186, %v4186
    %v4400 = vpack.c.bf16 %v4189, %v4189
    %v4401 = vpack.c.bf16 %v4191, %v4191
    %v4402 = vpack.c.bf16 %v4194, %v4194
    %v4403 = vpack.c.bf16 %v4196, %v4196
    %v4404 = vpack.c.bf16 %v4278, %v4278
    %v4405 = vpack.c.bf16 %v4280, %v4280
    %v4406 = vpack.c.bf16 %v4283, %v4283
    %v4407 = vpack.c.bf16 %v4285, %v4285
    %v4408 = vpack.c.bf16 %v4288, %v4288
    %v4409 = vpack.c.bf16 %v4290, %v4290
    %v4410 = vpack.c.bf16 %v4293, %v4293
    %v4411 = vpack.c.bf16 %v4295, %v4295
    %v4412 = vpack.c.bf16 %v4377, %v4377
    %v4413 = vpack.c.bf16 %v4379, %v4379
    %v4414 = vpack.c.bf16 %v4382, %v4382
    %v4415 = vpack.c.bf16 %v4384, %v4384
    %v4416 = vpack.c.bf16 %v4387, %v4387
    %v4417 = vpack.c.bf16 %v4389, %v4389
    %v4418 = vpack.c.bf16 %v4392, %v4392
    %v4419 = vpack.c.bf16 %v4394, %v4394
    %v4424 = vunpack.c.l.b16 %v4396
    %v4425 = vunpack.c.l.b16 %v4397
    %v4426 = vunpack.c.l.b16 %v4398
    %v4427 = vunpack.c.l.b16 %v4399
    %v4428 = vpack.c.b16 %v4425, %v4424
    %v4429 = vpack.c.b16 %v4427, %v4426
    %v4434 = vunpack.c.l.b16 %v4404
    %v4435 = vunpack.c.l.b16 %v4405
    %v4436 = vunpack.c.l.b16 %v4406
    %v4437 = vunpack.c.l.b16 %v4407
    %v4438 = vpack.c.b16 %v4435, %v4434
    %v4439 = vpack.c.b16 %v4437, %v4436
    %v4441 = vsel %vm405, %v4428, 0
    %v4444 = vsel %vm405, %v4429, 0
    %v4447 = vsel %vm405, %v4438, 0
    %v4450 = vsel %vm405, %v4439, 0
    %4452 = vmatpush.bf16.xpose.msra.mxu0 0
    %4453 = vmatpush.bf16.xpose.msra.mxu0 0
    %4454 = vmatpush.bf16.xpose.msra.mxu0 0
    %4455 = vmatpush.bf16.xpose.msra.mxu0 0
    %4456 = vmatpush.bf16.xpose.msra.mxu0 0
    %4457 = vmatpush.bf16.xpose.msra.mxu0 0
    %4458 = vmatpush.bf16.xpose.msra.mxu0 %v4450
    %4459 = vmatpush.bf16.xpose.msra.mxu0 %v4447
    %4460 = vmatmul.bf16.gmra.mxu0 %v4441
    %v4461 = vpop.f32.mrf.mxu0
    %v4462 = vadd.f32 0.0, %v4461
    %v4463 = vpop.f32.mrf.mxu0
    %v4464 = vadd.f32 0.0, %v4463
    %4465 = vmatmul.bf16.gmra.mxu0 %v4444
    %v4466 = vpop.f32.mrf.mxu0
    %v4467 = vadd.f32 0.0, %v4466
    %v4468 = vpop.f32.mrf.mxu0
    %v4469 = vadd.f32 0.0, %v4468
    %4470 = vdwg.mxu0
    %v4475 = vunpack.c.l.b16 %v4400
    %v4476 = vunpack.c.l.b16 %v4401
    %v4477 = vunpack.c.l.b16 %v4402
    %v4478 = vunpack.c.l.b16 %v4403
    %v4479 = vpack.c.b16 %v4476, %v4475
    %v4480 = vpack.c.b16 %v4478, %v4477
    %v4485 = vunpack.c.l.b16 %v4408
    %v4486 = vunpack.c.l.b16 %v4409
    %v4487 = vunpack.c.l.b16 %v4410
    %v4488 = vunpack.c.l.b16 %v4411
    %v4489 = vpack.c.b16 %v4486, %v4485
    %v4490 = vpack.c.b16 %v4488, %v4487
    %v4492 = vsel %vm405, %v4479, 0
    %v4495 = vsel %vm405, %v4480, 0
    %v4498 = vsel %vm405, %v4489, 0
    %v4501 = vsel %vm405, %v4490, 0
    %4503 = vmatpush.bf16.xpose.msra.mxu0 0
    %4504 = vmatpush.bf16.xpose.msra.mxu0 0
    %4505 = vmatpush.bf16.xpose.msra.mxu0 0
    %4506 = vmatpush.bf16.xpose.msra.mxu0 0
    %4507 = vmatpush.bf16.xpose.msra.mxu0 0
    %4508 = vmatpush.bf16.xpose.msra.mxu0 0
    %4509 = vmatpush.bf16.xpose.msra.mxu0 %v4501
    %4510 = vmatpush.bf16.xpose.msra.mxu0 %v4498
    %4511 = vmatmul.bf16.gmra.mxu0 %v4492
    %v4512 = vpop.f32.mrf.mxu0
    %v4513 = vadd.f32 0.0, %v4512
    %v4514 = vpop.f32.mrf.mxu0
    %v4515 = vadd.f32 0.0, %v4514
    %4516 = vmatmul.bf16.gmra.mxu0 %v4495
    %v4517 = vpop.f32.mrf.mxu0
    %v4518 = vadd.f32 0.0, %v4517
    %v4519 = vpop.f32.mrf.mxu0
    %v4520 = vadd.f32 0.0, %v4519
    %4521 = vdwg.mxu0
    %v4522 = vsel %vm488, %v4462, -inf
    %4523 = vmax.xlane.f32.xlu0 %v4522
    %v4524 = vpop.xlane.xlu0 %4523
    %v4525 = vsel %vm488, %v4464, -inf
    %4526 = vmax.xlane.f32.xlu0 %v4525
    %v4527 = vpop.xlane.xlu0 %4526
    %v4528 = vsel %vm488, %v4467, -inf
    %4529 = vmax.xlane.f32.xlu0 %v4528
    %v4530 = vpop.xlane.xlu0 %4529
    %v4531 = vsel %vm488, %v4469, -inf
    %4532 = vmax.xlane.f32.xlu0 %v4531
    %v4533 = vpop.xlane.xlu0 %4532
    %v4534 = vsel %vm488, %v4513, -inf
    %4535 = vmax.xlane.f32.xlu0 %v4534
    %v4536 = vpop.xlane.xlu0 %4535
    %v4537 = vsel %vm488, %v4515, -inf
    %4538 = vmax.xlane.f32.xlu0 %v4537
    %v4539 = vpop.xlane.xlu0 %4538
    %v4540 = vsel %vm488, %v4518, -inf
    %4541 = vmax.xlane.f32.xlu0 %v4540
    %v4542 = vpop.xlane.xlu0 %4541
    %v4543 = vsel %vm488, %v4520, -inf
    %4544 = vmax.xlane.f32.xlu0 %v4543
    %v4545 = vpop.xlane.xlu0 %4544
    %v4546 = vsub.f32 %v4462, %v4524
    %v4547 = vsub.f32 %v4464, %v4527
    %v4548 = vsub.f32 %v4467, %v4530
    %v4549 = vsub.f32 %v4469, %v4533
    %v4550 = vsub.f32 %v4513, %v4536
    %v4551 = vsub.f32 %v4515, %v4539
    %v4552 = vsub.f32 %v4518, %v4542
    %v4553 = vsub.f32 %v4520, %v4545
    %v4554 = vmul.f32 %v4546, 1.442695
    %v4555 = vpow.pop %v4554
    %v4556 = vmul.f32 %v4547, 1.442695
    %v4557 = vpow.pop %v4556
    %v4558 = vmul.f32 %v4548, 1.442695
    %v4559 = vpow.pop %v4558
    %v4560 = vmul.f32 %v4549, 1.442695
    %v4561 = vpow.pop %v4560
    %v4562 = vmul.f32 %v4550, 1.442695
    %v4563 = vpow.pop %v4562
    %v4564 = vmul.f32 %v4551, 1.442695
    %v4565 = vpow.pop %v4564
    %v4566 = vmul.f32 %v4552, 1.442695
    %v4567 = vpow.pop %v4566
    %v4568 = vmul.f32 %v4553, 1.442695
    %v4569 = vpow.pop %v4568
    %v4570 = vsel %vm488, %v4555, 0.0
    %4571 = vadd.xlane.f32.xlu0 %v4570
    %v4572 = vpop.xlane.xlu0 %4571
    %v4573 = vsel %vm488, %v4557, 0.0
    %4574 = vadd.xlane.f32.xlu0 %v4573
    %v4575 = vpop.xlane.xlu0 %4574
    %v4576 = vsel %vm488, %v4559, 0.0
    %4577 = vadd.xlane.f32.xlu0 %v4576
    %v4578 = vpop.xlane.xlu0 %4577
    %v4579 = vsel %vm488, %v4561, 0.0
    %4580 = vadd.xlane.f32.xlu0 %v4579
    %v4581 = vpop.xlane.xlu0 %4580
    %v4582 = vsel %vm488, %v4563, 0.0
    %4583 = vadd.xlane.f32.xlu0 %v4582
    %v4584 = vpop.xlane.xlu0 %4583
    %v4585 = vsel %vm488, %v4565, 0.0
    %4586 = vadd.xlane.f32.xlu0 %v4585
    %v4587 = vpop.xlane.xlu0 %4586
    %v4588 = vsel %vm488, %v4567, 0.0
    %4589 = vadd.xlane.f32.xlu0 %v4588
    %v4590 = vpop.xlane.xlu0 %4589
    %v4591 = vsel %vm488, %v4569, 0.0
    %4592 = vadd.xlane.f32.xlu0 %v4591
    %v4593 = vpop.xlane.xlu0 %4592
    %v4594 = vrcp.pop %v4572
    %v4595 = vrcp.pop %v4575
    %v4596 = vrcp.pop %v4578
    %v4597 = vrcp.pop %v4581
    %v4598 = vrcp.pop %v4584
    %v4599 = vrcp.pop %v4587
    %v4600 = vrcp.pop %v4590
    %v4601 = vrcp.pop %v4593
    %v4602 = vmul.f32 %v4555, %v4594
    %v4603 = vmul.f32 %v4557, %v4595
    %v4604 = vmul.f32 %v4559, %v4596
    %v4605 = vmul.f32 %v4561, %v4597
    %v4606 = vmul.f32 %v4563, %v4598
    %v4607 = vmul.f32 %v4565, %v4599
    %v4608 = vmul.f32 %v4567, %v4600
    %v4609 = vmul.f32 %v4569, %v4601
    %v4610 = vpack.c.bf16 %v4602, %v4602
    %v4611 = vpack.c.bf16 %v4603, %v4603
    %v4612 = vpack.c.bf16 %v4604, %v4604
    %v4613 = vpack.c.bf16 %v4605, %v4605
    %v4614 = vpack.c.bf16 %v4606, %v4606
    %v4615 = vpack.c.bf16 %v4607, %v4607
    %v4616 = vpack.c.bf16 %v4608, %v4608
    %v4617 = vpack.c.bf16 %v4609, %v4609
    %v4622 = vunpack.c.l.b16 %v4610
    %v4623 = vunpack.c.l.b16 %v4611
    %v4624 = vunpack.c.l.b16 %v4612
    %v4625 = vunpack.c.l.b16 %v4613
    %v4626 = vpack.c.b16 %v4623, %v4622
    %v4627 = vpack.c.b16 %v4625, %v4624
    %v4632 = vunpack.c.l.b16 %v4412
    %v4633 = vunpack.c.l.b16 %v4413
    %v4634 = vunpack.c.l.b16 %v4414
    %v4635 = vunpack.c.l.b16 %v4415
    %v4636 = vpack.c.b16 %v4633, %v4632
    %v4637 = vpack.c.b16 %v4635, %v4634
    %v4641 = vsel %vm488, %v4626, 0
    %v4644 = vsel %vm488, %v4627, 0
    %4646 = vmatpush.bf16.msra.mxu0 0
    %4647 = vmatpush.bf16.msra.mxu0 0
    %4648 = vmatpush.bf16.msra.mxu0 0
    %4649 = vmatpush.bf16.msra.mxu0 0
    %4650 = vmatpush.bf16.msra.mxu0 0
    %4651 = vmatpush.bf16.msra.mxu0 0
    %4652 = vmatpush.bf16.msra.mxu0 %v4637
    %4653 = vmatpush.bf16.msra.mxu0 %v4636
    %4654 = vmatmul.bf16.gmra.mxu0 %v4641
    %v4655 = vpop.f32.mrf.mxu0
    %v4656 = vadd.f32 0.0, %v4655
    %v4657 = vpop.f32.mrf.mxu0
    %v4658 = vadd.f32 0.0, %v4657
    %4659 = vmatmul.bf16.gmra.mxu0 %v4644
    %v4660 = vpop.f32.mrf.mxu0
    %v4661 = vadd.f32 0.0, %v4660
    %v4662 = vpop.f32.mrf.mxu0
    %v4663 = vadd.f32 0.0, %v4662
    %4664 = vdwg.mxu0
    %v4669 = vunpack.c.l.b16 %v4614
    %v4670 = vunpack.c.l.b16 %v4615
    %v4671 = vunpack.c.l.b16 %v4616
    %v4672 = vunpack.c.l.b16 %v4617
    %v4673 = vpack.c.b16 %v4670, %v4669
    %v4674 = vpack.c.b16 %v4672, %v4671
    %v4679 = vunpack.c.l.b16 %v4416
    %v4680 = vunpack.c.l.b16 %v4417
    %v4681 = vunpack.c.l.b16 %v4418
    %v4682 = vunpack.c.l.b16 %v4419
    %v4683 = vpack.c.b16 %v4680, %v4679
    %v4684 = vpack.c.b16 %v4682, %v4681
    %v4688 = vsel %vm488, %v4673, 0
    %v4691 = vsel %vm488, %v4674, 0
    %4693 = vmatpush.bf16.msra.mxu0 0
    %4694 = vmatpush.bf16.msra.mxu0 0
    %4695 = vmatpush.bf16.msra.mxu0 0
    %4696 = vmatpush.bf16.msra.mxu0 0
    %4697 = vmatpush.bf16.msra.mxu0 0
    %4698 = vmatpush.bf16.msra.mxu0 0
    %4699 = vmatpush.bf16.msra.mxu0 %v4684
    %4700 = vmatpush.bf16.msra.mxu0 %v4683
    %4701 = vmatmul.bf16.gmra.mxu0 %v4688
    %v4702 = vpop.f32.mrf.mxu0
    %v4703 = vadd.f32 0.0, %v4702
    %v4704 = vpop.f32.mrf.mxu0
    %v4705 = vadd.f32 0.0, %v4704
    %4706 = vmatmul.bf16.gmra.mxu0 %v4691
    %v4707 = vpop.f32.mrf.mxu0
    %v4708 = vadd.f32 0.0, %v4707
    %v4709 = vpop.f32.mrf.mxu0
    %v4710 = vadd.f32 0.0, %v4709
    %4711 = vdwg.mxu0
    %v4712 = vpack.c.bf16 %v4658, %v4656
    %v4713 = vpack.c.bf16 %v4663, %v4661
    %v4714 = vpack.c.bf16 %v4705, %v4703
    %v4715 = vpack.c.bf16 %v4710, %v4708
    %s4716 = scalar_lea.vmem %s7, 48
    %v4717 = vld [vmem:[%s4716] sm:$0xf]
    %v4718 = vld [vmem:[%s4716 + $0x4] sm:$0xf]
    %v4721 = vunpack.c.l.b16 %v4717
    %v4722 = vunpack.c.l.b16 %v4718
    %v4723 = vpack.c.b16 %v4722, %v4721
    %v4726 = vsel %vm405, %v4712, 0
    %v4729 = vsel %vm405, %v4713, 0
    %v4732 = vsel %vm405, %v4714, 0
    %v4735 = vsel %vm405, %v4715, 0
    %4737 = vmatpush.bf16.msra.mxu0 0
    %4738 = vmatpush.bf16.msra.mxu0 0
    %4739 = vmatpush.bf16.msra.mxu0 0
    %4740 = vmatpush.bf16.msra.mxu0 0
    %4741 = vmatpush.bf16.msra.mxu0 0
    %4742 = vmatpush.bf16.msra.mxu0 0
    %4743 = vmatpush.bf16.msra.mxu0 0
    %4744 = vmatpush.bf16.msra.mxu0 %v4723
    %4745 = vmatmul.bf16.gmra.mxu0 %v4726
    %v4746 = vpop.f32.mrf.mxu0
    %v4747 = vadd.f32 0.0, %v4746
    %v4748 = vpop.f32.mrf.mxu0
    %v4749 = vadd.f32 0.0, %v4748
    %4750 = vmatmul.bf16.gmra.mxu0 %v4729
    %v4751 = vpop.f32.mrf.mxu0
    %v4752 = vadd.f32 0.0, %v4751
    %v4753 = vpop.f32.mrf.mxu0
    %v4754 = vadd.f32 0.0, %v4753
    %4755 = vmatmul.bf16.gmra.mxu0 %v4732
    %v4756 = vpop.f32.mrf.mxu0
    %v4757 = vadd.f32 0.0, %v4756
    %v4758 = vpop.f32.mrf.mxu0
    %v4759 = vadd.f32 0.0, %v4758
    %4760 = vmatmul.bf16.gmra.mxu0 %v4735
    %v4761 = vpop.f32.mrf.mxu0
    %v4762 = vadd.f32 0.0, %v4761
    %v4763 = vpop.f32.mrf.mxu0
    %v4764 = vadd.f32 0.0, %v4763
    %4765 = vdwg.mxu0
    %v4766 = vadd.f32 %v4091, %v4747
    %v4767 = vadd.f32 %v4092, %v4749
    %v4768 = vadd.f32 %v4093, %v4752
    %v4769 = vadd.f32 %v4094, %v4754
    %v4770 = vadd.f32 %v4095, %v4757
    %v4771 = vadd.f32 %v4096, %v4759
    %v4772 = vadd.f32 %v4097, %v4762
    %v4773 = vadd.f32 %v4098, %v4764
    %s4774 = scalar_lea.vmem %s1, 448
    %v4775 = vld [vmem:[%s4774] sm:$0xf]
    %v4776 = vld [vmem:[%s4774 + $0x4] sm:$0xf]
    %v4777 = vld [vmem:[%s4774 + $0x8] sm:$0xf]
    %v4778 = vld [vmem:[%s4774 + $0xc] sm:$0xf]
    %v4779 = vld [vmem:[%s4774 + $0x10] sm:$0xf]
    %v4780 = vld [vmem:[%s4774 + $0x14] sm:$0xf]
    %v4781 = vld [vmem:[%s4774 + $0x18] sm:$0xf]
    %v4782 = vld [vmem:[%s4774 + $0x1c] sm:$0xf]
    %v4783 = vld [vmem:[%s4774 + $0x20] sm:$0xf]
    %v4784 = vld [vmem:[%s4774 + $0x24] sm:$0xf]
    %v4785 = vld [vmem:[%s4774 + $0x28] sm:$0xf]
    %v4786 = vld [vmem:[%s4774 + $0x2c] sm:$0xf]
    %v4787 = vld [vmem:[%s4774 + $0x30] sm:$0xf]
    %v4788 = vld [vmem:[%s4774 + $0x34] sm:$0xf]
    %v4789 = vld [vmem:[%s4774 + $0x38] sm:$0xf]
    %v4790 = vld [vmem:[%s4774 + $0x3c] sm:$0xf]
    %s4791 = scalar_lea.vmem %s2, 7
    %v4792 = vld [vmem:[%s4791] sm:$0x1]
    %v4794 = vperm.slane %v4792, 0
    %v4812 = vunpack.c.l.b16 %v4775
    %v4813 = vunpack.c.l.b16 %v4776
    %v4814 = vunpack.c.l.b16 %v4777
    %v4815 = vunpack.c.l.b16 %v4778
    %v4816 = vunpack.c.l.b16 %v4779
    %v4817 = vunpack.c.l.b16 %v4780
    %v4818 = vunpack.c.l.b16 %v4781
    %v4819 = vunpack.c.l.b16 %v4782
    %v4820 = vunpack.c.l.b16 %v4783
    %v4821 = vunpack.c.l.b16 %v4784
    %v4822 = vunpack.c.l.b16 %v4785
    %v4823 = vunpack.c.l.b16 %v4786
    %v4824 = vunpack.c.l.b16 %v4787
    %v4825 = vunpack.c.l.b16 %v4788
    %v4826 = vunpack.c.l.b16 %v4789
    %v4827 = vunpack.c.l.b16 %v4790
    %v4828 = vpack.c.b16 %v4813, %v4812
    %v4829 = vpack.c.b16 %v4815, %v4814
    %v4830 = vpack.c.b16 %v4817, %v4816
    %v4831 = vpack.c.b16 %v4819, %v4818
    %v4832 = vpack.c.b16 %v4821, %v4820
    %v4833 = vpack.c.b16 %v4823, %v4822
    %v4834 = vpack.c.b16 %v4825, %v4824
    %v4835 = vpack.c.b16 %v4827, %v4826
    %4844 = vmatpush.bf16.msra.mxu0 %v4835
    %4845 = vmatpush.bf16.msra.mxu0 %v4834
    %4846 = vmatpush.bf16.msra.mxu0 %v4833
    %4847 = vmatpush.bf16.msra.mxu0 %v4832
    %4848 = vmatpush.bf16.msra.mxu0 %v4831
    %4849 = vmatpush.bf16.msra.mxu0 %v4830
    %4850 = vmatpush.bf16.msra.mxu0 %v4829
    %4851 = vmatpush.bf16.msra.mxu0 %v4828
    %4852 = vmatmul.bf16.gmra.mxu0 %v66
    %v4853 = vpop.f32.mrf.mxu0
    %v4854 = vadd.f32 %v4794, %v4853
    %v4855 = vpop.f32.mrf.mxu0
    %v4856 = vadd.f32 %v4794, %v4855
    %4857 = vmatmul.bf16.gmra.mxu0 %v67
    %v4858 = vpop.f32.mrf.mxu0
    %v4859 = vadd.f32 %v4794, %v4858
    %v4860 = vpop.f32.mrf.mxu0
    %v4861 = vadd.f32 %v4794, %v4860
    %4862 = vmatmul.bf16.gmra.mxu0 %v68
    %v4863 = vpop.f32.mrf.mxu0
    %v4864 = vadd.f32 %v4794, %v4863
    %v4865 = vpop.f32.mrf.mxu0
    %v4866 = vadd.f32 %v4794, %v4865
    %4867 = vmatmul.bf16.gmra.mxu0 %v69
    %v4868 = vpop.f32.mrf.mxu0
    %v4869 = vadd.f32 %v4794, %v4868
    %v4870 = vpop.f32.mrf.mxu0
    %v4871 = vadd.f32 %v4794, %v4870
    %4872 = vdwg.mxu0
    %s4873 = scalar_lea.vmem %s3, 448
    %v4874 = vld [vmem:[%s4873] sm:$0xf]
    %v4875 = vld [vmem:[%s4873 + $0x4] sm:$0xf]
    %v4876 = vld [vmem:[%s4873 + $0x8] sm:$0xf]
    %v4877 = vld [vmem:[%s4873 + $0xc] sm:$0xf]
    %v4878 = vld [vmem:[%s4873 + $0x10] sm:$0xf]
    %v4879 = vld [vmem:[%s4873 + $0x14] sm:$0xf]
    %v4880 = vld [vmem:[%s4873 + $0x18] sm:$0xf]
    %v4881 = vld [vmem:[%s4873 + $0x1c] sm:$0xf]
    %v4882 = vld [vmem:[%s4873 + $0x20] sm:$0xf]
    %v4883 = vld [vmem:[%s4873 + $0x24] sm:$0xf]
    %v4884 = vld [vmem:[%s4873 + $0x28] sm:$0xf]
    %v4885 = vld [vmem:[%s4873 + $0x2c] sm:$0xf]
    %v4886 = vld [vmem:[%s4873 + $0x30] sm:$0xf]
    %v4887 = vld [vmem:[%s4873 + $0x34] sm:$0xf]
    %v4888 = vld [vmem:[%s4873 + $0x38] sm:$0xf]
    %v4889 = vld [vmem:[%s4873 + $0x3c] sm:$0xf]
    %s4890 = scalar_lea.vmem %s4, 7
    %v4891 = vld [vmem:[%s4890] sm:$0x1]
    %v4893 = vperm.slane %v4891, 0
    %v4911 = vunpack.c.l.b16 %v4874
    %v4912 = vunpack.c.l.b16 %v4875
    %v4913 = vunpack.c.l.b16 %v4876
    %v4914 = vunpack.c.l.b16 %v4877
    %v4915 = vunpack.c.l.b16 %v4878
    %v4916 = vunpack.c.l.b16 %v4879
    %v4917 = vunpack.c.l.b16 %v4880
    %v4918 = vunpack.c.l.b16 %v4881
    %v4919 = vunpack.c.l.b16 %v4882
    %v4920 = vunpack.c.l.b16 %v4883
    %v4921 = vunpack.c.l.b16 %v4884
    %v4922 = vunpack.c.l.b16 %v4885
    %v4923 = vunpack.c.l.b16 %v4886
    %v4924 = vunpack.c.l.b16 %v4887
    %v4925 = vunpack.c.l.b16 %v4888
    %v4926 = vunpack.c.l.b16 %v4889
    %v4927 = vpack.c.b16 %v4912, %v4911
    %v4928 = vpack.c.b16 %v4914, %v4913
    %v4929 = vpack.c.b16 %v4916, %v4915
    %v4930 = vpack.c.b16 %v4918, %v4917
    %v4931 = vpack.c.b16 %v4920, %v4919
    %v4932 = vpack.c.b16 %v4922, %v4921
    %v4933 = vpack.c.b16 %v4924, %v4923
    %v4934 = vpack.c.b16 %v4926, %v4925
    %4943 = vmatpush.bf16.msra.mxu0 %v4934
    %4944 = vmatpush.bf16.msra.mxu0 %v4933
    %4945 = vmatpush.bf16.msra.mxu0 %v4932
    %4946 = vmatpush.bf16.msra.mxu0 %v4931
    %4947 = vmatpush.bf16.msra.mxu0 %v4930
    %4948 = vmatpush.bf16.msra.mxu0 %v4929
    %4949 = vmatpush.bf16.msra.mxu0 %v4928
    %4950 = vmatpush.bf16.msra.mxu0 %v4927
    %4951 = vmatmul.bf16.gmra.mxu0 %v66
    %v4952 = vpop.f32.mrf.mxu0
    %v4953 = vadd.f32 %v4893, %v4952
    %v4954 = vpop.f32.mrf.mxu0
    %v4955 = vadd.f32 %v4893, %v4954
    %4956 = vmatmul.bf16.gmra.mxu0 %v67
    %v4957 = vpop.f32.mrf.mxu0
    %v4958 = vadd.f32 %v4893, %v4957
    %v4959 = vpop.f32.mrf.mxu0
    %v4960 = vadd.f32 %v4893, %v4959
    %4961 = vmatmul.bf16.gmra.mxu0 %v68
    %v4962 = vpop.f32.mrf.mxu0
    %v4963 = vadd.f32 %v4893, %v4962
    %v4964 = vpop.f32.mrf.mxu0
    %v4965 = vadd.f32 %v4893, %v4964
    %4966 = vmatmul.bf16.gmra.mxu0 %v69
    %v4967 = vpop.f32.mrf.mxu0
    %v4968 = vadd.f32 %v4893, %v4967
    %v4969 = vpop.f32.mrf.mxu0
    %v4970 = vadd.f32 %v4893, %v4969
    %4971 = vdwg.mxu0
    %s4972 = scalar_lea.vmem %s5, 448
    %v4973 = vld [vmem:[%s4972] sm:$0xf]
    %v4974 = vld [vmem:[%s4972 + $0x4] sm:$0xf]
    %v4975 = vld [vmem:[%s4972 + $0x8] sm:$0xf]
    %v4976 = vld [vmem:[%s4972 + $0xc] sm:$0xf]
    %v4977 = vld [vmem:[%s4972 + $0x10] sm:$0xf]
    %v4978 = vld [vmem:[%s4972 + $0x14] sm:$0xf]
    %v4979 = vld [vmem:[%s4972 + $0x18] sm:$0xf]
    %v4980 = vld [vmem:[%s4972 + $0x1c] sm:$0xf]
    %v4981 = vld [vmem:[%s4972 + $0x20] sm:$0xf]
    %v4982 = vld [vmem:[%s4972 + $0x24] sm:$0xf]
    %v4983 = vld [vmem:[%s4972 + $0x28] sm:$0xf]
    %v4984 = vld [vmem:[%s4972 + $0x2c] sm:$0xf]
    %v4985 = vld [vmem:[%s4972 + $0x30] sm:$0xf]
    %v4986 = vld [vmem:[%s4972 + $0x34] sm:$0xf]
    %v4987 = vld [vmem:[%s4972 + $0x38] sm:$0xf]
    %v4988 = vld [vmem:[%s4972 + $0x3c] sm:$0xf]
    %s4989 = scalar_lea.vmem %s6, 7
    %v4990 = vld [vmem:[%s4989] sm:$0x1]
    %v4992 = vperm.slane %v4990, 0
    %v5010 = vunpack.c.l.b16 %v4973
    %v5011 = vunpack.c.l.b16 %v4974
    %v5012 = vunpack.c.l.b16 %v4975
    %v5013 = vunpack.c.l.b16 %v4976
    %v5014 = vunpack.c.l.b16 %v4977
    %v5015 = vunpack.c.l.b16 %v4978
    %v5016 = vunpack.c.l.b16 %v4979
    %v5017 = vunpack.c.l.b16 %v4980
    %v5018 = vunpack.c.l.b16 %v4981
    %v5019 = vunpack.c.l.b16 %v4982
    %v5020 = vunpack.c.l.b16 %v4983
    %v5021 = vunpack.c.l.b16 %v4984
    %v5022 = vunpack.c.l.b16 %v4985
    %v5023 = vunpack.c.l.b16 %v4986
    %v5024 = vunpack.c.l.b16 %v4987
    %v5025 = vunpack.c.l.b16 %v4988
    %v5026 = vpack.c.b16 %v5011, %v5010
    %v5027 = vpack.c.b16 %v5013, %v5012
    %v5028 = vpack.c.b16 %v5015, %v5014
    %v5029 = vpack.c.b16 %v5017, %v5016
    %v5030 = vpack.c.b16 %v5019, %v5018
    %v5031 = vpack.c.b16 %v5021, %v5020
    %v5032 = vpack.c.b16 %v5023, %v5022
    %v5033 = vpack.c.b16 %v5025, %v5024
    %5042 = vmatpush.bf16.msra.mxu0 %v5033
    %5043 = vmatpush.bf16.msra.mxu0 %v5032
    %5044 = vmatpush.bf16.msra.mxu0 %v5031
    %5045 = vmatpush.bf16.msra.mxu0 %v5030
    %5046 = vmatpush.bf16.msra.mxu0 %v5029
    %5047 = vmatpush.bf16.msra.mxu0 %v5028
    %5048 = vmatpush.bf16.msra.mxu0 %v5027
    %5049 = vmatpush.bf16.msra.mxu0 %v5026
    %5050 = vmatmul.bf16.gmra.mxu0 %v66
    %v5051 = vpop.f32.mrf.mxu0
    %v5052 = vadd.f32 %v4992, %v5051
    %v5053 = vpop.f32.mrf.mxu0
    %v5054 = vadd.f32 %v4992, %v5053
    %5055 = vmatmul.bf16.gmra.mxu0 %v67
    %v5056 = vpop.f32.mrf.mxu0
    %v5057 = vadd.f32 %v4992, %v5056
    %v5058 = vpop.f32.mrf.mxu0
    %v5059 = vadd.f32 %v4992, %v5058
    %5060 = vmatmul.bf16.gmra.mxu0 %v68
    %v5061 = vpop.f32.mrf.mxu0
    %v5062 = vadd.f32 %v4992, %v5061
    %v5063 = vpop.f32.mrf.mxu0
    %v5064 = vadd.f32 %v4992, %v5063
    %5065 = vmatmul.bf16.gmra.mxu0 %v69
    %v5066 = vpop.f32.mrf.mxu0
    %v5067 = vadd.f32 %v4992, %v5066
    %v5068 = vpop.f32.mrf.mxu0
    %v5069 = vadd.f32 %v4992, %v5068
    %5070 = vdwg.mxu0
    %v5071 = vpack.c.bf16 %v4854, %v4854
    %v5072 = vpack.c.bf16 %v4856, %v4856
    %v5073 = vpack.c.bf16 %v4859, %v4859
    %v5074 = vpack.c.bf16 %v4861, %v4861
    %v5075 = vpack.c.bf16 %v4864, %v4864
    %v5076 = vpack.c.bf16 %v4866, %v4866
    %v5077 = vpack.c.bf16 %v4869, %v4869
    %v5078 = vpack.c.bf16 %v4871, %v4871
    %v5079 = vpack.c.bf16 %v4953, %v4953
    %v5080 = vpack.c.bf16 %v4955, %v4955
    %v5081 = vpack.c.bf16 %v4958, %v4958
    %v5082 = vpack.c.bf16 %v4960, %v4960
    %v5083 = vpack.c.bf16 %v4963, %v4963
    %v5084 = vpack.c.bf16 %v4965, %v4965
    %v5085 = vpack.c.bf16 %v4968, %v4968
    %v5086 = vpack.c.bf16 %v4970, %v4970
    %v5087 = vpack.c.bf16 %v5052, %v5052
    %v5088 = vpack.c.bf16 %v5054, %v5054
    %v5089 = vpack.c.bf16 %v5057, %v5057
    %v5090 = vpack.c.bf16 %v5059, %v5059
    %v5091 = vpack.c.bf16 %v5062, %v5062
    %v5092 = vpack.c.bf16 %v5064, %v5064
    %v5093 = vpack.c.bf16 %v5067, %v5067
    %v5094 = vpack.c.bf16 %v5069, %v5069
    %v5099 = vunpack.c.l.b16 %v5071
    %v5100 = vunpack.c.l.b16 %v5072
    %v5101 = vunpack.c.l.b16 %v5073
    %v5102 = vunpack.c.l.b16 %v5074
    %v5103 = vpack.c.b16 %v5100, %v5099
    %v5104 = vpack.c.b16 %v5102, %v5101
    %v5109 = vunpack.c.l.b16 %v5079
    %v5110 = vunpack.c.l.b16 %v5080
    %v5111 = vunpack.c.l.b16 %v5081
    %v5112 = vunpack.c.l.b16 %v5082
    %v5113 = vpack.c.b16 %v5110, %v5109
    %v5114 = vpack.c.b16 %v5112, %v5111
    %v5116 = vsel %vm405, %v5103, 0
    %v5119 = vsel %vm405, %v5104, 0
    %v5122 = vsel %vm405, %v5113, 0
    %v5125 = vsel %vm405, %v5114, 0
    %5127 = vmatpush.bf16.xpose.msra.mxu0 0
    %5128 = vmatpush.bf16.xpose.msra.mxu0 0
    %5129 = vmatpush.bf16.xpose.msra.mxu0 0
    %5130 = vmatpush.bf16.xpose.msra.mxu0 0
    %5131 = vmatpush.bf16.xpose.msra.mxu0 0
    %5132 = vmatpush.bf16.xpose.msra.mxu0 0
    %5133 = vmatpush.bf16.xpose.msra.mxu0 %v5125
    %5134 = vmatpush.bf16.xpose.msra.mxu0 %v5122
    %5135 = vmatmul.bf16.gmra.mxu0 %v5116
    %v5136 = vpop.f32.mrf.mxu0
    %v5137 = vadd.f32 0.0, %v5136
    %v5138 = vpop.f32.mrf.mxu0
    %v5139 = vadd.f32 0.0, %v5138
    %5140 = vmatmul.bf16.gmra.mxu0 %v5119
    %v5141 = vpop.f32.mrf.mxu0
    %v5142 = vadd.f32 0.0, %v5141
    %v5143 = vpop.f32.mrf.mxu0
    %v5144 = vadd.f32 0.0, %v5143
    %5145 = vdwg.mxu0
    %v5150 = vunpack.c.l.b16 %v5075
    %v5151 = vunpack.c.l.b16 %v5076
    %v5152 = vunpack.c.l.b16 %v5077
    %v5153 = vunpack.c.l.b16 %v5078
    %v5154 = vpack.c.b16 %v5151, %v5150
    %v5155 = vpack.c.b16 %v5153, %v5152
    %v5160 = vunpack.c.l.b16 %v5083
    %v5161 = vunpack.c.l.b16 %v5084
    %v5162 = vunpack.c.l.b16 %v5085
    %v5163 = vunpack.c.l.b16 %v5086
    %v5164 = vpack.c.b16 %v5161, %v5160
    %v5165 = vpack.c.b16 %v5163, %v5162
    %v5167 = vsel %vm405, %v5154, 0
    %v5170 = vsel %vm405, %v5155, 0
    %v5173 = vsel %vm405, %v5164, 0
    %v5176 = vsel %vm405, %v5165, 0
    %5178 = vmatpush.bf16.xpose.msra.mxu0 0
    %5179 = vmatpush.bf16.xpose.msra.mxu0 0
    %5180 = vmatpush.bf16.xpose.msra.mxu0 0
    %5181 = vmatpush.bf16.xpose.msra.mxu0 0
    %5182 = vmatpush.bf16.xpose.msra.mxu0 0
    %5183 = vmatpush.bf16.xpose.msra.mxu0 0
    %5184 = vmatpush.bf16.xpose.msra.mxu0 %v5176
    %5185 = vmatpush.bf16.xpose.msra.mxu0 %v5173
    %5186 = vmatmul.bf16.gmra.mxu0 %v5167
    %v5187 = vpop.f32.mrf.mxu0
    %v5188 = vadd.f32 0.0, %v5187
    %v5189 = vpop.f32.mrf.mxu0
    %v5190 = vadd.f32 0.0, %v5189
    %5191 = vmatmul.bf16.gmra.mxu0 %v5170
    %v5192 = vpop.f32.mrf.mxu0
    %v5193 = vadd.f32 0.0, %v5192
    %v5194 = vpop.f32.mrf.mxu0
    %v5195 = vadd.f32 0.0, %v5194
    %5196 = vdwg.mxu0
    %v5197 = vsel %vm488, %v5137, -inf
    %5198 = vmax.xlane.f32.xlu0 %v5197
    %v5199 = vpop.xlane.xlu0 %5198
    %v5200 = vsel %vm488, %v5139, -inf
    %5201 = vmax.xlane.f32.xlu0 %v5200
    %v5202 = vpop.xlane.xlu0 %5201
    %v5203 = vsel %vm488, %v5142, -inf
    %5204 = vmax.xlane.f32.xlu0 %v5203
    %v5205 = vpop.xlane.xlu0 %5204
    %v5206 = vsel %vm488, %v5144, -inf
    %5207 = vmax.xlane.f32.xlu0 %v5206
    %v5208 = vpop.xlane.xlu0 %5207
    %v5209 = vsel %vm488, %v5188, -inf
    %5210 = vmax.xlane.f32.xlu0 %v5209
    %v5211 = vpop.xlane.xlu0 %5210
    %v5212 = vsel %vm488, %v5190, -inf
    %5213 = vmax.xlane.f32.xlu0 %v5212
    %v5214 = vpop.xlane.xlu0 %5213
    %v5215 = vsel %vm488, %v5193, -inf
    %5216 = vmax.xlane.f32.xlu0 %v5215
    %v5217 = vpop.xlane.xlu0 %5216
    %v5218 = vsel %vm488, %v5195, -inf
    %5219 = vmax.xlane.f32.xlu0 %v5218
    %v5220 = vpop.xlane.xlu0 %5219
    %v5221 = vsub.f32 %v5137, %v5199
    %v5222 = vsub.f32 %v5139, %v5202
    %v5223 = vsub.f32 %v5142, %v5205
    %v5224 = vsub.f32 %v5144, %v5208
    %v5225 = vsub.f32 %v5188, %v5211
    %v5226 = vsub.f32 %v5190, %v5214
    %v5227 = vsub.f32 %v5193, %v5217
    %v5228 = vsub.f32 %v5195, %v5220
    %v5229 = vmul.f32 %v5221, 1.442695
    %v5230 = vpow.pop %v5229
    %v5231 = vmul.f32 %v5222, 1.442695
    %v5232 = vpow.pop %v5231
    %v5233 = vmul.f32 %v5223, 1.442695
    %v5234 = vpow.pop %v5233
    %v5235 = vmul.f32 %v5224, 1.442695
    %v5236 = vpow.pop %v5235
    %v5237 = vmul.f32 %v5225, 1.442695
    %v5238 = vpow.pop %v5237
    %v5239 = vmul.f32 %v5226, 1.442695
    %v5240 = vpow.pop %v5239
    %v5241 = vmul.f32 %v5227, 1.442695
    %v5242 = vpow.pop %v5241
    %v5243 = vmul.f32 %v5228, 1.442695
    %v5244 = vpow.pop %v5243
    %v5245 = vsel %vm488, %v5230, 0.0
    %5246 = vadd.xlane.f32.xlu0 %v5245
    %v5247 = vpop.xlane.xlu0 %5246
    %v5248 = vsel %vm488, %v5232, 0.0
    %5249 = vadd.xlane.f32.xlu0 %v5248
    %v5250 = vpop.xlane.xlu0 %5249
    %v5251 = vsel %vm488, %v5234, 0.0
    %5252 = vadd.xlane.f32.xlu0 %v5251
    %v5253 = vpop.xlane.xlu0 %5252
    %v5254 = vsel %vm488, %v5236, 0.0
    %5255 = vadd.xlane.f32.xlu0 %v5254
    %v5256 = vpop.xlane.xlu0 %5255
    %v5257 = vsel %vm488, %v5238, 0.0
    %5258 = vadd.xlane.f32.xlu0 %v5257
    %v5259 = vpop.xlane.xlu0 %5258
    %v5260 = vsel %vm488, %v5240, 0.0
    %5261 = vadd.xlane.f32.xlu0 %v5260
    %v5262 = vpop.xlane.xlu0 %5261
    %v5263 = vsel %vm488, %v5242, 0.0
    %5264 = vadd.xlane.f32.xlu0 %v5263
    %v5265 = vpop.xlane.xlu0 %5264
    %v5266 = vsel %vm488, %v5244, 0.0
    %5267 = vadd.xlane.f32.xlu0 %v5266
    %v5268 = vpop.xlane.xlu0 %5267
    %v5269 = vrcp.pop %v5247
    %v5270 = vrcp.pop %v5250
    %v5271 = vrcp.pop %v5253
    %v5272 = vrcp.pop %v5256
    %v5273 = vrcp.pop %v5259
    %v5274 = vrcp.pop %v5262
    %v5275 = vrcp.pop %v5265
    %v5276 = vrcp.pop %v5268
    %v5277 = vmul.f32 %v5230, %v5269
    %v5278 = vmul.f32 %v5232, %v5270
    %v5279 = vmul.f32 %v5234, %v5271
    %v5280 = vmul.f32 %v5236, %v5272
    %v5281 = vmul.f32 %v5238, %v5273
    %v5282 = vmul.f32 %v5240, %v5274
    %v5283 = vmul.f32 %v5242, %v5275
    %v5284 = vmul.f32 %v5244, %v5276
    %v5285 = vpack.c.bf16 %v5277, %v5277
    %v5286 = vpack.c.bf16 %v5278, %v5278
    %v5287 = vpack.c.bf16 %v5279, %v5279
    %v5288 = vpack.c.bf16 %v5280, %v5280
    %v5289 = vpack.c.bf16 %v5281, %v5281
    %v5290 = vpack.c.bf16 %v5282, %v5282
    %v5291 = vpack.c.bf16 %v5283, %v5283
    %v5292 = vpack.c.bf16 %v5284, %v5284
    %v5297 = vunpack.c.l.b16 %v5285
    %v5298 = vunpack.c.l.b16 %v5286
    %v5299 = vunpack.c.l.b16 %v5287
    %v5300 = vunpack.c.l.b16 %v5288
    %v5301 = vpack.c.b16 %v5298, %v5297
    %v5302 = vpack.c.b16 %v5300, %v5299
    %v5307 = vunpack.c.l.b16 %v5087
    %v5308 = vunpack.c.l.b16 %v5088
    %v5309 = vunpack.c.l.b16 %v5089
    %v5310 = vunpack.c.l.b16 %v5090
    %v5311 = vpack.c.b16 %v5308, %v5307
    %v5312 = vpack.c.b16 %v5310, %v5309
    %v5316 = vsel %vm488, %v5301, 0
    %v5319 = vsel %vm488, %v5302, 0
    %5321 = vmatpush.bf16.msra.mxu0 0
    %5322 = vmatpush.bf16.msra.mxu0 0
    %5323 = vmatpush.bf16.msra.mxu0 0
    %5324 = vmatpush.bf16.msra.mxu0 0
    %5325 = vmatpush.bf16.msra.mxu0 0
    %5326 = vmatpush.bf16.msra.mxu0 0
    %5327 = vmatpush.bf16.msra.mxu0 %v5312
    %5328 = vmatpush.bf16.msra.mxu0 %v5311
    %5329 = vmatmul.bf16.gmra.mxu0 %v5316
    %v5330 = vpop.f32.mrf.mxu0
    %v5331 = vadd.f32 0.0, %v5330
    %v5332 = vpop.f32.mrf.mxu0
    %v5333 = vadd.f32 0.0, %v5332
    %5334 = vmatmul.bf16.gmra.mxu0 %v5319
    %v5335 = vpop.f32.mrf.mxu0
    %v5336 = vadd.f32 0.0, %v5335
    %v5337 = vpop.f32.mrf.mxu0
    %v5338 = vadd.f32 0.0, %v5337
    %5339 = vdwg.mxu0
    %v5344 = vunpack.c.l.b16 %v5289
    %v5345 = vunpack.c.l.b16 %v5290
    %v5346 = vunpack.c.l.b16 %v5291
    %v5347 = vunpack.c.l.b16 %v5292
    %v5348 = vpack.c.b16 %v5345, %v5344
    %v5349 = vpack.c.b16 %v5347, %v5346
    %v5354 = vunpack.c.l.b16 %v5091
    %v5355 = vunpack.c.l.b16 %v5092
    %v5356 = vunpack.c.l.b16 %v5093
    %v5357 = vunpack.c.l.b16 %v5094
    %v5358 = vpack.c.b16 %v5355, %v5354
    %v5359 = vpack.c.b16 %v5357, %v5356
    %v5363 = vsel %vm488, %v5348, 0
    %v5366 = vsel %vm488, %v5349, 0
    %5368 = vmatpush.bf16.msra.mxu0 0
    %5369 = vmatpush.bf16.msra.mxu0 0
    %5370 = vmatpush.bf16.msra.mxu0 0
    %5371 = vmatpush.bf16.msra.mxu0 0
    %5372 = vmatpush.bf16.msra.mxu0 0
    %5373 = vmatpush.bf16.msra.mxu0 0
    %5374 = vmatpush.bf16.msra.mxu0 %v5359
    %5375 = vmatpush.bf16.msra.mxu0 %v5358
    %5376 = vmatmul.bf16.gmra.mxu0 %v5363
    %v5377 = vpop.f32.mrf.mxu0
    %v5378 = vadd.f32 0.0, %v5377
    %v5379 = vpop.f32.mrf.mxu0
    %v5380 = vadd.f32 0.0, %v5379
    %5381 = vmatmul.bf16.gmra.mxu0 %v5366
    %v5382 = vpop.f32.mrf.mxu0
    %v5383 = vadd.f32 0.0, %v5382
    %v5384 = vpop.f32.mrf.mxu0
    %v5385 = vadd.f32 0.0, %v5384
    %5386 = vdwg.mxu0
    %v5387 = vpack.c.bf16 %v5333, %v5331
    %v5388 = vpack.c.bf16 %v5338, %v5336
    %v5389 = vpack.c.bf16 %v5380, %v5378
    %v5390 = vpack.c.bf16 %v5385, %v5383
    %s5391 = scalar_lea.vmem %s7, 56
    %v5392 = vld [vmem:[%s5391] sm:$0xf]
    %v5393 = vld [vmem:[%s5391 + $0x4] sm:$0xf]
    %v5396 = vunpack.c.l.b16 %v5392
    %v5397 = vunpack.c.l.b16 %v5393
    %v5398 = vpack.c.b16 %v5397, %v5396
    %v5401 = vsel %vm405, %v5387, 0
    %v5404 = vsel %vm405, %v5388, 0
    %v5407 = vsel %vm405, %v5389, 0
    %v5410 = vsel %vm405, %v5390, 0
    %5412 = vmatpush.bf16.msra.mxu0 0
    %5413 = vmatpush.bf16.msra.mxu0 0
    %5414 = vmatpush.bf16.msra.mxu0 0
    %5415 = vmatpush.bf16.msra.mxu0 0
    %5416 = vmatpush.bf16.msra.mxu0 0
    %5417 = vmatpush.bf16.msra.mxu0 0
    %5418 = vmatpush.bf16.msra.mxu0 0
    %5419 = vmatpush.bf16.msra.mxu0 %v5398
    %5420 = vmatmul.bf16.gmra.mxu0 %v5401
    %v5421 = vpop.f32.mrf.mxu0
    %v5422 = vadd.f32 0.0, %v5421
    %v5423 = vpop.f32.mrf.mxu0
    %v5424 = vadd.f32 0.0, %v5423
    %5425 = vmatmul.bf16.gmra.mxu0 %v5404
    %v5426 = vpop.f32.mrf.mxu0
    %v5427 = vadd.f32 0.0, %v5426
    %v5428 = vpop.f32.mrf.mxu0
    %v5429 = vadd.f32 0.0, %v5428
    %5430 = vmatmul.bf16.gmra.mxu0 %v5407
    %v5431 = vpop.f32.mrf.mxu0
    %v5432 = vadd.f32 0.0, %v5431
    %v5433 = vpop.f32.mrf.mxu0
    %v5434 = vadd.f32 0.0, %v5433
    %5435 = vmatmul.bf16.gmra.mxu0 %v5410
    %v5436 = vpop.f32.mrf.mxu0
    %v5437 = vadd.f32 0.0, %v5436
    %v5438 = vpop.f32.mrf.mxu0
    %v5439 = vadd.f32 0.0, %v5438
    %5440 = vdwg.mxu0
    %v5441 = vadd.f32 %v4766, %v5422
    %v5442 = vadd.f32 %v4767, %v5424
    %v5443 = vadd.f32 %v4768, %v5427
    %v5444 = vadd.f32 %v4769, %v5429
    %v5445 = vadd.f32 %v4770, %v5432
    %v5446 = vadd.f32 %v4771, %v5434
    %v5447 = vadd.f32 %v4772, %v5437
    %v5448 = vadd.f32 %v4773, %v5439
    %v5449 = vld [vmem:[%s8] sm:$0x1]
    %v5451 = vperm.slane %v5449, 0
    %v5453 = vadd.f32 %v5441, %v5451
    %v5454 = vadd.f32 %v5442, %v5451
    %v5455 = vadd.f32 %v5443, %v5451
    %v5456 = vadd.f32 %v5444, %v5451
    %v5457 = vadd.f32 %v5445, %v5451
    %v5458 = vadd.f32 %v5446, %v5451
    %v5459 = vadd.f32 %v5447, %v5451
    %v5460 = vadd.f32 %v5448, %v5451
    %v5461 = vadd.f32 %v58, %v5453
    %v5462 = vadd.f32 %v59, %v5454
    %v5463 = vadd.f32 %v60, %v5455
    %v5464 = vadd.f32 %v61, %v5456
    %v5465 = vadd.f32 %v62, %v5457
    %v5466 = vadd.f32 %v63, %v5458
    %v5467 = vadd.f32 %v64, %v5459
    %v5468 = vadd.f32 %v65, %v5460
    %v5469 = vld [vmem:[%s9] sm:$0x1]
    %v5470 = vld [vmem:[%s10] sm:$0x1]
    %5471 = vadd.xlane.f32.xlu0 %v5461
    %v5472 = vpop.xlane.xlu0 %5471
    %5473 = vadd.xlane.f32.xlu0 %v5462
    %v5474 = vpop.xlane.xlu0 %5473
    %5475 = vadd.xlane.f32.xlu0 %v5463
    %v5476 = vpop.xlane.xlu0 %5475
    %5477 = vadd.xlane.f32.xlu0 %v5464
    %v5478 = vpop.xlane.xlu0 %5477
    %5479 = vadd.xlane.f32.xlu0 %v5465
    %v5480 = vpop.xlane.xlu0 %5479
    %5481 = vadd.xlane.f32.xlu0 %v5466
    %v5482 = vpop.xlane.xlu0 %5481
    %5483 = vadd.xlane.f32.xlu0 %v5467
    %v5484 = vpop.xlane.xlu0 %5483
    %5485 = vadd.xlane.f32.xlu0 %v5468
    %v5486 = vpop.xlane.xlu0 %5485
    %v5487 = vrcp.pop 128.0
    %v5488 = vmul.f32 128.0, %v5487
    %v5489 = vsub.f32 1.0, %v5488
    %v5490 = vmul.f32 %v5487, %v5489
    %v5491 = vadd.f32 %v5487, %v5490
    %vm5492 = vweird.f32 %v5487
    %v5493 = vsel %vm5492, %v5487, %v5491
    %v5494 = vmul.f32 %v5472, %v5493
    %v5495 = vmul.f32 %v5474, %v5493
    %v5496 = vmul.f32 %v5476, %v5493
    %v5497 = vmul.f32 %v5478, %v5493
    %v5498 = vmul.f32 %v5480, %v5493
    %v5499 = vmul.f32 %v5482, %v5493
    %v5500 = vmul.f32 %v5484, %v5493
    %v5501 = vmul.f32 %v5486, %v5493
    %v5502 = vsub.f32 %v5461, %v5494
    %v5503 = vsub.f32 %v5462, %v5495
    %v5504 = vsub.f32 %v5463, %v5496
    %v5505 = vsub.f32 %v5464, %v5497
    %v5506 = vsub.f32 %v5465, %v5498
    %v5507 = vsub.f32 %v5466, %v5499
    %v5508 = vsub.f32 %v5467, %v5500
    %v5509 = vsub.f32 %v5468, %v5501
    %v5510 = vmul.f32 %v5502, %v5502
    %v5511 = vmul.f32 %v5503, %v5503
    %v5512 = vmul.f32 %v5504, %v5504
    %v5513 = vmul.f32 %v5505, %v5505
    %v5514 = vmul.f32 %v5506, %v5506
    %v5515 = vmul.f32 %v5507, %v5507
    %v5516 = vmul.f32 %v5508, %v5508
    %v5517 = vmul.f32 %v5509, %v5509
    %5518 = vadd.xlane.f32.xlu0 %v5510
    %v5519 = vpop.xlane.xlu0 %5518
    %5520 = vadd.xlane.f32.xlu0 %v5511
    %v5521 = vpop.xlane.xlu0 %5520
    %5522 = vadd.xlane.f32.xlu0 %v5512
    %v5523 = vpop.xlane.xlu0 %5522
    %5524 = vadd.xlane.f32.xlu0 %v5513
    %v5525 = vpop.xlane.xlu0 %5524
    %5526 = vadd.xlane.f32.xlu0 %v5514
    %v5527 = vpop.xlane.xlu0 %5526
    %5528 = vadd.xlane.f32.xlu0 %v5515
    %v5529 = vpop.xlane.xlu0 %5528
    %5530 = vadd.xlane.f32.xlu0 %v5516
    %v5531 = vpop.xlane.xlu0 %5530
    %5532 = vadd.xlane.f32.xlu0 %v5517
    %v5533 = vpop.xlane.xlu0 %5532
    %v5534 = vmul.f32 %v5519, %v5493
    %v5535 = vmul.f32 %v5521, %v5493
    %v5536 = vmul.f32 %v5523, %v5493
    %v5537 = vmul.f32 %v5525, %v5493
    %v5538 = vmul.f32 %v5527, %v5493
    %v5539 = vmul.f32 %v5529, %v5493
    %v5540 = vmul.f32 %v5531, %v5493
    %v5541 = vmul.f32 %v5533, %v5493
    %v5542 = vadd.f32 %v5534, 1e-05
    %v5543 = vadd.f32 %v5535, 1e-05
    %v5544 = vadd.f32 %v5536, 1e-05
    %v5545 = vadd.f32 %v5537, 1e-05
    %v5546 = vadd.f32 %v5538, 1e-05
    %v5547 = vadd.f32 %v5539, 1e-05
    %v5548 = vadd.f32 %v5540, 1e-05
    %v5549 = vadd.f32 %v5541, 1e-05
    %v5550 = vrsqrt.pop %v5542
    %v5551 = vmul.f32 %v5550, %v5542
    %v5552 = vmul.f32 %v5551, %v5550
    %v5553 = vmul.f32 0.5, %v5552
    %v5554 = vsub.f32 1.5, %v5553
    %v5555 = vmul.f32 %v5550, %v5554
    %vm5556 = vweird.f32 %v5542
    %vm5557 = vweird.f32 %v5550
    %vm5558 = vmor %vm5556, %vm5557
    %v5559 = vsel %vm5558, %v5550, %v5555
    %v5560 = vrsqrt.pop %v5543
    %v5561 = vmul.f32 %v5560, %v5543
    %v5562 = vmul.f32 %v5561, %v5560
    %v5563 = vmul.f32 0.5, %v5562
    %v5564 = vsub.f32 1.5, %v5563
    %v5565 = vmul.f32 %v5560, %v5564
    %vm5566 = vweird.f32 %v5543
    %vm5567 = vweird.f32 %v5560
    %vm5568 = vmor %vm5566, %vm5567
    %v5569 = vsel %vm5568, %v5560, %v5565
    %v5570 = vrsqrt.pop %v5544
    %v5571 = vmul.f32 %v5570, %v5544
    %v5572 = vmul.f32 %v5571, %v5570
    %v5573 = vmul.f32 0.5, %v5572
    %v5574 = vsub.f32 1.5, %v5573
    %v5575 = vmul.f32 %v5570, %v5574
    %vm5576 = vweird.f32 %v5544
    %vm5577 = vweird.f32 %v5570
    %vm5578 = vmor %vm5576, %vm5577
    %v5579 = vsel %vm5578, %v5570, %v5575
    %v5580 = vrsqrt.pop %v5545
    %v5581 = vmul.f32 %v5580, %v5545
    %v5582 = vmul.f32 %v5581, %v5580
    %v5583 = vmul.f32 0.5, %v5582
    %v5584 = vsub.f32 1.5, %v5583
    %v5585 = vmul.f32 %v5580, %v5584
    %vm5586 = vweird.f32 %v5545
    %vm5587 = vweird.f32 %v5580
    %vm5588 = vmor %vm5586, %vm5587
    %v5589 = vsel %vm5588, %v5580, %v5585
    %v5590 = vrsqrt.pop %v5546
    %v5591 = vmul.f32 %v5590, %v5546
    %v5592 = vmul.f32 %v5591, %v5590
    %v5593 = vmul.f32 0.5, %v5592
    %v5594 = vsub.f32 1.5, %v5593
    %v5595 = vmul.f32 %v5590, %v5594
    %vm5596 = vweird.f32 %v5546
    %vm5597 = vweird.f32 %v5590
    %vm5598 = vmor %vm5596, %vm5597
    %v5599 = vsel %vm5598, %v5590, %v5595
    %v5600 = vrsqrt.pop %v5547
    %v5601 = vmul.f32 %v5600, %v5547
    %v5602 = vmul.f32 %v5601, %v5600
    %v5603 = vmul.f32 0.5, %v5602
    %v5604 = vsub.f32 1.5, %v5603
    %v5605 = vmul.f32 %v5600, %v5604
    %vm5606 = vweird.f32 %v5547
    %vm5607 = vweird.f32 %v5600
    %vm5608 = vmor %vm5606, %vm5607
    %v5609 = vsel %vm5608, %v5600, %v5605
    %v5610 = vrsqrt.pop %v5548
    %v5611 = vmul.f32 %v5610, %v5548
    %v5612 = vmul.f32 %v5611, %v5610
    %v5613 = vmul.f32 0.5, %v5612
    %v5614 = vsub.f32 1.5, %v5613
    %v5615 = vmul.f32 %v5610, %v5614
    %vm5616 = vweird.f32 %v5548
    %vm5617 = vweird.f32 %v5610
    %vm5618 = vmor %vm5616, %vm5617
    %v5619 = vsel %vm5618, %v5610, %v5615
    %v5620 = vrsqrt.pop %v5549
    %v5621 = vmul.f32 %v5620, %v5549
    %v5622 = vmul.f32 %v5621, %v5620
    %v5623 = vmul.f32 0.5, %v5622
    %v5624 = vsub.f32 1.5, %v5623
    %v5625 = vmul.f32 %v5620, %v5624
    %vm5626 = vweird.f32 %v5549
    %vm5627 = vweird.f32 %v5620
    %vm5628 = vmor %vm5626, %vm5627
    %v5629 = vsel %vm5628, %v5620, %v5625
    %v5630 = vmul.f32 %v5502, %v5559
    %v5631 = vmul.f32 %v5503, %v5569
    %v5632 = vmul.f32 %v5504, %v5579
    %v5633 = vmul.f32 %v5505, %v5589
    %v5634 = vmul.f32 %v5506, %v5599
    %v5635 = vmul.f32 %v5507, %v5609
    %v5636 = vmul.f32 %v5508, %v5619
    %v5637 = vmul.f32 %v5509, %v5629
    %v5639 = vperm.slane %v5469, 0
    %v5641 = vmul.f32 %v5630, %v5639
    %v5642 = vmul.f32 %v5631, %v5639
    %v5643 = vmul.f32 %v5632, %v5639
    %v5644 = vmul.f32 %v5633, %v5639
    %v5645 = vmul.f32 %v5634, %v5639
    %v5646 = vmul.f32 %v5635, %v5639
    %v5647 = vmul.f32 %v5636, %v5639
    %v5648 = vmul.f32 %v5637, %v5639
    %v5650 = vperm.slane %v5470, 0
    %v5652 = vadd.f32 %v5641, %v5650
    %v5653 = vadd.f32 %v5642, %v5650
    %v5654 = vadd.f32 %v5643, %v5650
    %v5655 = vadd.f32 %v5644, %v5650
    %v5656 = vadd.f32 %v5645, %v5650
    %v5657 = vadd.f32 %v5646, %v5650
    %v5658 = vadd.f32 %v5647, %v5650
    %v5659 = vadd.f32 %v5648, %v5650
    %v5660 = vpack.c.bf16 %v5653, %v5652
    %v5661 = vpack.c.bf16 %v5655, %v5654
    %v5662 = vpack.c.bf16 %v5657, %v5656
    %v5663 = vpack.c.bf16 %v5659, %v5658
    %v5664 = vld [vmem:[%s11] sm:$0xf]
    %v5665 = vld [vmem:[%s11 + $0x4] sm:$0xf]
    %v5666 = vld [vmem:[%s11 + $0x8] sm:$0xf]
    %v5667 = vld [vmem:[%s11 + $0xc] sm:$0xf]
    %v5668 = vld [vmem:[%s11 + $0x10] sm:$0xf]
    %v5669 = vld [vmem:[%s11 + $0x14] sm:$0xf]
    %v5670 = vld [vmem:[%s11 + $0x18] sm:$0xf]
    %v5671 = vld [vmem:[%s11 + $0x1c] sm:$0xf]
    %v5672 = vld [vmem:[%s11 + $0x20] sm:$0xf]
    %v5673 = vld [vmem:[%s11 + $0x24] sm:$0xf]
    %v5674 = vld [vmem:[%s11 + $0x28] sm:$0xf]
    %v5675 = vld [vmem:[%s11 + $0x2c] sm:$0xf]
    %v5676 = vld [vmem:[%s11 + $0x30] sm:$0xf]
    %v5677 = vld [vmem:[%s11 + $0x34] sm:$0xf]
    %v5678 = vld [vmem:[%s11 + $0x38] sm:$0xf]
    %v5679 = vld [vmem:[%s11 + $0x3c] sm:$0xf]
    %v5680 = vld [vmem:[%s12] sm:$0x1]
    %v5682 = vperm.slane %v5680, 0
    %v5700 = vunpack.c.l.b16 %v5664
    %v5701 = vunpack.c.l.b16 %v5665
    %v5702 = vunpack.c.l.b16 %v5666
    %v5703 = vunpack.c.l.b16 %v5667
    %v5704 = vunpack.c.l.b16 %v5668
    %v5705 = vunpack.c.l.b16 %v5669
    %v5706 = vunpack.c.l.b16 %v5670
    %v5707 = vunpack.c.l.b16 %v5671
    %v5708 = vunpack.c.l.b16 %v5672
    %v5709 = vunpack.c.l.b16 %v5673
    %v5710 = vunpack.c.l.b16 %v5674
    %v5711 = vunpack.c.l.b16 %v5675
    %v5712 = vunpack.c.l.b16 %v5676
    %v5713 = vunpack.c.l.b16 %v5677
    %v5714 = vunpack.c.l.b16 %v5678
    %v5715 = vunpack.c.l.b16 %v5679
    %v5716 = vpack.c.b16 %v5701, %v5700
    %v5717 = vpack.c.b16 %v5703, %v5702
    %v5718 = vpack.c.b16 %v5705, %v5704
    %v5719 = vpack.c.b16 %v5707, %v5706
    %v5720 = vpack.c.b16 %v5709, %v5708
    %v5721 = vpack.c.b16 %v5711, %v5710
    %v5722 = vpack.c.b16 %v5713, %v5712
    %v5723 = vpack.c.b16 %v5715, %v5714
    %5732 = vmatpush.bf16.msra.mxu0 %v5723
    %5733 = vmatpush.bf16.msra.mxu0 %v5722
    %5734 = vmatpush.bf16.msra.mxu0 %v5721
    %5735 = vmatpush.bf16.msra.mxu0 %v5720
    %5736 = vmatpush.bf16.msra.mxu0 %v5719
    %5737 = vmatpush.bf16.msra.mxu0 %v5718
    %5738 = vmatpush.bf16.msra.mxu0 %v5717
    %5739 = vmatpush.bf16.msra.mxu0 %v5716
    %5740 = vmatmul.bf16.gmra.mxu0 %v5660
    %v5741 = vpop.f32.mrf.mxu0
    %v5742 = vadd.f32 %v5682, %v5741
    %v5743 = vpop.f32.mrf.mxu0
    %v5744 = vadd.f32 %v5682, %v5743
    %5745 = vmatmul.bf16.gmra.mxu0 %v5661
    %v5746 = vpop.f32.mrf.mxu0
    %v5747 = vadd.f32 %v5682, %v5746
    %v5748 = vpop.f32.mrf.mxu0
    %v5749 = vadd.f32 %v5682, %v5748
    %5750 = vmatmul.bf16.gmra.mxu0 %v5662
    %v5751 = vpop.f32.mrf.mxu0
    %v5752 = vadd.f32 %v5682, %v5751
    %v5753 = vpop.f32.mrf.mxu0
    %v5754 = vadd.f32 %v5682, %v5753
    %5755 = vmatmul.bf16.gmra.mxu0 %v5663
    %v5756 = vpop.f32.mrf.mxu0
    %v5757 = vadd.f32 %v5682, %v5756
    %v5758 = vpop.f32.mrf.mxu0
    %v5759 = vadd.f32 %v5682, %v5758
    %5760 = vdwg.mxu0
    %v5761 = vmul.f32 %v5742, 0.5
    %v5762 = vmul.f32 %v5744, 0.5
    %v5763 = vmul.f32 %v5747, 0.5
    %v5764 = vmul.f32 %v5749, 0.5
    %v5765 = vmul.f32 %v5752, 0.5
    %v5766 = vmul.f32 %v5754, 0.5
    %v5767 = vmul.f32 %v5757, 0.5
    %v5768 = vmul.f32 %v5759, 0.5
    %v5769 = vmul.f32 %v5742, 0.044715
    %v5770 = vmul.f32 %v5744, 0.044715
    %v5771 = vmul.f32 %v5747, 0.044715
    %v5772 = vmul.f32 %v5749, 0.044715
    %v5773 = vmul.f32 %v5752, 0.044715
    %v5774 = vmul.f32 %v5754, 0.044715
    %v5775 = vmul.f32 %v5757, 0.044715
    %v5776 = vmul.f32 %v5759, 0.044715
    %v5777 = vmul.f32 %v5769, %v5742
    %v5778 = vmul.f32 %v5770, %v5744
    %v5779 = vmul.f32 %v5771, %v5747
    %v5780 = vmul.f32 %v5772, %v5749
    %v5781 = vmul.f32 %v5773, %v5752
    %v5782 = vmul.f32 %v5774, %v5754
    %v5783 = vmul.f32 %v5775, %v5757
    %v5784 = vmul.f32 %v5776, %v5759
    %v5785 = vmul.f32 %v5777, %v5742
    %v5786 = vmul.f32 %v5778, %v5744
    %v5787 = vmul.f32 %v5779, %v5747
    %v5788 = vmul.f32 %v5780, %v5749
    %v5789 = vmul.f32 %v5781, %v5752
    %v5790 = vmul.f32 %v5782, %v5754
    %v5791 = vmul.f32 %v5783, %v5757
    %v5792 = vmul.f32 %v5784, %v5759
    %v5793 = vadd.f32 %v5742, %v5785
    %v5794 = vadd.f32 %v5744, %v5786
    %v5795 = vadd.f32 %v5747, %v5787
    %v5796 = vadd.f32 %v5749, %v5788
    %v5797 = vadd.f32 %v5752, %v5789
    %v5798 = vadd.f32 %v5754, %v5790
    %v5799 = vadd.f32 %v5757, %v5791
    %v5800 = vadd.f32 %v5759, %v5792
    %v5801 = vmul.f32 %v5793, 0.7978846
    %v5802 = vmul.f32 %v5794, 0.7978846
    %v5803 = vmul.f32 %v5795, 0.7978846
    %v5804 = vmul.f32 %v5796, 0.7978846
    %v5805 = vmul.f32 %v5797, 0.7978846
    %v5806 = vmul.f32 %v5798, 0.7978846
    %v5807 = vmul.f32 %v5799, 0.7978846
    %v5808 = vmul.f32 %v5800, 0.7978846
    %v5809 = vtanh.pop %v5801
    %v5810 = vtanh.pop %v5802
    %v5811 = vtanh.pop %v5803
    %v5812 = vtanh.pop %v5804
    %v5813 = vtanh.pop %v5805
    %v5814 = vtanh.pop %v5806
    %v5815 = vtanh.pop %v5807
    %v5816 = vtanh.pop %v5808
    %v5817 = vadd.f32 %v5809, 1.0
    %v5818 = vadd.f32 %v5810, 1.0
    %v5819 = vadd.f32 %v5811, 1.0
    %v5820 = vadd.f32 %v5812, 1.0
    %v5821 = vadd.f32 %v5813, 1.0
    %v5822 = vadd.f32 %v5814, 1.0
    %v5823 = vadd.f32 %v5815, 1.0
    %v5824 = vadd.f32 %v5816, 1.0
    %v5825 = vmul.f32 %v5761, %v5817
    %v5826 = vmul.f32 %v5762, %v5818
    %v5827 = vmul.f32 %v5763, %v5819
    %v5828 = vmul.f32 %v5764, %v5820
    %v5829 = vmul.f32 %v5765, %v5821
    %v5830 = vmul.f32 %v5766, %v5822
    %v5831 = vmul.f32 %v5767, %v5823
    %v5832 = vmul.f32 %v5768, %v5824
    %v5833 = vpack.c.bf16 %v5826, %v5825
    %v5834 = vpack.c.bf16 %v5828, %v5827
    %v5835 = vpack.c.bf16 %v5830, %v5829
    %v5836 = vpack.c.bf16 %v5832, %v5831
    %v5837 = vld [vmem:[%s13] sm:$0xf]
    %v5838 = vld [vmem:[%s13 + $0x4] sm:$0xf]
    %v5839 = vld [vmem:[%s13 + $0x8] sm:$0xf]
    %v5840 = vld [vmem:[%s13 + $0xc] sm:$0xf]
    %v5841 = vld [vmem:[%s13 + $0x10] sm:$0xf]
    %v5842 = vld [vmem:[%s13 + $0x14] sm:$0xf]
    %v5843 = vld [vmem:[%s13 + $0x18] sm:$0xf]
    %v5844 = vld [vmem:[%s13 + $0x1c] sm:$0xf]
    %v5845 = vld [vmem:[%s13 + $0x20] sm:$0xf]
    %v5846 = vld [vmem:[%s13 + $0x24] sm:$0xf]
    %v5847 = vld [vmem:[%s13 + $0x28] sm:$0xf]
    %v5848 = vld [vmem:[%s13 + $0x2c] sm:$0xf]
    %v5849 = vld [vmem:[%s13 + $0x30] sm:$0xf]
    %v5850 = vld [vmem:[%s13 + $0x34] sm:$0xf]
    %v5851 = vld [vmem:[%s13 + $0x38] sm:$0xf]
    %v5852 = vld [vmem:[%s13 + $0x3c] sm:$0xf]
    %v5853 = vld [vmem:[%s14] sm:$0x1]
    %v5855 = vperm.slane %v5853, 0
    %v5873 = vunpack.c.l.b16 %v5837
    %v5874 = vunpack.c.l.b16 %v5838
    %v5875 = vunpack.c.l.b16 %v5839
    %v5876 = vunpack.c.l.b16 %v5840
    %v5877 = vunpack.c.l.b16 %v5841
    %v5878 = vunpack.c.l.b16 %v5842
    %v5879 = vunpack.c.l.b16 %v5843
    %v5880 = vunpack.c.l.b16 %v5844
    %v5881 = vunpack.c.l.b16 %v5845
    %v5882 = vunpack.c.l.b16 %v5846
    %v5883 = vunpack.c.l.b16 %v5847
    %v5884 = vunpack.c.l.b16 %v5848
    %v5885 = vunpack.c.l.b16 %v5849
    %v5886 = vunpack.c.l.b16 %v5850
    %v5887 = vunpack.c.l.b16 %v5851
    %v5888 = vunpack.c.l.b16 %v5852
    %v5889 = vpack.c.b16 %v5874, %v5873
    %v5890 = vpack.c.b16 %v5876, %v5875
    %v5891 = vpack.c.b16 %v5878, %v5877
    %v5892 = vpack.c.b16 %v5880, %v5879
    %v5893 = vpack.c.b16 %v5882, %v5881
    %v5894 = vpack.c.b16 %v5884, %v5883
    %v5895 = vpack.c.b16 %v5886, %v5885
    %v5896 = vpack.c.b16 %v5888, %v5887
    %5905 = vmatpush.bf16.msra.mxu0 %v5896
    %5906 = vmatpush.bf16.msra.mxu0 %v5895
    %5907 = vmatpush.bf16.msra.mxu0 %v5894
    %5908 = vmatpush.bf16.msra.mxu0 %v5893
    %5909 = vmatpush.bf16.msra.mxu0 %v5892
    %5910 = vmatpush.bf16.msra.mxu0 %v5891
    %5911 = vmatpush.bf16.msra.mxu0 %v5890
    %5912 = vmatpush.bf16.msra.mxu0 %v5889
    %5913 = vmatmul.bf16.gmra.mxu0 %v5833
    %v5914 = vpop.f32.mrf.mxu0
    %v5915 = vadd.f32 %v5855, %v5914
    %v5916 = vpop.f32.mrf.mxu0
    %v5917 = vadd.f32 %v5855, %v5916
    %5918 = vmatmul.bf16.gmra.mxu0 %v5834
    %v5919 = vpop.f32.mrf.mxu0
    %v5920 = vadd.f32 %v5855, %v5919
    %v5921 = vpop.f32.mrf.mxu0
    %v5922 = vadd.f32 %v5855, %v5921
    %5923 = vmatmul.bf16.gmra.mxu0 %v5835
    %v5924 = vpop.f32.mrf.mxu0
    %v5925 = vadd.f32 %v5855, %v5924
    %v5926 = vpop.f32.mrf.mxu0
    %v5927 = vadd.f32 %v5855, %v5926
    %5928 = vmatmul.bf16.gmra.mxu0 %v5836
    %v5929 = vpop.f32.mrf.mxu0
    %v5930 = vadd.f32 %v5855, %v5929
    %v5931 = vpop.f32.mrf.mxu0
    %v5932 = vadd.f32 %v5855, %v5931
    %5933 = vdwg.mxu0
    %v5934 = vadd.f32 %v5652, %v5915
    %v5935 = vadd.f32 %v5653, %v5917
    %v5936 = vadd.f32 %v5654, %v5920
    %v5937 = vadd.f32 %v5655, %v5922
    %v5938 = vadd.f32 %v5656, %v5925
    %v5939 = vadd.f32 %v5657, %v5927
    %v5940 = vadd.f32 %v5658, %v5930
    %v5941 = vadd.f32 %v5659, %v5932
    %v5942 = vld [vmem:[%s15] sm:$0x1]
    %v5943 = vld [vmem:[%s16] sm:$0x1]
    %5944 = vadd.xlane.f32.xlu0 %v5934
    %v5945 = vpop.xlane.xlu0 %5944
    %5946 = vadd.xlane.f32.xlu0 %v5935
    %v5947 = vpop.xlane.xlu0 %5946
    %5948 = vadd.xlane.f32.xlu0 %v5936
    %v5949 = vpop.xlane.xlu0 %5948
    %5950 = vadd.xlane.f32.xlu0 %v5937
    %v5951 = vpop.xlane.xlu0 %5950
    %5952 = vadd.xlane.f32.xlu0 %v5938
    %v5953 = vpop.xlane.xlu0 %5952
    %5954 = vadd.xlane.f32.xlu0 %v5939
    %v5955 = vpop.xlane.xlu0 %5954
    %5956 = vadd.xlane.f32.xlu0 %v5940
    %v5957 = vpop.xlane.xlu0 %5956
    %5958 = vadd.xlane.f32.xlu0 %v5941
    %v5959 = vpop.xlane.xlu0 %5958
    %v5960 = vmul.f32 %v5945, %v5493
    %v5961 = vmul.f32 %v5947, %v5493
    %v5962 = vmul.f32 %v5949, %v5493
    %v5963 = vmul.f32 %v5951, %v5493
    %v5964 = vmul.f32 %v5953, %v5493
    %v5965 = vmul.f32 %v5955, %v5493
    %v5966 = vmul.f32 %v5957, %v5493
    %v5967 = vmul.f32 %v5959, %v5493
    %v5968 = vsub.f32 %v5934, %v5960
    %v5969 = vsub.f32 %v5935, %v5961
    %v5970 = vsub.f32 %v5936, %v5962
    %v5971 = vsub.f32 %v5937, %v5963
    %v5972 = vsub.f32 %v5938, %v5964
    %v5973 = vsub.f32 %v5939, %v5965
    %v5974 = vsub.f32 %v5940, %v5966
    %v5975 = vsub.f32 %v5941, %v5967
    %v5976 = vmul.f32 %v5968, %v5968
    %v5977 = vmul.f32 %v5969, %v5969
    %v5978 = vmul.f32 %v5970, %v5970
    %v5979 = vmul.f32 %v5971, %v5971
    %v5980 = vmul.f32 %v5972, %v5972
    %v5981 = vmul.f32 %v5973, %v5973
    %v5982 = vmul.f32 %v5974, %v5974
    %v5983 = vmul.f32 %v5975, %v5975
    %5984 = vadd.xlane.f32.xlu0 %v5976
    %v5985 = vpop.xlane.xlu0 %5984
    %5986 = vadd.xlane.f32.xlu0 %v5977
    %v5987 = vpop.xlane.xlu0 %5986
    %5988 = vadd.xlane.f32.xlu0 %v5978
    %v5989 = vpop.xlane.xlu0 %5988
    %5990 = vadd.xlane.f32.xlu0 %v5979
    %v5991 = vpop.xlane.xlu0 %5990
    %5992 = vadd.xlane.f32.xlu0 %v5980
    %v5993 = vpop.xlane.xlu0 %5992
    %5994 = vadd.xlane.f32.xlu0 %v5981
    %v5995 = vpop.xlane.xlu0 %5994
    %5996 = vadd.xlane.f32.xlu0 %v5982
    %v5997 = vpop.xlane.xlu0 %5996
    %5998 = vadd.xlane.f32.xlu0 %v5983
    %v5999 = vpop.xlane.xlu0 %5998
    %v6000 = vmul.f32 %v5985, %v5493
    %v6001 = vmul.f32 %v5987, %v5493
    %v6002 = vmul.f32 %v5989, %v5493
    %v6003 = vmul.f32 %v5991, %v5493
    %v6004 = vmul.f32 %v5993, %v5493
    %v6005 = vmul.f32 %v5995, %v5493
    %v6006 = vmul.f32 %v5997, %v5493
    %v6007 = vmul.f32 %v5999, %v5493
    %v6008 = vadd.f32 %v6000, 1e-05
    %v6009 = vadd.f32 %v6001, 1e-05
    %v6010 = vadd.f32 %v6002, 1e-05
    %v6011 = vadd.f32 %v6003, 1e-05
    %v6012 = vadd.f32 %v6004, 1e-05
    %v6013 = vadd.f32 %v6005, 1e-05
    %v6014 = vadd.f32 %v6006, 1e-05
    %v6015 = vadd.f32 %v6007, 1e-05
    %v6016 = vrsqrt.pop %v6008
    %v6017 = vmul.f32 %v6016, %v6008
    %v6018 = vmul.f32 %v6017, %v6016
    %v6019 = vmul.f32 0.5, %v6018
    %v6020 = vsub.f32 1.5, %v6019
    %v6021 = vmul.f32 %v6016, %v6020
    %vm6022 = vweird.f32 %v6008
    %vm6023 = vweird.f32 %v6016
    %vm6024 = vmor %vm6022, %vm6023
    %v6025 = vsel %vm6024, %v6016, %v6021
    %v6026 = vrsqrt.pop %v6009
    %v6027 = vmul.f32 %v6026, %v6009
    %v6028 = vmul.f32 %v6027, %v6026
    %v6029 = vmul.f32 0.5, %v6028
    %v6030 = vsub.f32 1.5, %v6029
    %v6031 = vmul.f32 %v6026, %v6030
    %vm6032 = vweird.f32 %v6009
    %vm6033 = vweird.f32 %v6026
    %vm6034 = vmor %vm6032, %vm6033
    %v6035 = vsel %vm6034, %v6026, %v6031
    %v6036 = vrsqrt.pop %v6010
    %v6037 = vmul.f32 %v6036, %v6010
    %v6038 = vmul.f32 %v6037, %v6036
    %v6039 = vmul.f32 0.5, %v6038
    %v6040 = vsub.f32 1.5, %v6039
    %v6041 = vmul.f32 %v6036, %v6040
    %vm6042 = vweird.f32 %v6010
    %vm6043 = vweird.f32 %v6036
    %vm6044 = vmor %vm6042, %vm6043
    %v6045 = vsel %vm6044, %v6036, %v6041
    %v6046 = vrsqrt.pop %v6011
    %v6047 = vmul.f32 %v6046, %v6011
    %v6048 = vmul.f32 %v6047, %v6046
    %v6049 = vmul.f32 0.5, %v6048
    %v6050 = vsub.f32 1.5, %v6049
    %v6051 = vmul.f32 %v6046, %v6050
    %vm6052 = vweird.f32 %v6011
    %vm6053 = vweird.f32 %v6046
    %vm6054 = vmor %vm6052, %vm6053
    %v6055 = vsel %vm6054, %v6046, %v6051
    %v6056 = vrsqrt.pop %v6012
    %v6057 = vmul.f32 %v6056, %v6012
    %v6058 = vmul.f32 %v6057, %v6056
    %v6059 = vmul.f32 0.5, %v6058
    %v6060 = vsub.f32 1.5, %v6059
    %v6061 = vmul.f32 %v6056, %v6060
    %vm6062 = vweird.f32 %v6012
    %vm6063 = vweird.f32 %v6056
    %vm6064 = vmor %vm6062, %vm6063
    %v6065 = vsel %vm6064, %v6056, %v6061
    %v6066 = vrsqrt.pop %v6013
    %v6067 = vmul.f32 %v6066, %v6013
    %v6068 = vmul.f32 %v6067, %v6066
    %v6069 = vmul.f32 0.5, %v6068
    %v6070 = vsub.f32 1.5, %v6069
    %v6071 = vmul.f32 %v6066, %v6070
    %vm6072 = vweird.f32 %v6013
    %vm6073 = vweird.f32 %v6066
    %vm6074 = vmor %vm6072, %vm6073
    %v6075 = vsel %vm6074, %v6066, %v6071
    %v6076 = vrsqrt.pop %v6014
    %v6077 = vmul.f32 %v6076, %v6014
    %v6078 = vmul.f32 %v6077, %v6076
    %v6079 = vmul.f32 0.5, %v6078
    %v6080 = vsub.f32 1.5, %v6079
    %v6081 = vmul.f32 %v6076, %v6080
    %vm6082 = vweird.f32 %v6014
    %vm6083 = vweird.f32 %v6076
    %vm6084 = vmor %vm6082, %vm6083
    %v6085 = vsel %vm6084, %v6076, %v6081
    %v6086 = vrsqrt.pop %v6015
    %v6087 = vmul.f32 %v6086, %v6015
    %v6088 = vmul.f32 %v6087, %v6086
    %v6089 = vmul.f32 0.5, %v6088
    %v6090 = vsub.f32 1.5, %v6089
    %v6091 = vmul.f32 %v6086, %v6090
    %vm6092 = vweird.f32 %v6015
    %vm6093 = vweird.f32 %v6086
    %vm6094 = vmor %vm6092, %vm6093
    %v6095 = vsel %vm6094, %v6086, %v6091
    %v6096 = vmul.f32 %v5968, %v6025
    %v6097 = vmul.f32 %v5969, %v6035
    %v6098 = vmul.f32 %v5970, %v6045
    %v6099 = vmul.f32 %v5971, %v6055
    %v6100 = vmul.f32 %v5972, %v6065
    %v6101 = vmul.f32 %v5973, %v6075
    %v6102 = vmul.f32 %v5974, %v6085
    %v6103 = vmul.f32 %v5975, %v6095
    %v6105 = vperm.slane %v5942, 0
    %v6107 = vmul.f32 %v6096, %v6105
    %v6108 = vmul.f32 %v6097, %v6105
    %v6109 = vmul.f32 %v6098, %v6105
    %v6110 = vmul.f32 %v6099, %v6105
    %v6111 = vmul.f32 %v6100, %v6105
    %v6112 = vmul.f32 %v6101, %v6105
    %v6113 = vmul.f32 %v6102, %v6105
    %v6114 = vmul.f32 %v6103, %v6105
    %v6116 = vperm.slane %v5943, 0
    %v6118 = vadd.f32 %v6107, %v6116
    %v6119 = vadd.f32 %v6108, %v6116
    %v6120 = vadd.f32 %v6109, %v6116
    %v6121 = vadd.f32 %v6110, %v6116
    %v6122 = vadd.f32 %v6111, %v6116
    %v6123 = vadd.f32 %v6112, %v6116
    %v6124 = vadd.f32 %v6113, %v6116
    %v6125 = vadd.f32 %v6114, %v6116
    %6126 = vst [vmem:[#allocation2] sm:$0xff] %v6118
    %6127 = vst [vmem:[#allocation2 + $0x8] sm:$0xff] %v6119
    %6128 = vst [vmem:[#allocation2 + $0x10] sm:$0xff] %v6120
    %6129 = vst [vmem:[#allocation2 + $0x18] sm:$0xff] %v6121
    %6130 = vst [vmem:[#allocation2 + $0x20] sm:$0xff] %v6122
    %6131 = vst [vmem:[#allocation2 + $0x28] sm:$0xff] %v6123
    %6132 = vst [vmem:[#allocation2 + $0x30] sm:$0xff] %v6124
    %6133 = vst [vmem:[#allocation2 + $0x38] sm:$0xff] %v6125
    // Predicated region
    $region70: #{tpu_custom_call.1} parent=1 // pred_check
      _
    $region71: #{tpu_custom_call.1} parent=1 // pred_check_branch
      %6135 = sbr.rel (0) target = $region73
    $region72: #{tpu_custom_call.1} parent=1 // pred_region
      %6137 = vsyncadd [#allocation3], 0
      %s6138 = sshll.u32 [#allocation2], 4
      %s6139 = int_to_ptr.vmem [resolvable:$true] %s6138
      %s6140 = sshll.u32 %s17, 4
      %s6141 = int_to_ptr.hbm [resolvable:$true] %s6140
      %6146 = dma.vmem_to_hbm [thread:$0]  %s6139, 1024, %s6141, [#allocation3], 128, 128, 8
    $region73: #{tpu_custom_call.1} parent=1 // pred_fallthru
      _
    // Predicated region
    $region74: #{tpu_custom_call.1} parent=1 // pred_check
      _
    $region75: #{tpu_custom_call.1} parent=1 // pred_check_branch
      %6148 = sbr.rel (0) target = $region77
    $region76: #{tpu_custom_call.1} parent=1 // pred_region
      %6150 = dma.done [#allocation3], 1024
    $region77: #{tpu_custom_call.1} parent=1 // pred_fallthru
      _
    %6151 = vsyncpa [#allocation3], 1

</llo_original>
